<compile_context>
chip_gen: v5e
topology: v5e:2x2
jax: 0.10.0
libtpu: 0.0.40
codegen_flags: <defaults>
</compile_context>

<pallas_src>
import jax
import jax.numpy as jnp
from jax import lax
from jax.experimental import pallas as pl
from jax.experimental.pallas import tpu as pltpu


def _round_up(x, m):
    return (x + m - 1) // m * m


def _cdiv(a, b):
    return -(-a // b)


def _vmem_capacity_bytes():
    try:
        cap = pltpu.get_tpu_info().vmem_capacity_bytes
        if cap:
            return int(cap)
    except Exception:
        pass
    return 64 << 20  # conservative fallback (v7x-sized)


def _pick_ti(I, target):
    """Largest divisor of I that is <= target and a multiple of 128 (lane width),
    falling back to multiples of 16, then I itself (keeps the reduction exact:
    no ragged intermediate tile can pollute the accumulator)."""
    for step in (128, 16):
        t = (min(target, I) // step) * step
        while t >= step:
            if I % t == 0:
                return t
            t -= step
    return I


def swiglu_kernel(x_ref, wg_ref, wu_ref, wdt_ref, o_ref, acc_ref):
    # x_ref:   (TM, H)      activation tile (compute dtype), resident across j
    # wg_ref:  (TI, H)      gate_proj weight rows   (native nn.Linear layout)
    # wu_ref:  (TI, H)      up_proj weight rows     (native nn.Linear layout)
    # wdt_ref: (TI, H)      down_proj weight, pre-transposed rows (contiguous)
    # o_ref:   (TM, H)      output tile
    # acc_ref: (TM, H) f32  accumulator scratch (persists across the j axis)
    j = pl.program_id(1)

    @pl.when(j == 0)
    def _():
        acc_ref[...] = jnp.zeros_like(acc_ref)

    x = x_ref[...]
    # Contract on the shared last axis (trans_b): (TM,H) x (TI,H) -> (TM,TI).
    dn_gu = (((1,), (1,)), ((), ()))
    gate = lax.dot_general(x, wg_ref[...], dn_gu, preferred_element_type=jnp.float32)
    up = lax.dot_general(x, wu_ref[...], dn_gu, preferred_element_type=jnp.float32)

    # silu(g) = g * sigmoid(g); sigmoid = 1/(1+exp(-g)): exp on the EUP, approx
    # reciprocal also on the EUP (keeps the divide off the VALU slot).  Clamp
    # the exponent so exp() never overflows to +inf (silu limit is 0 anyway).
    z = jnp.exp(jnp.minimum(-gate, 80.0))
    sig = pl.reciprocal(1.0 + z, approx=True)
    h = (gate * sig * up).astype(wdt_ref.dtype)

    # (TM,TI) x (TI,H) contracted on TI -> (TM,H); accumulate in f32.
    dn_down = (((1,), (0,)), ((), ()))
    acc_ref[...] += lax.dot_general(
        h, wdt_ref[...], dn_down, preferred_element_type=jnp.float32
    )

    @pl.when(j == pl.num_programs(1) - 1)
    def _():
        o_ref[...] = acc_ref[...].astype(o_ref.dtype)


def prepare_swiglu_weights(gate_w, up_w, down_w, compute_dtype=jnp.bfloat16):
    """One-time (init/load-time) weight preparation.

    gate_w, up_w: (I, H) nn.Linear weights; down_w: (H, I).
    Casts to the MXU compute dtype and pre-transposes down_proj to (I, H) so the
    kernel only ever fetches contiguous row blocks.  Do NOT call per forward.
    """
    wg = jnp.asarray(gate_w, dtype=compute_dtype)
    wu = jnp.asarray(up_w, dtype=compute_dtype)
    wd_t = jnp.transpose(jnp.asarray(down_w, dtype=compute_dtype))  # (I, H)
    return wg, wu, wd_t


def swiglu_pallas(x, wg, wu, wd_t, *, tile_m=None, tile_i=512):
    """SwiGLU forward with prepared weights.

    x:    (..., H) activations (any float dtype; output matches x.dtype)
    wg:   (I, H)  gate_proj.weight   (already in compute dtype, e.g. bf16)
    wu:   (I, H)  up_proj.weight
    wd_t: (I, H)  down_proj.weight pre-transposed (see prepare_swiglu_weights)
    """
    orig_shape = x.shape
    out_dtype = x.dtype
    H = orig_shape[-1]
    I = wg.shape[0]
    assert wg.shape == (I, H) and wu.shape == (I, H) and wd_t.shape == (I, H)

    compute_dtype = wg.dtype
    cb = jnp.dtype(compute_dtype).itemsize
    ob = jnp.dtype(out_dtype).itemsize

    x2d = x.reshape(-1, H).astype(compute_dtype)  # activation cast only (small)
    M = x2d.shape[0]

    # ---- generation-aware VMEM budget ------------------------------------
    vmem_cap = _vmem_capacity_bytes()
    is_small_vmem = vmem_cap <= (64 << 20)           # v7x-like (2 TC, 64 MiB/TC)
    budget = min((vmem_cap * 3) // 4, vmem_cap - (16 << 20))   # ~48 / ~96 MiB

    if tile_m is None:
        tile_m = 256 if is_small_vmem else 512       # taller M tiles on 128 MiB chips

    # ---- M tiling: pad only to the 16-row sublane multiple (cheap), ragged
    # ---- last tile is handled by the cdiv grid.
    M_pad = _round_up(max(M, 16), 16)
    if M_pad != M:
        x2d = jnp.pad(x2d, ((0, M_pad - M), (0, 0)))  # <= 15 zero rows

    tm = min(_round_up(tile_m, 16), M_pad)
    # v7x megacore: make sure the "parallel" M axis has >= 2 tiles so both
    # TensorCores get work.
    if is_small_vmem and _cdiv(M_pad, tm) == 1 and tm >= 32:
        tm = _round_up(_cdiv(tm, 2), 16)

    # ---- VMEM usage estimate (includes the (TM,TI) epilogue temporaries) ---
    def _estimate(tm_, ti_, wbuf):
        return (2 * tm_ * H * cb              # x tile, double-buffered
                + wbuf * 3 * ti_ * H * cb     # gate/up/down weight tiles
                + tm_ * H * 4                 # f32 accumulator scratch
                + 2 * tm_ * H * ob            # output tile, double-buffered
                + 4 * tm_ * ti_ * 4           # gate/up/sig/silu temporaries (f32)
                + tm_ * ti_ * cb              # h cast back to compute dtype
                + (4 << 20))                  # Mosaic internal scratch allowance

    weight_bytes = 3 * I * H * cb
    if weight_bytes <= budget // 2 and _estimate(tm, I, 2) <= budget:
        # Weight-resident fast path: single reduction step, constant weight
        # block indices -> weights DMA'd once, reused across every M tile.
        ti = I
        wbuf = 2
    else:
        ti = _pick_ti(I, tile_i)
        wbuf = 2
        num_i = I // ti
        num_m = _cdiv(M_pad, tm)
        # v7x decode regime (weight-streaming-bound): deepen weight pipelining.
        if is_small_vmem and num_i >= 3 and num_m <= 2 and _estimate(tm, ti, 3) <= budget:
            wbuf = 3
        # Shrink the M tile if the estimate still exceeds the budget.
        while _estimate(tm, ti, wbuf) > budget and tm > 16:
            tm = max(16, _round_up(tm // 2, 16))

    num_m_tiles = _cdiv(M_pad, tm)
    num_i_tiles = I // ti

    if wbuf == 3:
        w_specs = [pl.BlockSpec((ti, H), lambda i, j: (j, 0),
                                pipeline_mode=pl.Buffered(3)) for _ in range(3)]
    else:
        w_specs = [pl.BlockSpec((ti, H), lambda i, j: (j, 0)) for _ in range(3)]

    # Weights are re-streamed once per M tile only when the j axis is real.
    weight_streams = 1 if num_i_tiles == 1 else num_m_tiles
    cost = pl.CostEstimate(
        flops=int(6 * M_pad * H * I),                  # three (M,H,I)-sized matmuls
        transcendentals=int(M_pad * I),                # one exp per gate element
        bytes_accessed=int(M_pad * H * cb
                           + weight_streams * 3 * I * H * cb
                           + M_pad * H * ob),
    )

    out2d = pl.pallas_call(
        swiglu_kernel,
        out_shape=jax.ShapeDtypeStruct((M_pad, H), out_dtype),
        grid_spec=pltpu.PrefetchScalarGridSpec(
            num_scalar_prefetch=0,
            grid=(num_m_tiles, num_i_tiles),
            in_specs=[
                pl.BlockSpec((tm, H), lambda i, j: (i, 0)),   # x tile
                w_specs[0],                                   # gate rows (contiguous)
                w_specs[1],                                   # up rows   (contiguous)
                w_specs[2],                                   # down rows (pre-transposed)
            ],
            out_specs=pl.BlockSpec((tm, H), lambda i, j: (i, 0)),
            scratch_shapes=[pltpu.VMEM((tm, H), jnp.float32)],
        ),
        compiler_params=pltpu.CompilerParams(
            dimension_semantics=("parallel", "arbitrary"),
            vmem_limit_bytes=int(budget),
        ),
        cost_estimate=cost,
    )(x2d, wg, wu, wd_t)

    if M_pad != M:
        out2d = out2d[:M]
    return out2d.reshape(orig_shape)


def swiglu_ref(x, wg, wu, wd):
    gate = x @ wg.T
    up = x @ wu.T
    return (jax.nn.silu(gate) * up) @ wd.T


if __name__ == "__main__":
    # Qwen3Config defaults: hidden_size=384, intermediate_size=1536
    hidden_size = 384
    intermediate_size = 1536
    batch, seq = 2, 8

    key = jax.random.PRNGKey(0)
    kx, kg, ku, kd = jax.random.split(key, 4)

    x = jax.random.normal(kx, (batch, seq, hidden_size), dtype=jnp.float32)
    # nn.Linear(in, out, bias=False).weight has shape (out, in)
    wg = jax.random.normal(kg, (intermediate_size, hidden_size), jnp.float32) * 0.02
    wu = jax.random.normal(ku, (intermediate_size, hidden_size), jnp.float32) * 0.02
    wd = jax.random.normal(kd, (hidden_size, intermediate_size), jnp.float32) * 0.02

    # One-time weight preparation (cast + down_proj transpose) at "init".
    wg_b, wu_b, wdt_b = prepare_swiglu_weights(wg, wu, wd)

    out = swiglu_pallas(x, wg_b, wu_b, wdt_b)
    out = jax.block_until_ready(out)

    ref = swiglu_ref(x, wg, wu, wd)
    assert out.shape == (batch, seq, hidden_size)
    # bf16 MXU operands + approx reciprocal -> compare with bf16-level tolerance.
    max_err = float(jnp.max(jnp.abs(out - ref)))
    assert jnp.allclose(out, ref, atol=3e-2, rtol=3e-2), (
        f"mismatch vs reference (max abs err {max_err})"
    )

    print("KERNEL_OK")
</pallas_src>

<mosaic_0001>
module attributes {stable_mosaic.version = 11 : i64} {
  func.func @swiglu_kernel(%arg0: i32, %arg1: i32, %arg2: memref<16x384xbf16, #tpu.memory_space<vmem>>, %arg3: memref<1536x384xbf16, #tpu.memory_space<vmem>>, %arg4: memref<1536x384xbf16, #tpu.memory_space<vmem>>, %arg5: memref<1536x384xbf16, #tpu.memory_space<vmem>>, %arg6: memref<16x384xf32, #tpu.memory_space<vmem>>, %arg7: memref<16x384xf32, #tpu.memory_space<vmem>>) attributes {dimension_semantics = [#tpu.dimension_semantics<parallel>, #tpu.dimension_semantics<arbitrary>], iteration_bounds = array<i64: 1, 1>, scalar_prefetch = 0 : i64, scratch_operands = 1 : i64, tpu.core_type = #tpu.core_type<tc>, window_params = [{transform_indices = @transform_0, window_bounds = array<i64: 16, 384>}, {transform_indices = @transform_1, window_bounds = array<i64: 1536, 384>}, {transform_indices = @transform_2, window_bounds = array<i64: 1536, 384>}, {transform_indices = @transform_3, window_bounds = array<i64: 1536, 384>}, {transform_indices = @transform_4, window_bounds = array<i64: 16, 384>}]} {
    %c0_i32 = arith.constant 0 : i32
    %0 = arith.cmpi eq, %arg1, %c0_i32 : i32
    %1 = arith.extui %0 : i1 to i32
    %c0_i32_0 = arith.constant 0 : i32
    %2 = arith.cmpi ne, %1, %c0_i32_0 : i32
    scf.if %2 {
      %cst_19 = arith.constant 0.000000e+00 : f32
      %27 = vector.broadcast %cst_19 : f32 to vector<16x384xf32>
      %c0_20 = arith.constant 0 : index
      %c0_21 = arith.constant 0 : index
      %28 = vector.load %arg7[%c0_20, %c0_21] : memref<16x384xf32, #tpu.memory_space<vmem>>, vector<16x384xf32>
      tpu.vector_store %arg7[%c0_20, %c0_21], %27 {strides = array<i32>} : memref<16x384xf32, #tpu.memory_space<vmem>>, vector<16x384xf32>,
    } else {
    }
    %c0 = arith.constant 0 : index
    %c0_1 = arith.constant 0 : index
    %3 = vector.load %arg2[%c0, %c0_1] : memref<16x384xbf16, #tpu.memory_space<vmem>>, vector<16x384xbf16>
    %c0_2 = arith.constant 0 : index
    %c0_3 = arith.constant 0 : index
    %4 = vector.load %arg3[%c0_2, %c0_3] : memref<1536x384xbf16, #tpu.memory_space<vmem>>, vector<1536x384xbf16>
    %cst = arith.constant dense<0.000000e+00> : vector<16x1536xf32>
    %5 = tpu.matmul %3, %4, %cst {dimension_numbers = #tpu.dot_dimension_numbers<[1], [1], [0], [0], [0, 0, 1, 0], [], []>} : vector<16x384xbf16>, vector<1536x384xbf16>, vector<16x1536xf32> -> vector<16x1536xf32>
    %c0_4 = arith.constant 0 : index
    %c0_5 = arith.constant 0 : index
    %6 = vector.load %arg4[%c0_4, %c0_5] : memref<1536x384xbf16, #tpu.memory_space<vmem>>, vector<1536x384xbf16>
    %cst_6 = arith.constant dense<0.000000e+00> : vector<16x1536xf32>
    %7 = tpu.matmul %3, %6, %cst_6 {dimension_numbers = #tpu.dot_dimension_numbers<[1], [1], [0], [0], [0, 0, 1, 0], [], []>} : vector<16x384xbf16>, vector<1536x384xbf16>, vector<16x1536xf32> -> vector<16x1536xf32>
    %cst_7 = arith.constant 0.000000e+00 : f32
    %8 = vector.broadcast %cst_7 : f32 to vector<16x1536xf32>
    %9 = arith.subf %8, %5 : vector<16x1536xf32>
    %cst_8 = arith.constant 8.000000e+01 : f32
    %10 = vector.broadcast %cst_8 : f32 to vector<16x1536xf32>
    %11 = arith.minimumf %9, %10 : vector<16x1536xf32>
    %12 = math.exp %11 : vector<16x1536xf32>
    %cst_9 = arith.constant 1.000000e+00 : f32
    %13 = vector.broadcast %cst_9 : f32 to vector<16x1536xf32>
    %14 = arith.addf %13, %12 : vector<16x1536xf32>
    %15 = tpu.reciprocal %14 {approx = true} : vector<16x1536xf32> -> vector<16x1536xf32>
    %16 = arith.mulf %5, %15 : vector<16x1536xf32>
    %17 = arith.mulf %16, %7 : vector<16x1536xf32>
    %18 = arith.truncf %17 : vector<16x1536xf32> to vector<16x1536xbf16>
    %c0_10 = arith.constant 0 : index
    %c0_11 = arith.constant 0 : index
    %19 = vector.load %arg7[%c0_10, %c0_11] : memref<16x384xf32, #tpu.memory_space<vmem>>, vector<16x384xf32>
    %c0_12 = arith.constant 0 : index
    %c0_13 = arith.constant 0 : index
    %20 = vector.load %arg5[%c0_12, %c0_13] : memref<1536x384xbf16, #tpu.memory_space<vmem>>, vector<1536x384xbf16>
    %cst_14 = arith.constant dense<0.000000e+00> : vector<16x384xf32>
    %21 = tpu.matmul %18, %20, %cst_14 {dimension_numbers = #tpu.dot_dimension_numbers<[1], [0], [0], [1], [0, 0, 1, 1], [], []>} : vector<16x1536xbf16>, vector<1536x384xbf16>, vector<16x384xf32> -> vector<16x384xf32>
    %22 = arith.addf %19, %21 : vector<16x384xf32>
    %c0_15 = arith.constant 0 : index
    %c0_16 = arith.constant 0 : index
    %23 = vector.load %arg7[%c0_15, %c0_16] : memref<16x384xf32, #tpu.memory_space<vmem>>, vector<16x384xf32>
    tpu.vector_store %arg7[%c0_15, %c0_16], %22 {strides = array<i32>} : memref<16x384xf32, #tpu.memory_space<vmem>>, vector<16x384xf32>,
    %c0_i32_17 = arith.constant 0 : i32
    %24 = arith.cmpi eq, %arg1, %c0_i32_17 : i32
    %25 = arith.extui %24 : i1 to i32
    %c0_i32_18 = arith.constant 0 : i32
    %26 = arith.cmpi ne, %25, %c0_i32_18 : i32
    scf.if %26 {
      %c0_19 = arith.constant 0 : index
      %c0_20 = arith.constant 0 : index
      %27 = vector.load %arg7[%c0_19, %c0_20] : memref<16x384xf32, #tpu.memory_space<vmem>>, vector<16x384xf32>
      %c0_21 = arith.constant 0 : index
      %c0_22 = arith.constant 0 : index
      %28 = vector.load %arg6[%c0_21, %c0_22] : memref<16x384xf32, #tpu.memory_space<vmem>>, vector<16x384xf32>
      tpu.vector_store %arg6[%c0_21, %c0_22], %27 {strides = array<i32>} : memref<16x384xf32, #tpu.memory_space<vmem>>, vector<16x384xf32>,
    } else {
    }
    return
  }
  func.func @transform_0(%arg0: i32, %arg1: i32) -> (i32, i32) {
    %c0_i32 = arith.constant 0 : i32
    %c0_i32_0 = arith.constant 0 : i32
    return %arg0, %c0_i32 : i32, i32
  }
  func.func @transform_1(%arg0: i32, %arg1: i32) -> (i32, i32) {
    %c0_i32 = arith.constant 0 : i32
    %c0_i32_0 = arith.constant 0 : i32
    return %arg1, %c0_i32 : i32, i32
  }
  func.func @transform_2(%arg0: i32, %arg1: i32) -> (i32, i32) {
    %c0_i32 = arith.constant 0 : i32
    %c0_i32_0 = arith.constant 0 : i32
    return %arg1, %c0_i32 : i32, i32
  }
  func.func @transform_3(%arg0: i32, %arg1: i32) -> (i32, i32) {
    %c0_i32 = arith.constant 0 : i32
    %c0_i32_0 = arith.constant 0 : i32
    return %arg1, %c0_i32 : i32, i32
  }
  func.func @transform_4(%arg0: i32, %arg1: i32) -> (i32, i32) {
    %c0_i32 = arith.constant 0 : i32
    %c0_i32_0 = arith.constant 0 : i32
    return %arg0, %c0_i32 : i32, i32
  }
}

</mosaic_0001>

<llo_original>
// kernel: tpu_custom_call.1
$region0: #{tpu_custom_call.1}
  #allocation0 [shape = 'u32[]', space=smem, size = 0x4, offset = 0x4, fixed_abs, tag = 'smem constant byte address 0x4 - core index']
  #allocation1 [shape = 'u32[72,128]{1,0:T(1,128)}', space=vmem, size = 0x9000, scoped, tag = 'internal scratch']
  #allocation2 [shape = 'f32[16,384]{1,0:T(8,128)}', space=vmem, size = 0x6000, scoped, tag = 'scratch operand']
  %s0 = inlined_call_operand.hbm [shape: bf16[16,384], index: 0, kind: input, shape index: {}]
  %s1 = inlined_call_operand.hbm [shape: bf16[1536,384], index: 1, kind: input, shape index: {}]
  %s2 = inlined_call_operand.hbm [shape: bf16[1536,384], index: 2, kind: input, shape index: {}]
  %s3 = inlined_call_operand.hbm [shape: bf16[1536,384], index: 3, kind: input, shape index: {}]
  %s4 = inlined_call_operand.hbm [shape: f32[16,384], index: 4, kind: output, shape index: {}]
  %s5 = sld [smem:[#allocation0]]
  $region50: #{tpu_custom_call.1} parent=0
    _
  %s7 = ssub.s32 1, %s5
  %s8 = scalar_select 0, %s7, %s5
  $region1: #{tpu_custom_call.1} parent=0
    #allocation3 [shape = 'u8[12288]{0}', space=vmem, size = 0x3000, scoped, tag = 'input window, operand 0, single buffered']
    #allocation4 [shape = 's32[1]{0}', space=sflag, size = 0x4, scoped, tag = 'scoped memory for tpu_custom_call.1']
    #allocation5 [shape = 's32[1]{0}', space=sflag, size = 0x4, scoped, tag = 'scoped memory for tpu_custom_call.1']
    #allocation6 [shape = 'u8[1179648]{0}', space=vmem, size = 0x120000, scoped, tag = 'input window, operand 1, single buffered']
    #allocation7 [shape = 's32[1]{0}', space=sflag, size = 0x4, scoped, tag = 'scoped memory for tpu_custom_call.1']
    #allocation8 [shape = 'u8[1179648]{0}', space=vmem, size = 0x120000, scoped, tag = 'input window, operand 2, single buffered']
    #allocation9 [shape = 'u8[1179648]{0}', space=vmem, size = 0x120000, scoped, tag = 'input window, operand 3, single buffered']
    #allocation10 [shape = 's32[1]{0}', space=sflag, size = 0x4, scoped, tag = 'scoped memory for tpu_custom_call.1']
    #allocation11 [shape = 'u8[24576]{0}', space=vmem, size = 0x6000, scoped, tag = 'output window, operand 0, single buffered']
    %9 = vsyncpa [#allocation4], 0
    %10 = vsyncpa [#allocation7], 0
    %11 = vsyncpa [#allocation10], 0
    %12 = vsyncpa [#allocation5], 0
    // Predicated region
    $region2: #{tpu_custom_call.1} parent=1 // pred_check
      _
    $region3: #{tpu_custom_call.1} parent=1 // pred_check_branch
      %14 = sbr.rel (0) target = $region5
    $region4: #{tpu_custom_call.1} parent=1 // pred_region
      %16 = vsyncadd [#allocation4], 0
      %s17 = sshll.u32 %s0, 4
      %s18 = int_to_ptr.hbm [resolvable:$true] %s17
      %s19 = sshll.u32 [#allocation3], 4
      %s20 = int_to_ptr.vmem [resolvable:$true] %s19
      %25 = dma.hbm_to_vmem [thread:$0]  %s18, 384, %s20, [#allocation4], 192, 192, 12
    $region5: #{tpu_custom_call.1} parent=1 // pred_fallthru
      _
    // Predicated region
    $region6: #{tpu_custom_call.1} parent=1 // pred_check
      _
    $region7: #{tpu_custom_call.1} parent=1 // pred_check_branch
      %27 = sbr.rel (0) target = $region9
    $region8: #{tpu_custom_call.1} parent=1 // pred_region
      %29 = vsyncadd [#allocation7], 0
      %s30 = sshll.u32 %s1, 4
      %s31 = int_to_ptr.hbm [resolvable:$true] %s30
      %s32 = sshll.u32 [#allocation6], 4
      %s33 = int_to_ptr.vmem [resolvable:$true] %s32
      %38 = dma.hbm_to_vmem [thread:$0]  %s31, 36864, %s33, [#allocation7], 192, 192, 12
    $region9: #{tpu_custom_call.1} parent=1 // pred_fallthru
      _
    // Predicated region
    $region10: #{tpu_custom_call.1} parent=1 // pred_check
      _
    $region11: #{tpu_custom_call.1} parent=1 // pred_check_branch
      %40 = sbr.rel (0) target = $region13
    $region12: #{tpu_custom_call.1} parent=1 // pred_region
      %42 = vsyncadd [#allocation7], 0
      %s43 = sshll.u32 %s2, 4
      %s44 = int_to_ptr.hbm [resolvable:$true] %s43
      %s45 = sshll.u32 [#allocation8], 4
      %s46 = int_to_ptr.vmem [resolvable:$true] %s45
      %51 = dma.hbm_to_vmem [thread:$0]  %s44, 36864, %s46, [#allocation7], 192, 192, 12
    $region13: #{tpu_custom_call.1} parent=1 // pred_fallthru
      _
    // Predicated region
    $region14: #{tpu_custom_call.1} parent=1 // pred_check
      _
    $region15: #{tpu_custom_call.1} parent=1 // pred_check_branch
      %53 = sbr.rel (0) target = $region17
    $region16: #{tpu_custom_call.1} parent=1 // pred_region
      %55 = vsyncadd [#allocation10], 0
      %s56 = sshll.u32 %s3, 4
      %s57 = int_to_ptr.hbm [resolvable:$true] %s56
      %s58 = sshll.u32 [#allocation9], 4
      %s59 = int_to_ptr.vmem [resolvable:$true] %s58
      %64 = dma.hbm_to_vmem [thread:$0]  %s57, 36864, %s59, [#allocation10], 192, 192, 12
    $region17: #{tpu_custom_call.1} parent=1 // pred_fallthru
      _
    // Predicated region
    $region18: #{tpu_custom_call.1} parent=1 // pred_check
      _
    $region19: #{tpu_custom_call.1} parent=1 // pred_check_branch
      %66 = sbr.rel (0) target = $region21
    $region20: #{tpu_custom_call.1} parent=1 // pred_region
      %68 = dma.done [#allocation4], 384
    $region21: #{tpu_custom_call.1} parent=1 // pred_fallthru
      _
    // Predicated region
    $region22: #{tpu_custom_call.1} parent=1 // pred_check
      _
    $region23: #{tpu_custom_call.1} parent=1 // pred_check_branch
      %70 = sbr.rel (0) target = $region25
    $region24: #{tpu_custom_call.1} parent=1 // pred_region
      %72 = dma.done [#allocation7], 36864
    $region25: #{tpu_custom_call.1} parent=1 // pred_fallthru
      _
    // Predicated region
    $region26: #{tpu_custom_call.1} parent=1 // pred_check
      _
    $region27: #{tpu_custom_call.1} parent=1 // pred_check_branch
      %74 = sbr.rel (0) target = $region29
    $region28: #{tpu_custom_call.1} parent=1 // pred_region
      %76 = dma.done [#allocation7], 36864
    $region29: #{tpu_custom_call.1} parent=1 // pred_fallthru
      _
    // Predicated region
    $region30: #{tpu_custom_call.1} parent=1 // pred_check
      _
    $region31: #{tpu_custom_call.1} parent=1 // pred_check_branch
      %78 = sbr.rel (0) target = $region33
    $region32: #{tpu_custom_call.1} parent=1 // pred_region
      %80 = dma.done [#allocation10], 36864
    $region33: #{tpu_custom_call.1} parent=1 // pred_fallthru
      _
    %p81 = scmp.eq.s32.totalorder 0, 0
    // Predicated region
    $region34: #{tpu_custom_call.1} parent=1 // pred_check
      %p82 = pneg %p81
    $region35: #{tpu_custom_call.1} parent=1 // pred_check_branch
      %84 = sbr.rel (%p82) target = $region37
    $region36: #{tpu_custom_call.1} parent=1 // pred_region
      %85 = vst [vmem:[#allocation2] sm:$0xff] 0.0
      %86 = vst [vmem:[#allocation2 + $0x8] sm:$0xff] 0.0
      %87 = vst [vmem:[#allocation2 + $0x10] sm:$0xff] 0.0
      %88 = vst [vmem:[#allocation2 + $0x18] sm:$0xff] 0.0
      %89 = vst [vmem:[#allocation2 + $0x20] sm:$0xff] 0.0
      %90 = vst [vmem:[#allocation2 + $0x28] sm:$0xff] 0.0
    $region37: #{tpu_custom_call.1} parent=1 // pred_fallthru
      _
    %v91 = vld [vmem:[#allocation3] sm:$0xff]
    %v92 = vld [vmem:[#allocation3 + $0x8] sm:$0xf]
    %v93 = vld [vmem:[#allocation3 + $0xc] sm:$0xff]
    %v94 = vld [vmem:[#allocation3 + $0x14] sm:$0xf]
    %v95 = vld [vmem:[#allocation6] sm:$0xff]
    %v96 = vld [vmem:[#allocation6 + $0x8] sm:$0xf]
    %v97 = vld [vmem:[#allocation6 + $0xc] sm:$0xff]
    %v98 = vld [vmem:[#allocation6 + $0x14] sm:$0xf]
    %v99 = vld [vmem:[#allocation6 + $0x18] sm:$0xff]
    %v100 = vld [vmem:[#allocation6 + $0x20] sm:$0xf]
    %v101 = vld [vmem:[#allocation6 + $0x24] sm:$0xff]
    %v102 = vld [vmem:[#allocation6 + $0x2c] sm:$0xf]
    %v103 = vld [vmem:[#allocation6 + $0x30] sm:$0xff]
    %v104 = vld [vmem:[#allocation6 + $0x38] sm:$0xf]
    %v105 = vld [vmem:[#allocation6 + $0x3c] sm:$0xff]
    %v106 = vld [vmem:[#allocation6 + $0x44] sm:$0xf]
    %v107 = vld [vmem:[#allocation6 + $0x48] sm:$0xff]
    %v108 = vld [vmem:[#allocation6 + $0x50] sm:$0xf]
    %v109 = vld [vmem:[#allocation6 + $0x54] sm:$0xff]
    %v110 = vld [vmem:[#allocation6 + $0x5c] sm:$0xf]
    %v111 = vld [vmem:[#allocation6 + $0x60] sm:$0xff]
    %v112 = vld [vmem:[#allocation6 + $0x68] sm:$0xf]
    %v113 = vld [vmem:[#allocation6 + $0x6c] sm:$0xff]
    %v114 = vld [vmem:[#allocation6 + $0x74] sm:$0xf]
    %v115 = vld [vmem:[#allocation6 + $0x78] sm:$0xff]
    %v116 = vld [vmem:[#allocation6 + $0x80] sm:$0xf]
    %v117 = vld [vmem:[#allocation6 + $0x84] sm:$0xff]
    %v118 = vld [vmem:[#allocation6 + $0x8c] sm:$0xf]
    %v119 = vld [vmem:[#allocation6 + $0x90] sm:$0xff]
    %v120 = vld [vmem:[#allocation6 + $0x98] sm:$0xf]
    %v121 = vld [vmem:[#allocation6 + $0x9c] sm:$0xff]
    %v122 = vld [vmem:[#allocation6 + $0xa4] sm:$0xf]
    %v123 = vld [vmem:[#allocation6 + $0xa8] sm:$0xff]
    %v124 = vld [vmem:[#allocation6 + $0xb0] sm:$0xf]
    %v125 = vld [vmem:[#allocation6 + $0xb4] sm:$0xff]
    %v126 = vld [vmem:[#allocation6 + $0xbc] sm:$0xf]
    %v127 = vld [vmem:[#allocation6 + $0xc0] sm:$0xff]
    %v128 = vld [vmem:[#allocation6 + $0xc8] sm:$0xf]
    %v129 = vld [vmem:[#allocation6 + $0xcc] sm:$0xff]
    %v130 = vld [vmem:[#allocation6 + $0xd4] sm:$0xf]
    %v131 = vld [vmem:[#allocation6 + $0xd8] sm:$0xff]
    %v132 = vld [vmem:[#allocation6 + $0xe0] sm:$0xf]
    %v133 = vld [vmem:[#allocation6 + $0xe4] sm:$0xff]
    %v134 = vld [vmem:[#allocation6 + $0xec] sm:$0xf]
    %v135 = vld [vmem:[#allocation6 + $0xf0] sm:$0xff]
    %v136 = vld [vmem:[#allocation6 + $0xf8] sm:$0xf]
    %v137 = vld [vmem:[#allocation6 + $0xfc] sm:$0xff]
    %v138 = vld [vmem:[#allocation6 + $0x104] sm:$0xf]
    %v139 = vld [vmem:[#allocation6 + $0x108] sm:$0xff]
    %v140 = vld [vmem:[#allocation6 + $0x110] sm:$0xf]
    %v141 = vld [vmem:[#allocation6 + $0x114] sm:$0xff]
    %v142 = vld [vmem:[#allocation6 + $0x11c] sm:$0xf]
    %v143 = vld [vmem:[#allocation6 + $0x120] sm:$0xff]
    %v144 = vld [vmem:[#allocation6 + $0x128] sm:$0xf]
    %v145 = vld [vmem:[#allocation6 + $0x12c] sm:$0xff]
    %v146 = vld [vmem:[#allocation6 + $0x134] sm:$0xf]
    %v147 = vld [vmem:[#allocation6 + $0x138] sm:$0xff]
    %v148 = vld [vmem:[#allocation6 + $0x140] sm:$0xf]
    %v149 = vld [vmem:[#allocation6 + $0x144] sm:$0xff]
    %v150 = vld [vmem:[#allocation6 + $0x14c] sm:$0xf]
    %v151 = vld [vmem:[#allocation6 + $0x150] sm:$0xff]
    %v152 = vld [vmem:[#allocation6 + $0x158] sm:$0xf]
    %v153 = vld [vmem:[#allocation6 + $0x15c] sm:$0xff]
    %v154 = vld [vmem:[#allocation6 + $0x164] sm:$0xf]
    %v155 = vld [vmem:[#allocation6 + $0x168] sm:$0xff]
    %v156 = vld [vmem:[#allocation6 + $0x170] sm:$0xf]
    %v157 = vld [vmem:[#allocation6 + $0x174] sm:$0xff]
    %v158 = vld [vmem:[#allocation6 + $0x17c] sm:$0xf]
    %v159 = vld [vmem:[#allocation6 + $0x180] sm:$0xff]
    %v160 = vld [vmem:[#allocation6 + $0x188] sm:$0xf]
    %v161 = vld [vmem:[#allocation6 + $0x18c] sm:$0xff]
    %v162 = vld [vmem:[#allocation6 + $0x194] sm:$0xf]
    %v163 = vld [vmem:[#allocation6 + $0x198] sm:$0xff]
    %v164 = vld [vmem:[#allocation6 + $0x1a0] sm:$0xf]
    %v165 = vld [vmem:[#allocation6 + $0x1a4] sm:$0xff]
    %v166 = vld [vmem:[#allocation6 + $0x1ac] sm:$0xf]
    %v167 = vld [vmem:[#allocation6 + $0x1b0] sm:$0xff]
    %v168 = vld [vmem:[#allocation6 + $0x1b8] sm:$0xf]
    %v169 = vld [vmem:[#allocation6 + $0x1bc] sm:$0xff]
    %v170 = vld [vmem:[#allocation6 + $0x1c4] sm:$0xf]
    %v171 = vld [vmem:[#allocation6 + $0x1c8] sm:$0xff]
    %v172 = vld [vmem:[#allocation6 + $0x1d0] sm:$0xf]
    %v173 = vld [vmem:[#allocation6 + $0x1d4] sm:$0xff]
    %v174 = vld [vmem:[#allocation6 + $0x1dc] sm:$0xf]
    %v175 = vld [vmem:[#allocation6 + $0x1e0] sm:$0xff]
    %v176 = vld [vmem:[#allocation6 + $0x1e8] sm:$0xf]
    %v177 = vld [vmem:[#allocation6 + $0x1ec] sm:$0xff]
    %v178 = vld [vmem:[#allocation6 + $0x1f4] sm:$0xf]
    %v179 = vld [vmem:[#allocation6 + $0x1f8] sm:$0xff]
    %v180 = vld [vmem:[#allocation6 + $0x200] sm:$0xf]
    %v181 = vld [vmem:[#allocation6 + $0x204] sm:$0xff]
    %v182 = vld [vmem:[#allocation6 + $0x20c] sm:$0xf]
    %v183 = vld [vmem:[#allocation6 + $0x210] sm:$0xff]
    %v184 = vld [vmem:[#allocation6 + $0x218] sm:$0xf]
    %v185 = vld [vmem:[#allocation6 + $0x21c] sm:$0xff]
    %v186 = vld [vmem:[#allocation6 + $0x224] sm:$0xf]
    %v187 = vld [vmem:[#allocation6 + $0x228] sm:$0xff]
    %v188 = vld [vmem:[#allocation6 + $0x230] sm:$0xf]
    %v189 = vld [vmem:[#allocation6 + $0x234] sm:$0xff]
    %v190 = vld [vmem:[#allocation6 + $0x23c] sm:$0xf]
    %v191 = vld [vmem:[#allocation6 + $0x240] sm:$0xff]
    %v192 = vld [vmem:[#allocation6 + $0x248] sm:$0xf]
    %v193 = vld [vmem:[#allocation6 + $0x24c] sm:$0xff]
    %v194 = vld [vmem:[#allocation6 + $0x254] sm:$0xf]
    %v195 = vld [vmem:[#allocation6 + $0x258] sm:$0xff]
    %v196 = vld [vmem:[#allocation6 + $0x260] sm:$0xf]
    %v197 = vld [vmem:[#allocation6 + $0x264] sm:$0xff]
    %v198 = vld [vmem:[#allocation6 + $0x26c] sm:$0xf]
    %v199 = vld [vmem:[#allocation6 + $0x270] sm:$0xff]
    %v200 = vld [vmem:[#allocation6 + $0x278] sm:$0xf]
    %v201 = vld [vmem:[#allocation6 + $0x27c] sm:$0xff]
    %v202 = vld [vmem:[#allocation6 + $0x284] sm:$0xf]
    %v203 = vld [vmem:[#allocation6 + $0x288] sm:$0xff]
    %v204 = vld [vmem:[#allocation6 + $0x290] sm:$0xf]
    %v205 = vld [vmem:[#allocation6 + $0x294] sm:$0xff]
    %v206 = vld [vmem:[#allocation6 + $0x29c] sm:$0xf]
    %v207 = vld [vmem:[#allocation6 + $0x2a0] sm:$0xff]
    %v208 = vld [vmem:[#allocation6 + $0x2a8] sm:$0xf]
    %v209 = vld [vmem:[#allocation6 + $0x2ac] sm:$0xff]
    %v210 = vld [vmem:[#allocation6 + $0x2b4] sm:$0xf]
    %v211 = vld [vmem:[#allocation6 + $0x2b8] sm:$0xff]
    %v212 = vld [vmem:[#allocation6 + $0x2c0] sm:$0xf]
    %v213 = vld [vmem:[#allocation6 + $0x2c4] sm:$0xff]
    %v214 = vld [vmem:[#allocation6 + $0x2cc] sm:$0xf]
    %v215 = vld [vmem:[#allocation6 + $0x2d0] sm:$0xff]
    %v216 = vld [vmem:[#allocation6 + $0x2d8] sm:$0xf]
    %v217 = vld [vmem:[#allocation6 + $0x2dc] sm:$0xff]
    %v218 = vld [vmem:[#allocation6 + $0x2e4] sm:$0xf]
    %v219 = vld [vmem:[#allocation6 + $0x2e8] sm:$0xff]
    %v220 = vld [vmem:[#allocation6 + $0x2f0] sm:$0xf]
    %v221 = vld [vmem:[#allocation6 + $0x2f4] sm:$0xff]
    %v222 = vld [vmem:[#allocation6 + $0x2fc] sm:$0xf]
    %v223 = vld [vmem:[#allocation6 + $0x300] sm:$0xff]
    %v224 = vld [vmem:[#allocation6 + $0x308] sm:$0xf]
    %v225 = vld [vmem:[#allocation6 + $0x30c] sm:$0xff]
    %v226 = vld [vmem:[#allocation6 + $0x314] sm:$0xf]
    %v227 = vld [vmem:[#allocation6 + $0x318] sm:$0xff]
    %v228 = vld [vmem:[#allocation6 + $0x320] sm:$0xf]
    %v229 = vld [vmem:[#allocation6 + $0x324] sm:$0xff]
    %v230 = vld [vmem:[#allocation6 + $0x32c] sm:$0xf]
    %v231 = vld [vmem:[#allocation6 + $0x330] sm:$0xff]
    %v232 = vld [vmem:[#allocation6 + $0x338] sm:$0xf]
    %v233 = vld [vmem:[#allocation6 + $0x33c] sm:$0xff]
    %v234 = vld [vmem:[#allocation6 + $0x344] sm:$0xf]
    %v235 = vld [vmem:[#allocation6 + $0x348] sm:$0xff]
    %v236 = vld [vmem:[#allocation6 + $0x350] sm:$0xf]
    %v237 = vld [vmem:[#allocation6 + $0x354] sm:$0xff]
    %v238 = vld [vmem:[#allocation6 + $0x35c] sm:$0xf]
    %v239 = vld [vmem:[#allocation6 + $0x360] sm:$0xff]
    %v240 = vld [vmem:[#allocation6 + $0x368] sm:$0xf]
    %v241 = vld [vmem:[#allocation6 + $0x36c] sm:$0xff]
    %v242 = vld [vmem:[#allocation6 + $0x374] sm:$0xf]
    %v243 = vld [vmem:[#allocation6 + $0x378] sm:$0xff]
    %v244 = vld [vmem:[#allocation6 + $0x380] sm:$0xf]
    %v245 = vld [vmem:[#allocation6 + $0x384] sm:$0xff]
    %v246 = vld [vmem:[#allocation6 + $0x38c] sm:$0xf]
    %v247 = vld [vmem:[#allocation6 + $0x390] sm:$0xff]
    %v248 = vld [vmem:[#allocation6 + $0x398] sm:$0xf]
    %v249 = vld [vmem:[#allocation6 + $0x39c] sm:$0xff]
    %v250 = vld [vmem:[#allocation6 + $0x3a4] sm:$0xf]
    %v251 = vld [vmem:[#allocation6 + $0x3a8] sm:$0xff]
    %v252 = vld [vmem:[#allocation6 + $0x3b0] sm:$0xf]
    %v253 = vld [vmem:[#allocation6 + $0x3b4] sm:$0xff]
    %v254 = vld [vmem:[#allocation6 + $0x3bc] sm:$0xf]
    %v255 = vld [vmem:[#allocation6 + $0x3c0] sm:$0xff]
    %v256 = vld [vmem:[#allocation6 + $0x3c8] sm:$0xf]
    %v257 = vld [vmem:[#allocation6 + $0x3cc] sm:$0xff]
    %v258 = vld [vmem:[#allocation6 + $0x3d4] sm:$0xf]
    %v259 = vld [vmem:[#allocation6 + $0x3d8] sm:$0xff]
    %v260 = vld [vmem:[#allocation6 + $0x3e0] sm:$0xf]
    %v261 = vld [vmem:[#allocation6 + $0x3e4] sm:$0xff]
    %v262 = vld [vmem:[#allocation6 + $0x3ec] sm:$0xf]
    %v263 = vld [vmem:[#allocation6 + $0x3f0] sm:$0xff]
    %v264 = vld [vmem:[#allocation6 + $0x3f8] sm:$0xf]
    %v265 = vld [vmem:[#allocation6 + $0x3fc] sm:$0xff]
    %v266 = vld [vmem:[#allocation6 + $0x404] sm:$0xf]
    %v267 = vld [vmem:[#allocation6 + $0x408] sm:$0xff]
    %v268 = vld [vmem:[#allocation6 + $0x410] sm:$0xf]
    %v269 = vld [vmem:[#allocation6 + $0x414] sm:$0xff]
    %v270 = vld [vmem:[#allocation6 + $0x41c] sm:$0xf]
    %v271 = vld [vmem:[#allocation6 + $0x420] sm:$0xff]
    %v272 = vld [vmem:[#allocation6 + $0x428] sm:$0xf]
    %v273 = vld [vmem:[#allocation6 + $0x42c] sm:$0xff]
    %v274 = vld [vmem:[#allocation6 + $0x434] sm:$0xf]
    %v275 = vld [vmem:[#allocation6 + $0x438] sm:$0xff]
    %v276 = vld [vmem:[#allocation6 + $0x440] sm:$0xf]
    %v277 = vld [vmem:[#allocation6 + $0x444] sm:$0xff]
    %v278 = vld [vmem:[#allocation6 + $0x44c] sm:$0xf]
    %v279 = vld [vmem:[#allocation6 + $0x450] sm:$0xff]
    %v280 = vld [vmem:[#allocation6 + $0x458] sm:$0xf]
    %v281 = vld [vmem:[#allocation6 + $0x45c] sm:$0xff]
    %v282 = vld [vmem:[#allocation6 + $0x464] sm:$0xf]
    %v283 = vld [vmem:[#allocation6 + $0x468] sm:$0xff]
    %v284 = vld [vmem:[#allocation6 + $0x470] sm:$0xf]
    %v285 = vld [vmem:[#allocation6 + $0x474] sm:$0xff]
    %v286 = vld [vmem:[#allocation6 + $0x47c] sm:$0xf]
    %v287 = vld [vmem:[#allocation6 + $0x480] sm:$0xff]
    %v288 = vld [vmem:[#allocation6 + $0x488] sm:$0xf]
    %v289 = vld [vmem:[#allocation6 + $0x48c] sm:$0xff]
    %v290 = vld [vmem:[#allocation6 + $0x494] sm:$0xf]
    %v291 = vld [vmem:[#allocation6 + $0x498] sm:$0xff]
    %v292 = vld [vmem:[#allocation6 + $0x4a0] sm:$0xf]
    %v293 = vld [vmem:[#allocation6 + $0x4a4] sm:$0xff]
    %v294 = vld [vmem:[#allocation6 + $0x4ac] sm:$0xf]
    %v295 = vld [vmem:[#allocation6 + $0x4b0] sm:$0xff]
    %v296 = vld [vmem:[#allocation6 + $0x4b8] sm:$0xf]
    %v297 = vld [vmem:[#allocation6 + $0x4bc] sm:$0xff]
    %v298 = vld [vmem:[#allocation6 + $0x4c4] sm:$0xf]
    %v299 = vld [vmem:[#allocation6 + $0x4c8] sm:$0xff]
    %v300 = vld [vmem:[#allocation6 + $0x4d0] sm:$0xf]
    %v301 = vld [vmem:[#allocation6 + $0x4d4] sm:$0xff]
    %v302 = vld [vmem:[#allocation6 + $0x4dc] sm:$0xf]
    %v303 = vld [vmem:[#allocation6 + $0x4e0] sm:$0xff]
    %v304 = vld [vmem:[#allocation6 + $0x4e8] sm:$0xf]
    %v305 = vld [vmem:[#allocation6 + $0x4ec] sm:$0xff]
    %v306 = vld [vmem:[#allocation6 + $0x4f4] sm:$0xf]
    %v307 = vld [vmem:[#allocation6 + $0x4f8] sm:$0xff]
    %v308 = vld [vmem:[#allocation6 + $0x500] sm:$0xf]
    %v309 = vld [vmem:[#allocation6 + $0x504] sm:$0xff]
    %v310 = vld [vmem:[#allocation6 + $0x50c] sm:$0xf]
    %v311 = vld [vmem:[#allocation6 + $0x510] sm:$0xff]
    %v312 = vld [vmem:[#allocation6 + $0x518] sm:$0xf]
    %v313 = vld [vmem:[#allocation6 + $0x51c] sm:$0xff]
    %v314 = vld [vmem:[#allocation6 + $0x524] sm:$0xf]
    %v315 = vld [vmem:[#allocation6 + $0x528] sm:$0xff]
    %v316 = vld [vmem:[#allocation6 + $0x530] sm:$0xf]
    %v317 = vld [vmem:[#allocation6 + $0x534] sm:$0xff]
    %v318 = vld [vmem:[#allocation6 + $0x53c] sm:$0xf]
    %v319 = vld [vmem:[#allocation6 + $0x540] sm:$0xff]
    %v320 = vld [vmem:[#allocation6 + $0x548] sm:$0xf]
    %v321 = vld [vmem:[#allocation6 + $0x54c] sm:$0xff]
    %v322 = vld [vmem:[#allocation6 + $0x554] sm:$0xf]
    %v323 = vld [vmem:[#allocation6 + $0x558] sm:$0xff]
    %v324 = vld [vmem:[#allocation6 + $0x560] sm:$0xf]
    %v325 = vld [vmem:[#allocation6 + $0x564] sm:$0xff]
    %v326 = vld [vmem:[#allocation6 + $0x56c] sm:$0xf]
    %v327 = vld [vmem:[#allocation6 + $0x570] sm:$0xff]
    %v328 = vld [vmem:[#allocation6 + $0x578] sm:$0xf]
    %v329 = vld [vmem:[#allocation6 + $0x57c] sm:$0xff]
    %v330 = vld [vmem:[#allocation6 + $0x584] sm:$0xf]
    %v331 = vld [vmem:[#allocation6 + $0x588] sm:$0xff]
    %v332 = vld [vmem:[#allocation6 + $0x590] sm:$0xf]
    %v333 = vld [vmem:[#allocation6 + $0x594] sm:$0xff]
    %v334 = vld [vmem:[#allocation6 + $0x59c] sm:$0xf]
    %v335 = vld [vmem:[#allocation6 + $0x5a0] sm:$0xff]
    %v336 = vld [vmem:[#allocation6 + $0x5a8] sm:$0xf]
    %v337 = vld [vmem:[#allocation6 + $0x5ac] sm:$0xff]
    %v338 = vld [vmem:[#allocation6 + $0x5b4] sm:$0xf]
    %v339 = vld [vmem:[#allocation6 + $0x5b8] sm:$0xff]
    %v340 = vld [vmem:[#allocation6 + $0x5c0] sm:$0xf]
    %v341 = vld [vmem:[#allocation6 + $0x5c4] sm:$0xff]
    %v342 = vld [vmem:[#allocation6 + $0x5cc] sm:$0xf]
    %v343 = vld [vmem:[#allocation6 + $0x5d0] sm:$0xff]
    %v344 = vld [vmem:[#allocation6 + $0x5d8] sm:$0xf]
    %v345 = vld [vmem:[#allocation6 + $0x5dc] sm:$0xff]
    %v346 = vld [vmem:[#allocation6 + $0x5e4] sm:$0xf]
    %v347 = vld [vmem:[#allocation6 + $0x5e8] sm:$0xff]
    %v348 = vld [vmem:[#allocation6 + $0x5f0] sm:$0xf]
    %v349 = vld [vmem:[#allocation6 + $0x5f4] sm:$0xff]
    %v350 = vld [vmem:[#allocation6 + $0x5fc] sm:$0xf]
    %v351 = vld [vmem:[#allocation6 + $0x600] sm:$0xff]
    %v352 = vld [vmem:[#allocation6 + $0x608] sm:$0xf]
    %v353 = vld [vmem:[#allocation6 + $0x60c] sm:$0xff]
    %v354 = vld [vmem:[#allocation6 + $0x614] sm:$0xf]
    %v355 = vld [vmem:[#allocation6 + $0x618] sm:$0xff]
    %v356 = vld [vmem:[#allocation6 + $0x620] sm:$0xf]
    %v357 = vld [vmem:[#allocation6 + $0x624] sm:$0xff]
    %v358 = vld [vmem:[#allocation6 + $0x62c] sm:$0xf]
    %v359 = vld [vmem:[#allocation6 + $0x630] sm:$0xff]
    %v360 = vld [vmem:[#allocation6 + $0x638] sm:$0xf]
    %v361 = vld [vmem:[#allocation6 + $0x63c] sm:$0xff]
    %v362 = vld [vmem:[#allocation6 + $0x644] sm:$0xf]
    %v363 = vld [vmem:[#allocation6 + $0x648] sm:$0xff]
    %v364 = vld [vmem:[#allocation6 + $0x650] sm:$0xf]
    %v365 = vld [vmem:[#allocation6 + $0x654] sm:$0xff]
    %v366 = vld [vmem:[#allocation6 + $0x65c] sm:$0xf]
    %v367 = vld [vmem:[#allocation6 + $0x660] sm:$0xff]
    %v368 = vld [vmem:[#allocation6 + $0x668] sm:$0xf]
    %v369 = vld [vmem:[#allocation6 + $0x66c] sm:$0xff]
    %v370 = vld [vmem:[#allocation6 + $0x674] sm:$0xf]
    %v371 = vld [vmem:[#allocation6 + $0x678] sm:$0xff]
    %v372 = vld [vmem:[#allocation6 + $0x680] sm:$0xf]
    %v373 = vld [vmem:[#allocation6 + $0x684] sm:$0xff]
    %v374 = vld [vmem:[#allocation6 + $0x68c] sm:$0xf]
    %v375 = vld [vmem:[#allocation6 + $0x690] sm:$0xff]
    %v376 = vld [vmem:[#allocation6 + $0x698] sm:$0xf]
    %v377 = vld [vmem:[#allocation6 + $0x69c] sm:$0xff]
    %v378 = vld [vmem:[#allocation6 + $0x6a4] sm:$0xf]
    %v379 = vld [vmem:[#allocation6 + $0x6a8] sm:$0xff]
    %v380 = vld [vmem:[#allocation6 + $0x6b0] sm:$0xf]
    %v381 = vld [vmem:[#allocation6 + $0x6b4] sm:$0xff]
    %v382 = vld [vmem:[#allocation6 + $0x6bc] sm:$0xf]
    %v383 = vld [vmem:[#allocation6 + $0x6c0] sm:$0xff]
    %v384 = vld [vmem:[#allocation6 + $0x6c8] sm:$0xf]
    %v385 = vld [vmem:[#allocation6 + $0x6cc] sm:$0xff]
    %v386 = vld [vmem:[#allocation6 + $0x6d4] sm:$0xf]
    %v387 = vld [vmem:[#allocation6 + $0x6d8] sm:$0xff]
    %v388 = vld [vmem:[#allocation6 + $0x6e0] sm:$0xf]
    %v389 = vld [vmem:[#allocation6 + $0x6e4] sm:$0xff]
    %v390 = vld [vmem:[#allocation6 + $0x6ec] sm:$0xf]
    %v391 = vld [vmem:[#allocation6 + $0x6f0] sm:$0xff]
    %v392 = vld [vmem:[#allocation6 + $0x6f8] sm:$0xf]
    %v393 = vld [vmem:[#allocation6 + $0x6fc] sm:$0xff]
    %v394 = vld [vmem:[#allocation6 + $0x704] sm:$0xf]
    %v395 = vld [vmem:[#allocation6 + $0x708] sm:$0xff]
    %v396 = vld [vmem:[#allocation6 + $0x710] sm:$0xf]
    %v397 = vld [vmem:[#allocation6 + $0x714] sm:$0xff]
    %v398 = vld [vmem:[#allocation6 + $0x71c] sm:$0xf]
    %v399 = vld [vmem:[#allocation6 + $0x720] sm:$0xff]
    %v400 = vld [vmem:[#allocation6 + $0x728] sm:$0xf]
    %v401 = vld [vmem:[#allocation6 + $0x72c] sm:$0xff]
    %v402 = vld [vmem:[#allocation6 + $0x734] sm:$0xf]
    %v403 = vld [vmem:[#allocation6 + $0x738] sm:$0xff]
    %v404 = vld [vmem:[#allocation6 + $0x740] sm:$0xf]
    %v405 = vld [vmem:[#allocation6 + $0x744] sm:$0xff]
    %v406 = vld [vmem:[#allocation6 + $0x74c] sm:$0xf]
    %v407 = vld [vmem:[#allocation6 + $0x750] sm:$0xff]
    %v408 = vld [vmem:[#allocation6 + $0x758] sm:$0xf]
    %v409 = vld [vmem:[#allocation6 + $0x75c] sm:$0xff]
    %v410 = vld [vmem:[#allocation6 + $0x764] sm:$0xf]
    %v411 = vld [vmem:[#allocation6 + $0x768] sm:$0xff]
    %v412 = vld [vmem:[#allocation6 + $0x770] sm:$0xf]
    %v413 = vld [vmem:[#allocation6 + $0x774] sm:$0xff]
    %v414 = vld [vmem:[#allocation6 + $0x77c] sm:$0xf]
    %v415 = vld [vmem:[#allocation6 + $0x780] sm:$0xff]
    %v416 = vld [vmem:[#allocation6 + $0x788] sm:$0xf]
    %v417 = vld [vmem:[#allocation6 + $0x78c] sm:$0xff]
    %v418 = vld [vmem:[#allocation6 + $0x794] sm:$0xf]
    %v419 = vld [vmem:[#allocation6 + $0x798] sm:$0xff]
    %v420 = vld [vmem:[#allocation6 + $0x7a0] sm:$0xf]
    %v421 = vld [vmem:[#allocation6 + $0x7a4] sm:$0xff]
    %v422 = vld [vmem:[#allocation6 + $0x7ac] sm:$0xf]
    %v423 = vld [vmem:[#allocation6 + $0x7b0] sm:$0xff]
    %v424 = vld [vmem:[#allocation6 + $0x7b8] sm:$0xf]
    %v425 = vld [vmem:[#allocation6 + $0x7bc] sm:$0xff]
    %v426 = vld [vmem:[#allocation6 + $0x7c4] sm:$0xf]
    %v427 = vld [vmem:[#allocation6 + $0x7c8] sm:$0xff]
    %v428 = vld [vmem:[#allocation6 + $0x7d0] sm:$0xf]
    %v429 = vld [vmem:[#allocation6 + $0x7d4] sm:$0xff]
    %v430 = vld [vmem:[#allocation6 + $0x7dc] sm:$0xf]
    %v431 = vld [vmem:[#allocation6 + $0x7e0] sm:$0xff]
    %v432 = vld [vmem:[#allocation6 + $0x7e8] sm:$0xf]
    %v433 = vld [vmem:[#allocation6 + $0x7ec] sm:$0xff]
    %v434 = vld [vmem:[#allocation6 + $0x7f4] sm:$0xf]
    %v435 = vld [vmem:[#allocation6 + $0x7f8] sm:$0xff]
    %v436 = vld [vmem:[#allocation6 + $0x800] sm:$0xf]
    %v437 = vld [vmem:[#allocation6 + $0x804] sm:$0xff]
    %v438 = vld [vmem:[#allocation6 + $0x80c] sm:$0xf]
    %v439 = vld [vmem:[#allocation6 + $0x810] sm:$0xff]
    %v440 = vld [vmem:[#allocation6 + $0x818] sm:$0xf]
    %v441 = vld [vmem:[#allocation6 + $0x81c] sm:$0xff]
    %v442 = vld [vmem:[#allocation6 + $0x824] sm:$0xf]
    %v443 = vld [vmem:[#allocation6 + $0x828] sm:$0xff]
    %v444 = vld [vmem:[#allocation6 + $0x830] sm:$0xf]
    %v445 = vld [vmem:[#allocation6 + $0x834] sm:$0xff]
    %v446 = vld [vmem:[#allocation6 + $0x83c] sm:$0xf]
    %v447 = vld [vmem:[#allocation6 + $0x840] sm:$0xff]
    %v448 = vld [vmem:[#allocation6 + $0x848] sm:$0xf]
    %v449 = vld [vmem:[#allocation6 + $0x84c] sm:$0xff]
    %v450 = vld [vmem:[#allocation6 + $0x854] sm:$0xf]
    %v451 = vld [vmem:[#allocation6 + $0x858] sm:$0xff]
    %v452 = vld [vmem:[#allocation6 + $0x860] sm:$0xf]
    %v453 = vld [vmem:[#allocation6 + $0x864] sm:$0xff]
    %v454 = vld [vmem:[#allocation6 + $0x86c] sm:$0xf]
    %v455 = vld [vmem:[#allocation6 + $0x870] sm:$0xff]
    %v456 = vld [vmem:[#allocation6 + $0x878] sm:$0xf]
    %v457 = vld [vmem:[#allocation6 + $0x87c] sm:$0xff]
    %v458 = vld [vmem:[#allocation6 + $0x884] sm:$0xf]
    %v459 = vld [vmem:[#allocation6 + $0x888] sm:$0xff]
    %v460 = vld [vmem:[#allocation6 + $0x890] sm:$0xf]
    %v461 = vld [vmem:[#allocation6 + $0x894] sm:$0xff]
    %v462 = vld [vmem:[#allocation6 + $0x89c] sm:$0xf]
    %v463 = vld [vmem:[#allocation6 + $0x8a0] sm:$0xff]
    %v464 = vld [vmem:[#allocation6 + $0x8a8] sm:$0xf]
    %v465 = vld [vmem:[#allocation6 + $0x8ac] sm:$0xff]
    %v466 = vld [vmem:[#allocation6 + $0x8b4] sm:$0xf]
    %v467 = vld [vmem:[#allocation6 + $0x8b8] sm:$0xff]
    %v468 = vld [vmem:[#allocation6 + $0x8c0] sm:$0xf]
    %v469 = vld [vmem:[#allocation6 + $0x8c4] sm:$0xff]
    %v470 = vld [vmem:[#allocation6 + $0x8cc] sm:$0xf]
    %v471 = vld [vmem:[#allocation6 + $0x8d0] sm:$0xff]
    %v472 = vld [vmem:[#allocation6 + $0x8d8] sm:$0xf]
    %v473 = vld [vmem:[#allocation6 + $0x8dc] sm:$0xff]
    %v474 = vld [vmem:[#allocation6 + $0x8e4] sm:$0xf]
    %v475 = vld [vmem:[#allocation6 + $0x8e8] sm:$0xff]
    %v476 = vld [vmem:[#allocation6 + $0x8f0] sm:$0xf]
    %v477 = vld [vmem:[#allocation6 + $0x8f4] sm:$0xff]
    %v478 = vld [vmem:[#allocation6 + $0x8fc] sm:$0xf]
    %v483 = vunpack.c.l.b16 %v91
    %v484 = vunpack.c.h.b16 %v91
    %v485 = vunpack.c.l.b16 %v92
    %v486 = vunpack.c.l.b16 %v93
    %v487 = vunpack.c.h.b16 %v93
    %v488 = vunpack.c.l.b16 %v94
    %v489 = vpack.c.b16 %v486, %v483
    %v490 = vpack.c.b16 %v487, %v484
    %v491 = vpack.c.b16 %v488, %v485
    %v879 = vunpack.c.l.b16 %v95
    %v880 = vunpack.c.h.b16 %v95
    %v881 = vunpack.c.l.b16 %v96
    %v882 = vunpack.c.l.b16 %v97
    %v883 = vunpack.c.h.b16 %v97
    %v884 = vunpack.c.l.b16 %v98
    %v885 = vunpack.c.l.b16 %v99
    %v886 = vunpack.c.h.b16 %v99
    %v887 = vunpack.c.l.b16 %v100
    %v888 = vunpack.c.l.b16 %v101
    %v889 = vunpack.c.h.b16 %v101
    %v890 = vunpack.c.l.b16 %v102
    %v891 = vunpack.c.l.b16 %v103
    %v892 = vunpack.c.h.b16 %v103
    %v893 = vunpack.c.l.b16 %v104
    %v894 = vunpack.c.l.b16 %v105
    %v895 = vunpack.c.h.b16 %v105
    %v896 = vunpack.c.l.b16 %v106
    %v897 = vunpack.c.l.b16 %v107
    %v898 = vunpack.c.h.b16 %v107
    %v899 = vunpack.c.l.b16 %v108
    %v900 = vunpack.c.l.b16 %v109
    %v901 = vunpack.c.h.b16 %v109
    %v902 = vunpack.c.l.b16 %v110
    %v903 = vunpack.c.l.b16 %v111
    %v904 = vunpack.c.h.b16 %v111
    %v905 = vunpack.c.l.b16 %v112
    %v906 = vunpack.c.l.b16 %v113
    %v907 = vunpack.c.h.b16 %v113
    %v908 = vunpack.c.l.b16 %v114
    %v909 = vunpack.c.l.b16 %v115
    %v910 = vunpack.c.h.b16 %v115
    %v911 = vunpack.c.l.b16 %v116
    %v912 = vunpack.c.l.b16 %v117
    %v913 = vunpack.c.h.b16 %v117
    %v914 = vunpack.c.l.b16 %v118
    %v915 = vunpack.c.l.b16 %v119
    %v916 = vunpack.c.h.b16 %v119
    %v917 = vunpack.c.l.b16 %v120
    %v918 = vunpack.c.l.b16 %v121
    %v919 = vunpack.c.h.b16 %v121
    %v920 = vunpack.c.l.b16 %v122
    %v921 = vunpack.c.l.b16 %v123
    %v922 = vunpack.c.h.b16 %v123
    %v923 = vunpack.c.l.b16 %v124
    %v924 = vunpack.c.l.b16 %v125
    %v925 = vunpack.c.h.b16 %v125
    %v926 = vunpack.c.l.b16 %v126
    %v927 = vunpack.c.l.b16 %v127
    %v928 = vunpack.c.h.b16 %v127
    %v929 = vunpack.c.l.b16 %v128
    %v930 = vunpack.c.l.b16 %v129
    %v931 = vunpack.c.h.b16 %v129
    %v932 = vunpack.c.l.b16 %v130
    %v933 = vunpack.c.l.b16 %v131
    %v934 = vunpack.c.h.b16 %v131
    %v935 = vunpack.c.l.b16 %v132
    %v936 = vunpack.c.l.b16 %v133
    %v937 = vunpack.c.h.b16 %v133
    %v938 = vunpack.c.l.b16 %v134
    %v939 = vunpack.c.l.b16 %v135
    %v940 = vunpack.c.h.b16 %v135
    %v941 = vunpack.c.l.b16 %v136
    %v942 = vunpack.c.l.b16 %v137
    %v943 = vunpack.c.h.b16 %v137
    %v944 = vunpack.c.l.b16 %v138
    %v945 = vunpack.c.l.b16 %v139
    %v946 = vunpack.c.h.b16 %v139
    %v947 = vunpack.c.l.b16 %v140
    %v948 = vunpack.c.l.b16 %v141
    %v949 = vunpack.c.h.b16 %v141
    %v950 = vunpack.c.l.b16 %v142
    %v951 = vunpack.c.l.b16 %v143
    %v952 = vunpack.c.h.b16 %v143
    %v953 = vunpack.c.l.b16 %v144
    %v954 = vunpack.c.l.b16 %v145
    %v955 = vunpack.c.h.b16 %v145
    %v956 = vunpack.c.l.b16 %v146
    %v957 = vunpack.c.l.b16 %v147
    %v958 = vunpack.c.h.b16 %v147
    %v959 = vunpack.c.l.b16 %v148
    %v960 = vunpack.c.l.b16 %v149
    %v961 = vunpack.c.h.b16 %v149
    %v962 = vunpack.c.l.b16 %v150
    %v963 = vunpack.c.l.b16 %v151
    %v964 = vunpack.c.h.b16 %v151
    %v965 = vunpack.c.l.b16 %v152
    %v966 = vunpack.c.l.b16 %v153
    %v967 = vunpack.c.h.b16 %v153
    %v968 = vunpack.c.l.b16 %v154
    %v969 = vunpack.c.l.b16 %v155
    %v970 = vunpack.c.h.b16 %v155
    %v971 = vunpack.c.l.b16 %v156
    %v972 = vunpack.c.l.b16 %v157
    %v973 = vunpack.c.h.b16 %v157
    %v974 = vunpack.c.l.b16 %v158
    %v975 = vunpack.c.l.b16 %v159
    %v976 = vunpack.c.h.b16 %v159
    %v977 = vunpack.c.l.b16 %v160
    %v978 = vunpack.c.l.b16 %v161
    %v979 = vunpack.c.h.b16 %v161
    %v980 = vunpack.c.l.b16 %v162
    %v981 = vunpack.c.l.b16 %v163
    %v982 = vunpack.c.h.b16 %v163
    %v983 = vunpack.c.l.b16 %v164
    %v984 = vunpack.c.l.b16 %v165
    %v985 = vunpack.c.h.b16 %v165
    %v986 = vunpack.c.l.b16 %v166
    %v987 = vunpack.c.l.b16 %v167
    %v988 = vunpack.c.h.b16 %v167
    %v989 = vunpack.c.l.b16 %v168
    %v990 = vunpack.c.l.b16 %v169
    %v991 = vunpack.c.h.b16 %v169
    %v992 = vunpack.c.l.b16 %v170
    %v993 = vunpack.c.l.b16 %v171
    %v994 = vunpack.c.h.b16 %v171
    %v995 = vunpack.c.l.b16 %v172
    %v996 = vunpack.c.l.b16 %v173
    %v997 = vunpack.c.h.b16 %v173
    %v998 = vunpack.c.l.b16 %v174
    %v999 = vunpack.c.l.b16 %v175
    %v1000 = vunpack.c.h.b16 %v175
    %v1001 = vunpack.c.l.b16 %v176
    %v1002 = vunpack.c.l.b16 %v177
    %v1003 = vunpack.c.h.b16 %v177
    %v1004 = vunpack.c.l.b16 %v178
    %v1005 = vunpack.c.l.b16 %v179
    %v1006 = vunpack.c.h.b16 %v179
    %v1007 = vunpack.c.l.b16 %v180
    %v1008 = vunpack.c.l.b16 %v181
    %v1009 = vunpack.c.h.b16 %v181
    %v1010 = vunpack.c.l.b16 %v182
    %v1011 = vunpack.c.l.b16 %v183
    %v1012 = vunpack.c.h.b16 %v183
    %v1013 = vunpack.c.l.b16 %v184
    %v1014 = vunpack.c.l.b16 %v185
    %v1015 = vunpack.c.h.b16 %v185
    %v1016 = vunpack.c.l.b16 %v186
    %v1017 = vunpack.c.l.b16 %v187
    %v1018 = vunpack.c.h.b16 %v187
    %v1019 = vunpack.c.l.b16 %v188
    %v1020 = vunpack.c.l.b16 %v189
    %v1021 = vunpack.c.h.b16 %v189
    %v1022 = vunpack.c.l.b16 %v190
    %v1023 = vunpack.c.l.b16 %v191
    %v1024 = vunpack.c.h.b16 %v191
    %v1025 = vunpack.c.l.b16 %v192
    %v1026 = vunpack.c.l.b16 %v193
    %v1027 = vunpack.c.h.b16 %v193
    %v1028 = vunpack.c.l.b16 %v194
    %v1029 = vunpack.c.l.b16 %v195
    %v1030 = vunpack.c.h.b16 %v195
    %v1031 = vunpack.c.l.b16 %v196
    %v1032 = vunpack.c.l.b16 %v197
    %v1033 = vunpack.c.h.b16 %v197
    %v1034 = vunpack.c.l.b16 %v198
    %v1035 = vunpack.c.l.b16 %v199
    %v1036 = vunpack.c.h.b16 %v199
    %v1037 = vunpack.c.l.b16 %v200
    %v1038 = vunpack.c.l.b16 %v201
    %v1039 = vunpack.c.h.b16 %v201
    %v1040 = vunpack.c.l.b16 %v202
    %v1041 = vunpack.c.l.b16 %v203
    %v1042 = vunpack.c.h.b16 %v203
    %v1043 = vunpack.c.l.b16 %v204
    %v1044 = vunpack.c.l.b16 %v205
    %v1045 = vunpack.c.h.b16 %v205
    %v1046 = vunpack.c.l.b16 %v206
    %v1047 = vunpack.c.l.b16 %v207
    %v1048 = vunpack.c.h.b16 %v207
    %v1049 = vunpack.c.l.b16 %v208
    %v1050 = vunpack.c.l.b16 %v209
    %v1051 = vunpack.c.h.b16 %v209
    %v1052 = vunpack.c.l.b16 %v210
    %v1053 = vunpack.c.l.b16 %v211
    %v1054 = vunpack.c.h.b16 %v211
    %v1055 = vunpack.c.l.b16 %v212
    %v1056 = vunpack.c.l.b16 %v213
    %v1057 = vunpack.c.h.b16 %v213
    %v1058 = vunpack.c.l.b16 %v214
    %v1059 = vunpack.c.l.b16 %v215
    %v1060 = vunpack.c.h.b16 %v215
    %v1061 = vunpack.c.l.b16 %v216
    %v1062 = vunpack.c.l.b16 %v217
    %v1063 = vunpack.c.h.b16 %v217
    %v1064 = vunpack.c.l.b16 %v218
    %v1065 = vunpack.c.l.b16 %v219
    %v1066 = vunpack.c.h.b16 %v219
    %v1067 = vunpack.c.l.b16 %v220
    %v1068 = vunpack.c.l.b16 %v221
    %v1069 = vunpack.c.h.b16 %v221
    %v1070 = vunpack.c.l.b16 %v222
    %v1071 = vunpack.c.l.b16 %v223
    %v1072 = vunpack.c.h.b16 %v223
    %v1073 = vunpack.c.l.b16 %v224
    %v1074 = vunpack.c.l.b16 %v225
    %v1075 = vunpack.c.h.b16 %v225
    %v1076 = vunpack.c.l.b16 %v226
    %v1077 = vunpack.c.l.b16 %v227
    %v1078 = vunpack.c.h.b16 %v227
    %v1079 = vunpack.c.l.b16 %v228
    %v1080 = vunpack.c.l.b16 %v229
    %v1081 = vunpack.c.h.b16 %v229
    %v1082 = vunpack.c.l.b16 %v230
    %v1083 = vunpack.c.l.b16 %v231
    %v1084 = vunpack.c.h.b16 %v231
    %v1085 = vunpack.c.l.b16 %v232
    %v1086 = vunpack.c.l.b16 %v233
    %v1087 = vunpack.c.h.b16 %v233
    %v1088 = vunpack.c.l.b16 %v234
    %v1089 = vunpack.c.l.b16 %v235
    %v1090 = vunpack.c.h.b16 %v235
    %v1091 = vunpack.c.l.b16 %v236
    %v1092 = vunpack.c.l.b16 %v237
    %v1093 = vunpack.c.h.b16 %v237
    %v1094 = vunpack.c.l.b16 %v238
    %v1095 = vunpack.c.l.b16 %v239
    %v1096 = vunpack.c.h.b16 %v239
    %v1097 = vunpack.c.l.b16 %v240
    %v1098 = vunpack.c.l.b16 %v241
    %v1099 = vunpack.c.h.b16 %v241
    %v1100 = vunpack.c.l.b16 %v242
    %v1101 = vunpack.c.l.b16 %v243
    %v1102 = vunpack.c.h.b16 %v243
    %v1103 = vunpack.c.l.b16 %v244
    %v1104 = vunpack.c.l.b16 %v245
    %v1105 = vunpack.c.h.b16 %v245
    %v1106 = vunpack.c.l.b16 %v246
    %v1107 = vunpack.c.l.b16 %v247
    %v1108 = vunpack.c.h.b16 %v247
    %v1109 = vunpack.c.l.b16 %v248
    %v1110 = vunpack.c.l.b16 %v249
    %v1111 = vunpack.c.h.b16 %v249
    %v1112 = vunpack.c.l.b16 %v250
    %v1113 = vunpack.c.l.b16 %v251
    %v1114 = vunpack.c.h.b16 %v251
    %v1115 = vunpack.c.l.b16 %v252
    %v1116 = vunpack.c.l.b16 %v253
    %v1117 = vunpack.c.h.b16 %v253
    %v1118 = vunpack.c.l.b16 %v254
    %v1119 = vunpack.c.l.b16 %v255
    %v1120 = vunpack.c.h.b16 %v255
    %v1121 = vunpack.c.l.b16 %v256
    %v1122 = vunpack.c.l.b16 %v257
    %v1123 = vunpack.c.h.b16 %v257
    %v1124 = vunpack.c.l.b16 %v258
    %v1125 = vunpack.c.l.b16 %v259
    %v1126 = vunpack.c.h.b16 %v259
    %v1127 = vunpack.c.l.b16 %v260
    %v1128 = vunpack.c.l.b16 %v261
    %v1129 = vunpack.c.h.b16 %v261
    %v1130 = vunpack.c.l.b16 %v262
    %v1131 = vunpack.c.l.b16 %v263
    %v1132 = vunpack.c.h.b16 %v263
    %v1133 = vunpack.c.l.b16 %v264
    %v1134 = vunpack.c.l.b16 %v265
    %v1135 = vunpack.c.h.b16 %v265
    %v1136 = vunpack.c.l.b16 %v266
    %v1137 = vunpack.c.l.b16 %v267
    %v1138 = vunpack.c.h.b16 %v267
    %v1139 = vunpack.c.l.b16 %v268
    %v1140 = vunpack.c.l.b16 %v269
    %v1141 = vunpack.c.h.b16 %v269
    %v1142 = vunpack.c.l.b16 %v270
    %v1143 = vunpack.c.l.b16 %v271
    %v1144 = vunpack.c.h.b16 %v271
    %v1145 = vunpack.c.l.b16 %v272
    %v1146 = vunpack.c.l.b16 %v273
    %v1147 = vunpack.c.h.b16 %v273
    %v1148 = vunpack.c.l.b16 %v274
    %v1149 = vunpack.c.l.b16 %v275
    %v1150 = vunpack.c.h.b16 %v275
    %v1151 = vunpack.c.l.b16 %v276
    %v1152 = vunpack.c.l.b16 %v277
    %v1153 = vunpack.c.h.b16 %v277
    %v1154 = vunpack.c.l.b16 %v278
    %v1155 = vunpack.c.l.b16 %v279
    %v1156 = vunpack.c.h.b16 %v279
    %v1157 = vunpack.c.l.b16 %v280
    %v1158 = vunpack.c.l.b16 %v281
    %v1159 = vunpack.c.h.b16 %v281
    %v1160 = vunpack.c.l.b16 %v282
    %v1161 = vunpack.c.l.b16 %v283
    %v1162 = vunpack.c.h.b16 %v283
    %v1163 = vunpack.c.l.b16 %v284
    %v1164 = vunpack.c.l.b16 %v285
    %v1165 = vunpack.c.h.b16 %v285
    %v1166 = vunpack.c.l.b16 %v286
    %v1167 = vunpack.c.l.b16 %v287
    %v1168 = vunpack.c.h.b16 %v287
    %v1169 = vunpack.c.l.b16 %v288
    %v1170 = vunpack.c.l.b16 %v289
    %v1171 = vunpack.c.h.b16 %v289
    %v1172 = vunpack.c.l.b16 %v290
    %v1173 = vunpack.c.l.b16 %v291
    %v1174 = vunpack.c.h.b16 %v291
    %v1175 = vunpack.c.l.b16 %v292
    %v1176 = vunpack.c.l.b16 %v293
    %v1177 = vunpack.c.h.b16 %v293
    %v1178 = vunpack.c.l.b16 %v294
    %v1179 = vunpack.c.l.b16 %v295
    %v1180 = vunpack.c.h.b16 %v295
    %v1181 = vunpack.c.l.b16 %v296
    %v1182 = vunpack.c.l.b16 %v297
    %v1183 = vunpack.c.h.b16 %v297
    %v1184 = vunpack.c.l.b16 %v298
    %v1185 = vunpack.c.l.b16 %v299
    %v1186 = vunpack.c.h.b16 %v299
    %v1187 = vunpack.c.l.b16 %v300
    %v1188 = vunpack.c.l.b16 %v301
    %v1189 = vunpack.c.h.b16 %v301
    %v1190 = vunpack.c.l.b16 %v302
    %v1191 = vunpack.c.l.b16 %v303
    %v1192 = vunpack.c.h.b16 %v303
    %v1193 = vunpack.c.l.b16 %v304
    %v1194 = vunpack.c.l.b16 %v305
    %v1195 = vunpack.c.h.b16 %v305
    %v1196 = vunpack.c.l.b16 %v306
    %v1197 = vunpack.c.l.b16 %v307
    %v1198 = vunpack.c.h.b16 %v307
    %v1199 = vunpack.c.l.b16 %v308
    %v1200 = vunpack.c.l.b16 %v309
    %v1201 = vunpack.c.h.b16 %v309
    %v1202 = vunpack.c.l.b16 %v310
    %v1203 = vunpack.c.l.b16 %v311
    %v1204 = vunpack.c.h.b16 %v311
    %v1205 = vunpack.c.l.b16 %v312
    %v1206 = vunpack.c.l.b16 %v313
    %v1207 = vunpack.c.h.b16 %v313
    %v1208 = vunpack.c.l.b16 %v314
    %v1209 = vunpack.c.l.b16 %v315
    %v1210 = vunpack.c.h.b16 %v315
    %v1211 = vunpack.c.l.b16 %v316
    %v1212 = vunpack.c.l.b16 %v317
    %v1213 = vunpack.c.h.b16 %v317
    %v1214 = vunpack.c.l.b16 %v318
    %v1215 = vunpack.c.l.b16 %v319
    %v1216 = vunpack.c.h.b16 %v319
    %v1217 = vunpack.c.l.b16 %v320
    %v1218 = vunpack.c.l.b16 %v321
    %v1219 = vunpack.c.h.b16 %v321
    %v1220 = vunpack.c.l.b16 %v322
    %v1221 = vunpack.c.l.b16 %v323
    %v1222 = vunpack.c.h.b16 %v323
    %v1223 = vunpack.c.l.b16 %v324
    %v1224 = vunpack.c.l.b16 %v325
    %v1225 = vunpack.c.h.b16 %v325
    %v1226 = vunpack.c.l.b16 %v326
    %v1227 = vunpack.c.l.b16 %v327
    %v1228 = vunpack.c.h.b16 %v327
    %v1229 = vunpack.c.l.b16 %v328
    %v1230 = vunpack.c.l.b16 %v329
    %v1231 = vunpack.c.h.b16 %v329
    %v1232 = vunpack.c.l.b16 %v330
    %v1233 = vunpack.c.l.b16 %v331
    %v1234 = vunpack.c.h.b16 %v331
    %v1235 = vunpack.c.l.b16 %v332
    %v1236 = vunpack.c.l.b16 %v333
    %v1237 = vunpack.c.h.b16 %v333
    %v1238 = vunpack.c.l.b16 %v334
    %v1239 = vunpack.c.l.b16 %v335
    %v1240 = vunpack.c.h.b16 %v335
    %v1241 = vunpack.c.l.b16 %v336
    %v1242 = vunpack.c.l.b16 %v337
    %v1243 = vunpack.c.h.b16 %v337
    %v1244 = vunpack.c.l.b16 %v338
    %v1245 = vunpack.c.l.b16 %v339
    %v1246 = vunpack.c.h.b16 %v339
    %v1247 = vunpack.c.l.b16 %v340
    %v1248 = vunpack.c.l.b16 %v341
    %v1249 = vunpack.c.h.b16 %v341
    %v1250 = vunpack.c.l.b16 %v342
    %v1251 = vunpack.c.l.b16 %v343
    %v1252 = vunpack.c.h.b16 %v343
    %v1253 = vunpack.c.l.b16 %v344
    %v1254 = vunpack.c.l.b16 %v345
    %v1255 = vunpack.c.h.b16 %v345
    %v1256 = vunpack.c.l.b16 %v346
    %v1257 = vunpack.c.l.b16 %v347
    %v1258 = vunpack.c.h.b16 %v347
    %v1259 = vunpack.c.l.b16 %v348
    %v1260 = vunpack.c.l.b16 %v349
    %v1261 = vunpack.c.h.b16 %v349
    %v1262 = vunpack.c.l.b16 %v350
    %v1263 = vunpack.c.l.b16 %v351
    %v1264 = vunpack.c.h.b16 %v351
    %v1265 = vunpack.c.l.b16 %v352
    %v1266 = vunpack.c.l.b16 %v353
    %v1267 = vunpack.c.h.b16 %v353
    %v1268 = vunpack.c.l.b16 %v354
    %v1269 = vunpack.c.l.b16 %v355
    %v1270 = vunpack.c.h.b16 %v355
    %v1271 = vunpack.c.l.b16 %v356
    %v1272 = vunpack.c.l.b16 %v357
    %v1273 = vunpack.c.h.b16 %v357
    %v1274 = vunpack.c.l.b16 %v358
    %v1275 = vunpack.c.l.b16 %v359
    %v1276 = vunpack.c.h.b16 %v359
    %v1277 = vunpack.c.l.b16 %v360
    %v1278 = vunpack.c.l.b16 %v361
    %v1279 = vunpack.c.h.b16 %v361
    %v1280 = vunpack.c.l.b16 %v362
    %v1281 = vunpack.c.l.b16 %v363
    %v1282 = vunpack.c.h.b16 %v363
    %v1283 = vunpack.c.l.b16 %v364
    %v1284 = vunpack.c.l.b16 %v365
    %v1285 = vunpack.c.h.b16 %v365
    %v1286 = vunpack.c.l.b16 %v366
    %v1287 = vunpack.c.l.b16 %v367
    %v1288 = vunpack.c.h.b16 %v367
    %v1289 = vunpack.c.l.b16 %v368
    %v1290 = vunpack.c.l.b16 %v369
    %v1291 = vunpack.c.h.b16 %v369
    %v1292 = vunpack.c.l.b16 %v370
    %v1293 = vunpack.c.l.b16 %v371
    %v1294 = vunpack.c.h.b16 %v371
    %v1295 = vunpack.c.l.b16 %v372
    %v1296 = vunpack.c.l.b16 %v373
    %v1297 = vunpack.c.h.b16 %v373
    %v1298 = vunpack.c.l.b16 %v374
    %v1299 = vunpack.c.l.b16 %v375
    %v1300 = vunpack.c.h.b16 %v375
    %v1301 = vunpack.c.l.b16 %v376
    %v1302 = vunpack.c.l.b16 %v377
    %v1303 = vunpack.c.h.b16 %v377
    %v1304 = vunpack.c.l.b16 %v378
    %v1305 = vunpack.c.l.b16 %v379
    %v1306 = vunpack.c.h.b16 %v379
    %v1307 = vunpack.c.l.b16 %v380
    %v1308 = vunpack.c.l.b16 %v381
    %v1309 = vunpack.c.h.b16 %v381
    %v1310 = vunpack.c.l.b16 %v382
    %v1311 = vunpack.c.l.b16 %v383
    %v1312 = vunpack.c.h.b16 %v383
    %v1313 = vunpack.c.l.b16 %v384
    %v1314 = vunpack.c.l.b16 %v385
    %v1315 = vunpack.c.h.b16 %v385
    %v1316 = vunpack.c.l.b16 %v386
    %v1317 = vunpack.c.l.b16 %v387
    %v1318 = vunpack.c.h.b16 %v387
    %v1319 = vunpack.c.l.b16 %v388
    %v1320 = vunpack.c.l.b16 %v389
    %v1321 = vunpack.c.h.b16 %v389
    %v1322 = vunpack.c.l.b16 %v390
    %v1323 = vunpack.c.l.b16 %v391
    %v1324 = vunpack.c.h.b16 %v391
    %v1325 = vunpack.c.l.b16 %v392
    %v1326 = vunpack.c.l.b16 %v393
    %v1327 = vunpack.c.h.b16 %v393
    %v1328 = vunpack.c.l.b16 %v394
    %v1329 = vunpack.c.l.b16 %v395
    %v1330 = vunpack.c.h.b16 %v395
    %v1331 = vunpack.c.l.b16 %v396
    %v1332 = vunpack.c.l.b16 %v397
    %v1333 = vunpack.c.h.b16 %v397
    %v1334 = vunpack.c.l.b16 %v398
    %v1335 = vunpack.c.l.b16 %v399
    %v1336 = vunpack.c.h.b16 %v399
    %v1337 = vunpack.c.l.b16 %v400
    %v1338 = vunpack.c.l.b16 %v401
    %v1339 = vunpack.c.h.b16 %v401
    %v1340 = vunpack.c.l.b16 %v402
    %v1341 = vunpack.c.l.b16 %v403
    %v1342 = vunpack.c.h.b16 %v403
    %v1343 = vunpack.c.l.b16 %v404
    %v1344 = vunpack.c.l.b16 %v405
    %v1345 = vunpack.c.h.b16 %v405
    %v1346 = vunpack.c.l.b16 %v406
    %v1347 = vunpack.c.l.b16 %v407
    %v1348 = vunpack.c.h.b16 %v407
    %v1349 = vunpack.c.l.b16 %v408
    %v1350 = vunpack.c.l.b16 %v409
    %v1351 = vunpack.c.h.b16 %v409
    %v1352 = vunpack.c.l.b16 %v410
    %v1353 = vunpack.c.l.b16 %v411
    %v1354 = vunpack.c.h.b16 %v411
    %v1355 = vunpack.c.l.b16 %v412
    %v1356 = vunpack.c.l.b16 %v413
    %v1357 = vunpack.c.h.b16 %v413
    %v1358 = vunpack.c.l.b16 %v414
    %v1359 = vunpack.c.l.b16 %v415
    %v1360 = vunpack.c.h.b16 %v415
    %v1361 = vunpack.c.l.b16 %v416
    %v1362 = vunpack.c.l.b16 %v417
    %v1363 = vunpack.c.h.b16 %v417
    %v1364 = vunpack.c.l.b16 %v418
    %v1365 = vunpack.c.l.b16 %v419
    %v1366 = vunpack.c.h.b16 %v419
    %v1367 = vunpack.c.l.b16 %v420
    %v1368 = vunpack.c.l.b16 %v421
    %v1369 = vunpack.c.h.b16 %v421
    %v1370 = vunpack.c.l.b16 %v422
    %v1371 = vunpack.c.l.b16 %v423
    %v1372 = vunpack.c.h.b16 %v423
    %v1373 = vunpack.c.l.b16 %v424
    %v1374 = vunpack.c.l.b16 %v425
    %v1375 = vunpack.c.h.b16 %v425
    %v1376 = vunpack.c.l.b16 %v426
    %v1377 = vunpack.c.l.b16 %v427
    %v1378 = vunpack.c.h.b16 %v427
    %v1379 = vunpack.c.l.b16 %v428
    %v1380 = vunpack.c.l.b16 %v429
    %v1381 = vunpack.c.h.b16 %v429
    %v1382 = vunpack.c.l.b16 %v430
    %v1383 = vunpack.c.l.b16 %v431
    %v1384 = vunpack.c.h.b16 %v431
    %v1385 = vunpack.c.l.b16 %v432
    %v1386 = vunpack.c.l.b16 %v433
    %v1387 = vunpack.c.h.b16 %v433
    %v1388 = vunpack.c.l.b16 %v434
    %v1389 = vunpack.c.l.b16 %v435
    %v1390 = vunpack.c.h.b16 %v435
    %v1391 = vunpack.c.l.b16 %v436
    %v1392 = vunpack.c.l.b16 %v437
    %v1393 = vunpack.c.h.b16 %v437
    %v1394 = vunpack.c.l.b16 %v438
    %v1395 = vunpack.c.l.b16 %v439
    %v1396 = vunpack.c.h.b16 %v439
    %v1397 = vunpack.c.l.b16 %v440
    %v1398 = vunpack.c.l.b16 %v441
    %v1399 = vunpack.c.h.b16 %v441
    %v1400 = vunpack.c.l.b16 %v442
    %v1401 = vunpack.c.l.b16 %v443
    %v1402 = vunpack.c.h.b16 %v443
    %v1403 = vunpack.c.l.b16 %v444
    %v1404 = vunpack.c.l.b16 %v445
    %v1405 = vunpack.c.h.b16 %v445
    %v1406 = vunpack.c.l.b16 %v446
    %v1407 = vunpack.c.l.b16 %v447
    %v1408 = vunpack.c.h.b16 %v447
    %v1409 = vunpack.c.l.b16 %v448
    %v1410 = vunpack.c.l.b16 %v449
    %v1411 = vunpack.c.h.b16 %v449
    %v1412 = vunpack.c.l.b16 %v450
    %v1413 = vunpack.c.l.b16 %v451
    %v1414 = vunpack.c.h.b16 %v451
    %v1415 = vunpack.c.l.b16 %v452
    %v1416 = vunpack.c.l.b16 %v453
    %v1417 = vunpack.c.h.b16 %v453
    %v1418 = vunpack.c.l.b16 %v454
    %v1419 = vunpack.c.l.b16 %v455
    %v1420 = vunpack.c.h.b16 %v455
    %v1421 = vunpack.c.l.b16 %v456
    %v1422 = vunpack.c.l.b16 %v457
    %v1423 = vunpack.c.h.b16 %v457
    %v1424 = vunpack.c.l.b16 %v458
    %v1425 = vunpack.c.l.b16 %v459
    %v1426 = vunpack.c.h.b16 %v459
    %v1427 = vunpack.c.l.b16 %v460
    %v1428 = vunpack.c.l.b16 %v461
    %v1429 = vunpack.c.h.b16 %v461
    %v1430 = vunpack.c.l.b16 %v462
    %v1431 = vunpack.c.l.b16 %v463
    %v1432 = vunpack.c.h.b16 %v463
    %v1433 = vunpack.c.l.b16 %v464
    %v1434 = vunpack.c.l.b16 %v465
    %v1435 = vunpack.c.h.b16 %v465
    %v1436 = vunpack.c.l.b16 %v466
    %v1437 = vunpack.c.l.b16 %v467
    %v1438 = vunpack.c.h.b16 %v467
    %v1439 = vunpack.c.l.b16 %v468
    %v1440 = vunpack.c.l.b16 %v469
    %v1441 = vunpack.c.h.b16 %v469
    %v1442 = vunpack.c.l.b16 %v470
    %v1443 = vunpack.c.l.b16 %v471
    %v1444 = vunpack.c.h.b16 %v471
    %v1445 = vunpack.c.l.b16 %v472
    %v1446 = vunpack.c.l.b16 %v473
    %v1447 = vunpack.c.h.b16 %v473
    %v1448 = vunpack.c.l.b16 %v474
    %v1449 = vunpack.c.l.b16 %v475
    %v1450 = vunpack.c.h.b16 %v475
    %v1451 = vunpack.c.l.b16 %v476
    %v1452 = vunpack.c.l.b16 %v477
    %v1453 = vunpack.c.h.b16 %v477
    %v1454 = vunpack.c.l.b16 %v478
    %v1455 = vpack.c.b16 %v882, %v879
    %v1456 = vpack.c.b16 %v883, %v880
    %v1457 = vpack.c.b16 %v884, %v881
    %v1458 = vpack.c.b16 %v888, %v885
    %v1459 = vpack.c.b16 %v889, %v886
    %v1460 = vpack.c.b16 %v890, %v887
    %v1461 = vpack.c.b16 %v894, %v891
    %v1462 = vpack.c.b16 %v895, %v892
    %v1463 = vpack.c.b16 %v896, %v893
    %v1464 = vpack.c.b16 %v900, %v897
    %v1465 = vpack.c.b16 %v901, %v898
    %v1466 = vpack.c.b16 %v902, %v899
    %v1467 = vpack.c.b16 %v906, %v903
    %v1468 = vpack.c.b16 %v907, %v904
    %v1469 = vpack.c.b16 %v908, %v905
    %v1470 = vpack.c.b16 %v912, %v909
    %v1471 = vpack.c.b16 %v913, %v910
    %v1472 = vpack.c.b16 %v914, %v911
    %v1473 = vpack.c.b16 %v918, %v915
    %v1474 = vpack.c.b16 %v919, %v916
    %v1475 = vpack.c.b16 %v920, %v917
    %v1476 = vpack.c.b16 %v924, %v921
    %v1477 = vpack.c.b16 %v925, %v922
    %v1478 = vpack.c.b16 %v926, %v923
    %v1479 = vpack.c.b16 %v930, %v927
    %v1480 = vpack.c.b16 %v931, %v928
    %v1481 = vpack.c.b16 %v932, %v929
    %v1482 = vpack.c.b16 %v936, %v933
    %v1483 = vpack.c.b16 %v937, %v934
    %v1484 = vpack.c.b16 %v938, %v935
    %v1485 = vpack.c.b16 %v942, %v939
    %v1486 = vpack.c.b16 %v943, %v940
    %v1487 = vpack.c.b16 %v944, %v941
    %v1488 = vpack.c.b16 %v948, %v945
    %v1489 = vpack.c.b16 %v949, %v946
    %v1490 = vpack.c.b16 %v950, %v947
    %v1491 = vpack.c.b16 %v954, %v951
    %v1492 = vpack.c.b16 %v955, %v952
    %v1493 = vpack.c.b16 %v956, %v953
    %v1494 = vpack.c.b16 %v960, %v957
    %v1495 = vpack.c.b16 %v961, %v958
    %v1496 = vpack.c.b16 %v962, %v959
    %v1497 = vpack.c.b16 %v966, %v963
    %v1498 = vpack.c.b16 %v967, %v964
    %v1499 = vpack.c.b16 %v968, %v965
    %v1500 = vpack.c.b16 %v972, %v969
    %v1501 = vpack.c.b16 %v973, %v970
    %v1502 = vpack.c.b16 %v974, %v971
    %v1503 = vpack.c.b16 %v978, %v975
    %v1504 = vpack.c.b16 %v979, %v976
    %v1505 = vpack.c.b16 %v980, %v977
    %v1506 = vpack.c.b16 %v984, %v981
    %v1507 = vpack.c.b16 %v985, %v982
    %v1508 = vpack.c.b16 %v986, %v983
    %v1509 = vpack.c.b16 %v990, %v987
    %v1510 = vpack.c.b16 %v991, %v988
    %v1511 = vpack.c.b16 %v992, %v989
    %v1512 = vpack.c.b16 %v996, %v993
    %v1513 = vpack.c.b16 %v997, %v994
    %v1514 = vpack.c.b16 %v998, %v995
    %v1515 = vpack.c.b16 %v1002, %v999
    %v1516 = vpack.c.b16 %v1003, %v1000
    %v1517 = vpack.c.b16 %v1004, %v1001
    %v1518 = vpack.c.b16 %v1008, %v1005
    %v1519 = vpack.c.b16 %v1009, %v1006
    %v1520 = vpack.c.b16 %v1010, %v1007
    %v1521 = vpack.c.b16 %v1014, %v1011
    %v1522 = vpack.c.b16 %v1015, %v1012
    %v1523 = vpack.c.b16 %v1016, %v1013
    %v1524 = vpack.c.b16 %v1020, %v1017
    %v1525 = vpack.c.b16 %v1021, %v1018
    %v1526 = vpack.c.b16 %v1022, %v1019
    %v1527 = vpack.c.b16 %v1026, %v1023
    %v1528 = vpack.c.b16 %v1027, %v1024
    %v1529 = vpack.c.b16 %v1028, %v1025
    %v1530 = vpack.c.b16 %v1032, %v1029
    %v1531 = vpack.c.b16 %v1033, %v1030
    %v1532 = vpack.c.b16 %v1034, %v1031
    %v1533 = vpack.c.b16 %v1038, %v1035
    %v1534 = vpack.c.b16 %v1039, %v1036
    %v1535 = vpack.c.b16 %v1040, %v1037
    %v1536 = vpack.c.b16 %v1044, %v1041
    %v1537 = vpack.c.b16 %v1045, %v1042
    %v1538 = vpack.c.b16 %v1046, %v1043
    %v1539 = vpack.c.b16 %v1050, %v1047
    %v1540 = vpack.c.b16 %v1051, %v1048
    %v1541 = vpack.c.b16 %v1052, %v1049
    %v1542 = vpack.c.b16 %v1056, %v1053
    %v1543 = vpack.c.b16 %v1057, %v1054
    %v1544 = vpack.c.b16 %v1058, %v1055
    %v1545 = vpack.c.b16 %v1062, %v1059
    %v1546 = vpack.c.b16 %v1063, %v1060
    %v1547 = vpack.c.b16 %v1064, %v1061
    %v1548 = vpack.c.b16 %v1068, %v1065
    %v1549 = vpack.c.b16 %v1069, %v1066
    %v1550 = vpack.c.b16 %v1070, %v1067
    %v1551 = vpack.c.b16 %v1074, %v1071
    %v1552 = vpack.c.b16 %v1075, %v1072
    %v1553 = vpack.c.b16 %v1076, %v1073
    %v1554 = vpack.c.b16 %v1080, %v1077
    %v1555 = vpack.c.b16 %v1081, %v1078
    %v1556 = vpack.c.b16 %v1082, %v1079
    %v1557 = vpack.c.b16 %v1086, %v1083
    %v1558 = vpack.c.b16 %v1087, %v1084
    %v1559 = vpack.c.b16 %v1088, %v1085
    %v1560 = vpack.c.b16 %v1092, %v1089
    %v1561 = vpack.c.b16 %v1093, %v1090
    %v1562 = vpack.c.b16 %v1094, %v1091
    %v1563 = vpack.c.b16 %v1098, %v1095
    %v1564 = vpack.c.b16 %v1099, %v1096
    %v1565 = vpack.c.b16 %v1100, %v1097
    %v1566 = vpack.c.b16 %v1104, %v1101
    %v1567 = vpack.c.b16 %v1105, %v1102
    %v1568 = vpack.c.b16 %v1106, %v1103
    %v1569 = vpack.c.b16 %v1110, %v1107
    %v1570 = vpack.c.b16 %v1111, %v1108
    %v1571 = vpack.c.b16 %v1112, %v1109
    %v1572 = vpack.c.b16 %v1116, %v1113
    %v1573 = vpack.c.b16 %v1117, %v1114
    %v1574 = vpack.c.b16 %v1118, %v1115
    %v1575 = vpack.c.b16 %v1122, %v1119
    %v1576 = vpack.c.b16 %v1123, %v1120
    %v1577 = vpack.c.b16 %v1124, %v1121
    %v1578 = vpack.c.b16 %v1128, %v1125
    %v1579 = vpack.c.b16 %v1129, %v1126
    %v1580 = vpack.c.b16 %v1130, %v1127
    %v1581 = vpack.c.b16 %v1134, %v1131
    %v1582 = vpack.c.b16 %v1135, %v1132
    %v1583 = vpack.c.b16 %v1136, %v1133
    %v1584 = vpack.c.b16 %v1140, %v1137
    %v1585 = vpack.c.b16 %v1141, %v1138
    %v1586 = vpack.c.b16 %v1142, %v1139
    %v1587 = vpack.c.b16 %v1146, %v1143
    %v1588 = vpack.c.b16 %v1147, %v1144
    %v1589 = vpack.c.b16 %v1148, %v1145
    %v1590 = vpack.c.b16 %v1152, %v1149
    %v1591 = vpack.c.b16 %v1153, %v1150
    %v1592 = vpack.c.b16 %v1154, %v1151
    %v1593 = vpack.c.b16 %v1158, %v1155
    %v1594 = vpack.c.b16 %v1159, %v1156
    %v1595 = vpack.c.b16 %v1160, %v1157
    %v1596 = vpack.c.b16 %v1164, %v1161
    %v1597 = vpack.c.b16 %v1165, %v1162
    %v1598 = vpack.c.b16 %v1166, %v1163
    %v1599 = vpack.c.b16 %v1170, %v1167
    %v1600 = vpack.c.b16 %v1171, %v1168
    %v1601 = vpack.c.b16 %v1172, %v1169
    %v1602 = vpack.c.b16 %v1176, %v1173
    %v1603 = vpack.c.b16 %v1177, %v1174
    %v1604 = vpack.c.b16 %v1178, %v1175
    %v1605 = vpack.c.b16 %v1182, %v1179
    %v1606 = vpack.c.b16 %v1183, %v1180
    %v1607 = vpack.c.b16 %v1184, %v1181
    %v1608 = vpack.c.b16 %v1188, %v1185
    %v1609 = vpack.c.b16 %v1189, %v1186
    %v1610 = vpack.c.b16 %v1190, %v1187
    %v1611 = vpack.c.b16 %v1194, %v1191
    %v1612 = vpack.c.b16 %v1195, %v1192
    %v1613 = vpack.c.b16 %v1196, %v1193
    %v1614 = vpack.c.b16 %v1200, %v1197
    %v1615 = vpack.c.b16 %v1201, %v1198
    %v1616 = vpack.c.b16 %v1202, %v1199
    %v1617 = vpack.c.b16 %v1206, %v1203
    %v1618 = vpack.c.b16 %v1207, %v1204
    %v1619 = vpack.c.b16 %v1208, %v1205
    %v1620 = vpack.c.b16 %v1212, %v1209
    %v1621 = vpack.c.b16 %v1213, %v1210
    %v1622 = vpack.c.b16 %v1214, %v1211
    %v1623 = vpack.c.b16 %v1218, %v1215
    %v1624 = vpack.c.b16 %v1219, %v1216
    %v1625 = vpack.c.b16 %v1220, %v1217
    %v1626 = vpack.c.b16 %v1224, %v1221
    %v1627 = vpack.c.b16 %v1225, %v1222
    %v1628 = vpack.c.b16 %v1226, %v1223
    %v1629 = vpack.c.b16 %v1230, %v1227
    %v1630 = vpack.c.b16 %v1231, %v1228
    %v1631 = vpack.c.b16 %v1232, %v1229
    %v1632 = vpack.c.b16 %v1236, %v1233
    %v1633 = vpack.c.b16 %v1237, %v1234
    %v1634 = vpack.c.b16 %v1238, %v1235
    %v1635 = vpack.c.b16 %v1242, %v1239
    %v1636 = vpack.c.b16 %v1243, %v1240
    %v1637 = vpack.c.b16 %v1244, %v1241
    %v1638 = vpack.c.b16 %v1248, %v1245
    %v1639 = vpack.c.b16 %v1249, %v1246
    %v1640 = vpack.c.b16 %v1250, %v1247
    %v1641 = vpack.c.b16 %v1254, %v1251
    %v1642 = vpack.c.b16 %v1255, %v1252
    %v1643 = vpack.c.b16 %v1256, %v1253
    %v1644 = vpack.c.b16 %v1260, %v1257
    %v1645 = vpack.c.b16 %v1261, %v1258
    %v1646 = vpack.c.b16 %v1262, %v1259
    %v1647 = vpack.c.b16 %v1266, %v1263
    %v1648 = vpack.c.b16 %v1267, %v1264
    %v1649 = vpack.c.b16 %v1268, %v1265
    %v1650 = vpack.c.b16 %v1272, %v1269
    %v1651 = vpack.c.b16 %v1273, %v1270
    %v1652 = vpack.c.b16 %v1274, %v1271
    %v1653 = vpack.c.b16 %v1278, %v1275
    %v1654 = vpack.c.b16 %v1279, %v1276
    %v1655 = vpack.c.b16 %v1280, %v1277
    %v1656 = vpack.c.b16 %v1284, %v1281
    %v1657 = vpack.c.b16 %v1285, %v1282
    %v1658 = vpack.c.b16 %v1286, %v1283
    %v1659 = vpack.c.b16 %v1290, %v1287
    %v1660 = vpack.c.b16 %v1291, %v1288
    %v1661 = vpack.c.b16 %v1292, %v1289
    %v1662 = vpack.c.b16 %v1296, %v1293
    %v1663 = vpack.c.b16 %v1297, %v1294
    %v1664 = vpack.c.b16 %v1298, %v1295
    %v1665 = vpack.c.b16 %v1302, %v1299
    %v1666 = vpack.c.b16 %v1303, %v1300
    %v1667 = vpack.c.b16 %v1304, %v1301
    %v1668 = vpack.c.b16 %v1308, %v1305
    %v1669 = vpack.c.b16 %v1309, %v1306
    %v1670 = vpack.c.b16 %v1310, %v1307
    %v1671 = vpack.c.b16 %v1314, %v1311
    %v1672 = vpack.c.b16 %v1315, %v1312
    %v1673 = vpack.c.b16 %v1316, %v1313
    %v1674 = vpack.c.b16 %v1320, %v1317
    %v1675 = vpack.c.b16 %v1321, %v1318
    %v1676 = vpack.c.b16 %v1322, %v1319
    %v1677 = vpack.c.b16 %v1326, %v1323
    %v1678 = vpack.c.b16 %v1327, %v1324
    %v1679 = vpack.c.b16 %v1328, %v1325
    %v1680 = vpack.c.b16 %v1332, %v1329
    %v1681 = vpack.c.b16 %v1333, %v1330
    %v1682 = vpack.c.b16 %v1334, %v1331
    %v1683 = vpack.c.b16 %v1338, %v1335
    %v1684 = vpack.c.b16 %v1339, %v1336
    %v1685 = vpack.c.b16 %v1340, %v1337
    %v1686 = vpack.c.b16 %v1344, %v1341
    %v1687 = vpack.c.b16 %v1345, %v1342
    %v1688 = vpack.c.b16 %v1346, %v1343
    %v1689 = vpack.c.b16 %v1350, %v1347
    %v1690 = vpack.c.b16 %v1351, %v1348
    %v1691 = vpack.c.b16 %v1352, %v1349
    %v1692 = vpack.c.b16 %v1356, %v1353
    %v1693 = vpack.c.b16 %v1357, %v1354
    %v1694 = vpack.c.b16 %v1358, %v1355
    %v1695 = vpack.c.b16 %v1362, %v1359
    %v1696 = vpack.c.b16 %v1363, %v1360
    %v1697 = vpack.c.b16 %v1364, %v1361
    %v1698 = vpack.c.b16 %v1368, %v1365
    %v1699 = vpack.c.b16 %v1369, %v1366
    %v1700 = vpack.c.b16 %v1370, %v1367
    %v1701 = vpack.c.b16 %v1374, %v1371
    %v1702 = vpack.c.b16 %v1375, %v1372
    %v1703 = vpack.c.b16 %v1376, %v1373
    %v1704 = vpack.c.b16 %v1380, %v1377
    %v1705 = vpack.c.b16 %v1381, %v1378
    %v1706 = vpack.c.b16 %v1382, %v1379
    %v1707 = vpack.c.b16 %v1386, %v1383
    %v1708 = vpack.c.b16 %v1387, %v1384
    %v1709 = vpack.c.b16 %v1388, %v1385
    %v1710 = vpack.c.b16 %v1392, %v1389
    %v1711 = vpack.c.b16 %v1393, %v1390
    %v1712 = vpack.c.b16 %v1394, %v1391
    %v1713 = vpack.c.b16 %v1398, %v1395
    %v1714 = vpack.c.b16 %v1399, %v1396
    %v1715 = vpack.c.b16 %v1400, %v1397
    %v1716 = vpack.c.b16 %v1404, %v1401
    %v1717 = vpack.c.b16 %v1405, %v1402
    %v1718 = vpack.c.b16 %v1406, %v1403
    %v1719 = vpack.c.b16 %v1410, %v1407
    %v1720 = vpack.c.b16 %v1411, %v1408
    %v1721 = vpack.c.b16 %v1412, %v1409
    %v1722 = vpack.c.b16 %v1416, %v1413
    %v1723 = vpack.c.b16 %v1417, %v1414
    %v1724 = vpack.c.b16 %v1418, %v1415
    %v1725 = vpack.c.b16 %v1422, %v1419
    %v1726 = vpack.c.b16 %v1423, %v1420
    %v1727 = vpack.c.b16 %v1424, %v1421
    %v1728 = vpack.c.b16 %v1428, %v1425
    %v1729 = vpack.c.b16 %v1429, %v1426
    %v1730 = vpack.c.b16 %v1430, %v1427
    %v1731 = vpack.c.b16 %v1434, %v1431
    %v1732 = vpack.c.b16 %v1435, %v1432
    %v1733 = vpack.c.b16 %v1436, %v1433
    %v1734 = vpack.c.b16 %v1440, %v1437
    %v1735 = vpack.c.b16 %v1441, %v1438
    %v1736 = vpack.c.b16 %v1442, %v1439
    %v1737 = vpack.c.b16 %v1446, %v1443
    %v1738 = vpack.c.b16 %v1447, %v1444
    %v1739 = vpack.c.b16 %v1448, %v1445
    %v1740 = vpack.c.b16 %v1452, %v1449
    %v1741 = vpack.c.b16 %v1453, %v1450
    %v1742 = vpack.c.b16 %v1454, %v1451
    %2031 = vmatpush.bf16.xpose.msra.mxu0 %v1476
    %2032 = vmatpush.bf16.xpose.msra.mxu0 %v1473
    %2033 = vmatpush.bf16.xpose.msra.mxu0 %v1470
    %2034 = vmatpush.bf16.xpose.msra.mxu0 %v1467
    %2035 = vmatpush.bf16.xpose.msra.mxu0 %v1464
    %2036 = vmatpush.bf16.xpose.msra.mxu0 %v1461
    %2037 = vmatpush.bf16.xpose.msra.mxu0 %v1458
    %2038 = vmatpush.bf16.xpose.msra.mxu0 %v1455
    %2039 = vmatmul.bf16.gmra.mxu0 %v489
    %v2040 = vpop.f32.mrf.mxu0
    %v2041 = vadd.f32 0.0, %v2040
    %v2042 = vpop.f32.mrf.mxu0
    %v2043 = vadd.f32 0.0, %v2042
    %2044 = vdwg.mxu0
    %2045 = vmatpush.bf16.xpose.msra.mxu0 %v1477
    %2046 = vmatpush.bf16.xpose.msra.mxu0 %v1474
    %2047 = vmatpush.bf16.xpose.msra.mxu0 %v1471
    %2048 = vmatpush.bf16.xpose.msra.mxu0 %v1468
    %2049 = vmatpush.bf16.xpose.msra.mxu0 %v1465
    %2050 = vmatpush.bf16.xpose.msra.mxu0 %v1462
    %2051 = vmatpush.bf16.xpose.msra.mxu0 %v1459
    %2052 = vmatpush.bf16.xpose.msra.mxu0 %v1456
    %2053 = vmatmul.bf16.gmra.mxu0 %v490
    %v2054 = vpop.f32.mrf.mxu0
    %v2055 = vadd.f32 %v2041, %v2054
    %v2056 = vpop.f32.mrf.mxu0
    %v2057 = vadd.f32 %v2043, %v2056
    %2058 = vdwg.mxu0
    %2059 = vmatpush.bf16.xpose.msra.mxu0 %v1478
    %2060 = vmatpush.bf16.xpose.msra.mxu0 %v1475
    %2061 = vmatpush.bf16.xpose.msra.mxu0 %v1472
    %2062 = vmatpush.bf16.xpose.msra.mxu0 %v1469
    %2063 = vmatpush.bf16.xpose.msra.mxu0 %v1466
    %2064 = vmatpush.bf16.xpose.msra.mxu0 %v1463
    %2065 = vmatpush.bf16.xpose.msra.mxu0 %v1460
    %2066 = vmatpush.bf16.xpose.msra.mxu0 %v1457
    %2067 = vmatmul.bf16.gmra.mxu0 %v491
    %v2068 = vpop.f32.mrf.mxu0
    %v2069 = vadd.f32 %v2055, %v2068
    %v2070 = vpop.f32.mrf.mxu0
    %v2071 = vadd.f32 %v2057, %v2070
    %2072 = vdwg.mxu0
    %2073 = vmatpush.bf16.xpose.msra.mxu0 %v1500
    %2074 = vmatpush.bf16.xpose.msra.mxu0 %v1497
    %2075 = vmatpush.bf16.xpose.msra.mxu0 %v1494
    %2076 = vmatpush.bf16.xpose.msra.mxu0 %v1491
    %2077 = vmatpush.bf16.xpose.msra.mxu0 %v1488
    %2078 = vmatpush.bf16.xpose.msra.mxu0 %v1485
    %2079 = vmatpush.bf16.xpose.msra.mxu0 %v1482
    %2080 = vmatpush.bf16.xpose.msra.mxu0 %v1479
    %2081 = vmatmul.bf16.gmra.mxu0 %v489
    %v2082 = vpop.f32.mrf.mxu0
    %v2083 = vadd.f32 0.0, %v2082
    %v2084 = vpop.f32.mrf.mxu0
    %v2085 = vadd.f32 0.0, %v2084
    %2086 = vdwg.mxu0
    %2087 = vmatpush.bf16.xpose.msra.mxu0 %v1501
    %2088 = vmatpush.bf16.xpose.msra.mxu0 %v1498
    %2089 = vmatpush.bf16.xpose.msra.mxu0 %v1495
    %2090 = vmatpush.bf16.xpose.msra.mxu0 %v1492
    %2091 = vmatpush.bf16.xpose.msra.mxu0 %v1489
    %2092 = vmatpush.bf16.xpose.msra.mxu0 %v1486
    %2093 = vmatpush.bf16.xpose.msra.mxu0 %v1483
    %2094 = vmatpush.bf16.xpose.msra.mxu0 %v1480
    %2095 = vmatmul.bf16.gmra.mxu0 %v490
    %v2096 = vpop.f32.mrf.mxu0
    %v2097 = vadd.f32 %v2083, %v2096
    %v2098 = vpop.f32.mrf.mxu0
    %v2099 = vadd.f32 %v2085, %v2098
    %2100 = vdwg.mxu0
    %2101 = vmatpush.bf16.xpose.msra.mxu0 %v1502
    %2102 = vmatpush.bf16.xpose.msra.mxu0 %v1499
    %2103 = vmatpush.bf16.xpose.msra.mxu0 %v1496
    %2104 = vmatpush.bf16.xpose.msra.mxu0 %v1493
    %2105 = vmatpush.bf16.xpose.msra.mxu0 %v1490
    %2106 = vmatpush.bf16.xpose.msra.mxu0 %v1487
    %2107 = vmatpush.bf16.xpose.msra.mxu0 %v1484
    %2108 = vmatpush.bf16.xpose.msra.mxu0 %v1481
    %2109 = vmatmul.bf16.gmra.mxu0 %v491
    %v2110 = vpop.f32.mrf.mxu0
    %v2111 = vadd.f32 %v2097, %v2110
    %v2112 = vpop.f32.mrf.mxu0
    %v2113 = vadd.f32 %v2099, %v2112
    %2114 = vdwg.mxu0
    %2115 = vmatpush.bf16.xpose.msra.mxu0 %v1524
    %2116 = vmatpush.bf16.xpose.msra.mxu0 %v1521
    %2117 = vmatpush.bf16.xpose.msra.mxu0 %v1518
    %2118 = vmatpush.bf16.xpose.msra.mxu0 %v1515
    %2119 = vmatpush.bf16.xpose.msra.mxu0 %v1512
    %2120 = vmatpush.bf16.xpose.msra.mxu0 %v1509
    %2121 = vmatpush.bf16.xpose.msra.mxu0 %v1506
    %2122 = vmatpush.bf16.xpose.msra.mxu0 %v1503
    %2123 = vmatmul.bf16.gmra.mxu0 %v489
    %v2124 = vpop.f32.mrf.mxu0
    %v2125 = vadd.f32 0.0, %v2124
    %v2126 = vpop.f32.mrf.mxu0
    %v2127 = vadd.f32 0.0, %v2126
    %2128 = vdwg.mxu0
    %2129 = vmatpush.bf16.xpose.msra.mxu0 %v1525
    %2130 = vmatpush.bf16.xpose.msra.mxu0 %v1522
    %2131 = vmatpush.bf16.xpose.msra.mxu0 %v1519
    %2132 = vmatpush.bf16.xpose.msra.mxu0 %v1516
    %2133 = vmatpush.bf16.xpose.msra.mxu0 %v1513
    %2134 = vmatpush.bf16.xpose.msra.mxu0 %v1510
    %2135 = vmatpush.bf16.xpose.msra.mxu0 %v1507
    %2136 = vmatpush.bf16.xpose.msra.mxu0 %v1504
    %2137 = vmatmul.bf16.gmra.mxu0 %v490
    %v2138 = vpop.f32.mrf.mxu0
    %v2139 = vadd.f32 %v2125, %v2138
    %v2140 = vpop.f32.mrf.mxu0
    %v2141 = vadd.f32 %v2127, %v2140
    %2142 = vdwg.mxu0
    %2143 = vmatpush.bf16.xpose.msra.mxu0 %v1526
    %2144 = vmatpush.bf16.xpose.msra.mxu0 %v1523
    %2145 = vmatpush.bf16.xpose.msra.mxu0 %v1520
    %2146 = vmatpush.bf16.xpose.msra.mxu0 %v1517
    %2147 = vmatpush.bf16.xpose.msra.mxu0 %v1514
    %2148 = vmatpush.bf16.xpose.msra.mxu0 %v1511
    %2149 = vmatpush.bf16.xpose.msra.mxu0 %v1508
    %2150 = vmatpush.bf16.xpose.msra.mxu0 %v1505
    %2151 = vmatmul.bf16.gmra.mxu0 %v491
    %v2152 = vpop.f32.mrf.mxu0
    %v2153 = vadd.f32 %v2139, %v2152
    %v2154 = vpop.f32.mrf.mxu0
    %v2155 = vadd.f32 %v2141, %v2154
    %2156 = vdwg.mxu0
    %2157 = vmatpush.bf16.xpose.msra.mxu0 %v1548
    %2158 = vmatpush.bf16.xpose.msra.mxu0 %v1545
    %2159 = vmatpush.bf16.xpose.msra.mxu0 %v1542
    %2160 = vmatpush.bf16.xpose.msra.mxu0 %v1539
    %2161 = vmatpush.bf16.xpose.msra.mxu0 %v1536
    %2162 = vmatpush.bf16.xpose.msra.mxu0 %v1533
    %2163 = vmatpush.bf16.xpose.msra.mxu0 %v1530
    %2164 = vmatpush.bf16.xpose.msra.mxu0 %v1527
    %2165 = vmatmul.bf16.gmra.mxu0 %v489
    %v2166 = vpop.f32.mrf.mxu0
    %v2167 = vadd.f32 0.0, %v2166
    %v2168 = vpop.f32.mrf.mxu0
    %v2169 = vadd.f32 0.0, %v2168
    %2170 = vdwg.mxu0
    %2171 = vmatpush.bf16.xpose.msra.mxu0 %v1549
    %2172 = vmatpush.bf16.xpose.msra.mxu0 %v1546
    %2173 = vmatpush.bf16.xpose.msra.mxu0 %v1543
    %2174 = vmatpush.bf16.xpose.msra.mxu0 %v1540
    %2175 = vmatpush.bf16.xpose.msra.mxu0 %v1537
    %2176 = vmatpush.bf16.xpose.msra.mxu0 %v1534
    %2177 = vmatpush.bf16.xpose.msra.mxu0 %v1531
    %2178 = vmatpush.bf16.xpose.msra.mxu0 %v1528
    %2179 = vmatmul.bf16.gmra.mxu0 %v490
    %v2180 = vpop.f32.mrf.mxu0
    %v2181 = vadd.f32 %v2167, %v2180
    %v2182 = vpop.f32.mrf.mxu0
    %v2183 = vadd.f32 %v2169, %v2182
    %2184 = vdwg.mxu0
    %2185 = vmatpush.bf16.xpose.msra.mxu0 %v1550
    %2186 = vmatpush.bf16.xpose.msra.mxu0 %v1547
    %2187 = vmatpush.bf16.xpose.msra.mxu0 %v1544
    %2188 = vmatpush.bf16.xpose.msra.mxu0 %v1541
    %2189 = vmatpush.bf16.xpose.msra.mxu0 %v1538
    %2190 = vmatpush.bf16.xpose.msra.mxu0 %v1535
    %2191 = vmatpush.bf16.xpose.msra.mxu0 %v1532
    %2192 = vmatpush.bf16.xpose.msra.mxu0 %v1529
    %2193 = vmatmul.bf16.gmra.mxu0 %v491
    %v2194 = vpop.f32.mrf.mxu0
    %v2195 = vadd.f32 %v2181, %v2194
    %v2196 = vpop.f32.mrf.mxu0
    %v2197 = vadd.f32 %v2183, %v2196
    %2198 = vdwg.mxu0
    %2199 = vmatpush.bf16.xpose.msra.mxu0 %v1572
    %2200 = vmatpush.bf16.xpose.msra.mxu0 %v1569
    %2201 = vmatpush.bf16.xpose.msra.mxu0 %v1566
    %2202 = vmatpush.bf16.xpose.msra.mxu0 %v1563
    %2203 = vmatpush.bf16.xpose.msra.mxu0 %v1560
    %2204 = vmatpush.bf16.xpose.msra.mxu0 %v1557
    %2205 = vmatpush.bf16.xpose.msra.mxu0 %v1554
    %2206 = vmatpush.bf16.xpose.msra.mxu0 %v1551
    %2207 = vmatmul.bf16.gmra.mxu0 %v489
    %v2208 = vpop.f32.mrf.mxu0
    %v2209 = vadd.f32 0.0, %v2208
    %v2210 = vpop.f32.mrf.mxu0
    %v2211 = vadd.f32 0.0, %v2210
    %2212 = vdwg.mxu0
    %2213 = vmatpush.bf16.xpose.msra.mxu0 %v1573
    %2214 = vmatpush.bf16.xpose.msra.mxu0 %v1570
    %2215 = vmatpush.bf16.xpose.msra.mxu0 %v1567
    %2216 = vmatpush.bf16.xpose.msra.mxu0 %v1564
    %2217 = vmatpush.bf16.xpose.msra.mxu0 %v1561
    %2218 = vmatpush.bf16.xpose.msra.mxu0 %v1558
    %2219 = vmatpush.bf16.xpose.msra.mxu0 %v1555
    %2220 = vmatpush.bf16.xpose.msra.mxu0 %v1552
    %2221 = vmatmul.bf16.gmra.mxu0 %v490
    %v2222 = vpop.f32.mrf.mxu0
    %v2223 = vadd.f32 %v2209, %v2222
    %v2224 = vpop.f32.mrf.mxu0
    %v2225 = vadd.f32 %v2211, %v2224
    %2226 = vdwg.mxu0
    %2227 = vmatpush.bf16.xpose.msra.mxu0 %v1574
    %2228 = vmatpush.bf16.xpose.msra.mxu0 %v1571
    %2229 = vmatpush.bf16.xpose.msra.mxu0 %v1568
    %2230 = vmatpush.bf16.xpose.msra.mxu0 %v1565
    %2231 = vmatpush.bf16.xpose.msra.mxu0 %v1562
    %2232 = vmatpush.bf16.xpose.msra.mxu0 %v1559
    %2233 = vmatpush.bf16.xpose.msra.mxu0 %v1556
    %2234 = vmatpush.bf16.xpose.msra.mxu0 %v1553
    %2235 = vmatmul.bf16.gmra.mxu0 %v491
    %v2236 = vpop.f32.mrf.mxu0
    %v2237 = vadd.f32 %v2223, %v2236
    %v2238 = vpop.f32.mrf.mxu0
    %v2239 = vadd.f32 %v2225, %v2238
    %2240 = vdwg.mxu0
    %2241 = vmatpush.bf16.xpose.msra.mxu0 %v1596
    %2242 = vmatpush.bf16.xpose.msra.mxu0 %v1593
    %2243 = vmatpush.bf16.xpose.msra.mxu0 %v1590
    %2244 = vmatpush.bf16.xpose.msra.mxu0 %v1587
    %2245 = vmatpush.bf16.xpose.msra.mxu0 %v1584
    %2246 = vmatpush.bf16.xpose.msra.mxu0 %v1581
    %2247 = vmatpush.bf16.xpose.msra.mxu0 %v1578
    %2248 = vmatpush.bf16.xpose.msra.mxu0 %v1575
    %2249 = vmatmul.bf16.gmra.mxu0 %v489
    %v2250 = vpop.f32.mrf.mxu0
    %v2251 = vadd.f32 0.0, %v2250
    %v2252 = vpop.f32.mrf.mxu0
    %v2253 = vadd.f32 0.0, %v2252
    %2254 = vdwg.mxu0
    %2255 = vmatpush.bf16.xpose.msra.mxu0 %v1597
    %2256 = vmatpush.bf16.xpose.msra.mxu0 %v1594
    %2257 = vmatpush.bf16.xpose.msra.mxu0 %v1591
    %2258 = vmatpush.bf16.xpose.msra.mxu0 %v1588
    %2259 = vmatpush.bf16.xpose.msra.mxu0 %v1585
    %2260 = vmatpush.bf16.xpose.msra.mxu0 %v1582
    %2261 = vmatpush.bf16.xpose.msra.mxu0 %v1579
    %2262 = vmatpush.bf16.xpose.msra.mxu0 %v1576
    %2263 = vmatmul.bf16.gmra.mxu0 %v490
    %v2264 = vpop.f32.mrf.mxu0
    %v2265 = vadd.f32 %v2251, %v2264
    %v2266 = vpop.f32.mrf.mxu0
    %v2267 = vadd.f32 %v2253, %v2266
    %2268 = vdwg.mxu0
    %2269 = vmatpush.bf16.xpose.msra.mxu0 %v1598
    %2270 = vmatpush.bf16.xpose.msra.mxu0 %v1595
    %2271 = vmatpush.bf16.xpose.msra.mxu0 %v1592
    %2272 = vmatpush.bf16.xpose.msra.mxu0 %v1589
    %2273 = vmatpush.bf16.xpose.msra.mxu0 %v1586
    %2274 = vmatpush.bf16.xpose.msra.mxu0 %v1583
    %2275 = vmatpush.bf16.xpose.msra.mxu0 %v1580
    %2276 = vmatpush.bf16.xpose.msra.mxu0 %v1577
    %2277 = vmatmul.bf16.gmra.mxu0 %v491
    %v2278 = vpop.f32.mrf.mxu0
    %v2279 = vadd.f32 %v2265, %v2278
    %v2280 = vpop.f32.mrf.mxu0
    %v2281 = vadd.f32 %v2267, %v2280
    %2282 = vdwg.mxu0
    %2283 = vmatpush.bf16.xpose.msra.mxu0 %v1620
    %2284 = vmatpush.bf16.xpose.msra.mxu0 %v1617
    %2285 = vmatpush.bf16.xpose.msra.mxu0 %v1614
    %2286 = vmatpush.bf16.xpose.msra.mxu0 %v1611
    %2287 = vmatpush.bf16.xpose.msra.mxu0 %v1608
    %2288 = vmatpush.bf16.xpose.msra.mxu0 %v1605
    %2289 = vmatpush.bf16.xpose.msra.mxu0 %v1602
    %2290 = vmatpush.bf16.xpose.msra.mxu0 %v1599
    %2291 = vmatmul.bf16.gmra.mxu0 %v489
    %v2292 = vpop.f32.mrf.mxu0
    %v2293 = vadd.f32 0.0, %v2292
    %v2294 = vpop.f32.mrf.mxu0
    %v2295 = vadd.f32 0.0, %v2294
    %2296 = vdwg.mxu0
    %2297 = vmatpush.bf16.xpose.msra.mxu0 %v1621
    %2298 = vmatpush.bf16.xpose.msra.mxu0 %v1618
    %2299 = vmatpush.bf16.xpose.msra.mxu0 %v1615
    %2300 = vmatpush.bf16.xpose.msra.mxu0 %v1612
    %2301 = vmatpush.bf16.xpose.msra.mxu0 %v1609
    %2302 = vmatpush.bf16.xpose.msra.mxu0 %v1606
    %2303 = vmatpush.bf16.xpose.msra.mxu0 %v1603
    %2304 = vmatpush.bf16.xpose.msra.mxu0 %v1600
    %2305 = vmatmul.bf16.gmra.mxu0 %v490
    %v2306 = vpop.f32.mrf.mxu0
    %v2307 = vadd.f32 %v2293, %v2306
    %v2308 = vpop.f32.mrf.mxu0
    %v2309 = vadd.f32 %v2295, %v2308
    %2310 = vdwg.mxu0
    %2311 = vmatpush.bf16.xpose.msra.mxu0 %v1622
    %2312 = vmatpush.bf16.xpose.msra.mxu0 %v1619
    %2313 = vmatpush.bf16.xpose.msra.mxu0 %v1616
    %2314 = vmatpush.bf16.xpose.msra.mxu0 %v1613
    %2315 = vmatpush.bf16.xpose.msra.mxu0 %v1610
    %2316 = vmatpush.bf16.xpose.msra.mxu0 %v1607
    %2317 = vmatpush.bf16.xpose.msra.mxu0 %v1604
    %2318 = vmatpush.bf16.xpose.msra.mxu0 %v1601
    %2319 = vmatmul.bf16.gmra.mxu0 %v491
    %v2320 = vpop.f32.mrf.mxu0
    %v2321 = vadd.f32 %v2307, %v2320
    %v2322 = vpop.f32.mrf.mxu0
    %v2323 = vadd.f32 %v2309, %v2322
    %2324 = vdwg.mxu0
    %2325 = vmatpush.bf16.xpose.msra.mxu0 %v1644
    %2326 = vmatpush.bf16.xpose.msra.mxu0 %v1641
    %2327 = vmatpush.bf16.xpose.msra.mxu0 %v1638
    %2328 = vmatpush.bf16.xpose.msra.mxu0 %v1635
    %2329 = vmatpush.bf16.xpose.msra.mxu0 %v1632
    %2330 = vmatpush.bf16.xpose.msra.mxu0 %v1629
    %2331 = vmatpush.bf16.xpose.msra.mxu0 %v1626
    %2332 = vmatpush.bf16.xpose.msra.mxu0 %v1623
    %2333 = vmatmul.bf16.gmra.mxu0 %v489
    %v2334 = vpop.f32.mrf.mxu0
    %v2335 = vadd.f32 0.0, %v2334
    %v2336 = vpop.f32.mrf.mxu0
    %v2337 = vadd.f32 0.0, %v2336
    %2338 = vdwg.mxu0
    %2339 = vmatpush.bf16.xpose.msra.mxu0 %v1645
    %2340 = vmatpush.bf16.xpose.msra.mxu0 %v1642
    %2341 = vmatpush.bf16.xpose.msra.mxu0 %v1639
    %2342 = vmatpush.bf16.xpose.msra.mxu0 %v1636
    %2343 = vmatpush.bf16.xpose.msra.mxu0 %v1633
    %2344 = vmatpush.bf16.xpose.msra.mxu0 %v1630
    %2345 = vmatpush.bf16.xpose.msra.mxu0 %v1627
    %2346 = vmatpush.bf16.xpose.msra.mxu0 %v1624
    %2347 = vmatmul.bf16.gmra.mxu0 %v490
    %v2348 = vpop.f32.mrf.mxu0
    %v2349 = vadd.f32 %v2335, %v2348
    %v2350 = vpop.f32.mrf.mxu0
    %v2351 = vadd.f32 %v2337, %v2350
    %2352 = vdwg.mxu0
    %2353 = vmatpush.bf16.xpose.msra.mxu0 %v1646
    %2354 = vmatpush.bf16.xpose.msra.mxu0 %v1643
    %2355 = vmatpush.bf16.xpose.msra.mxu0 %v1640
    %2356 = vmatpush.bf16.xpose.msra.mxu0 %v1637
    %2357 = vmatpush.bf16.xpose.msra.mxu0 %v1634
    %2358 = vmatpush.bf16.xpose.msra.mxu0 %v1631
    %2359 = vmatpush.bf16.xpose.msra.mxu0 %v1628
    %2360 = vmatpush.bf16.xpose.msra.mxu0 %v1625
    %2361 = vmatmul.bf16.gmra.mxu0 %v491
    %v2362 = vpop.f32.mrf.mxu0
    %v2363 = vadd.f32 %v2349, %v2362
    %v2364 = vpop.f32.mrf.mxu0
    %v2365 = vadd.f32 %v2351, %v2364
    %2366 = vdwg.mxu0
    %2367 = vmatpush.bf16.xpose.msra.mxu0 %v1668
    %2368 = vmatpush.bf16.xpose.msra.mxu0 %v1665
    %2369 = vmatpush.bf16.xpose.msra.mxu0 %v1662
    %2370 = vmatpush.bf16.xpose.msra.mxu0 %v1659
    %2371 = vmatpush.bf16.xpose.msra.mxu0 %v1656
    %2372 = vmatpush.bf16.xpose.msra.mxu0 %v1653
    %2373 = vmatpush.bf16.xpose.msra.mxu0 %v1650
    %2374 = vmatpush.bf16.xpose.msra.mxu0 %v1647
    %2375 = vmatmul.bf16.gmra.mxu0 %v489
    %v2376 = vpop.f32.mrf.mxu0
    %v2377 = vadd.f32 0.0, %v2376
    %v2378 = vpop.f32.mrf.mxu0
    %v2379 = vadd.f32 0.0, %v2378
    %2380 = vdwg.mxu0
    %2381 = vmatpush.bf16.xpose.msra.mxu0 %v1669
    %2382 = vmatpush.bf16.xpose.msra.mxu0 %v1666
    %2383 = vmatpush.bf16.xpose.msra.mxu0 %v1663
    %2384 = vmatpush.bf16.xpose.msra.mxu0 %v1660
    %2385 = vmatpush.bf16.xpose.msra.mxu0 %v1657
    %2386 = vmatpush.bf16.xpose.msra.mxu0 %v1654
    %2387 = vmatpush.bf16.xpose.msra.mxu0 %v1651
    %2388 = vmatpush.bf16.xpose.msra.mxu0 %v1648
    %2389 = vmatmul.bf16.gmra.mxu0 %v490
    %v2390 = vpop.f32.mrf.mxu0
    %v2391 = vadd.f32 %v2377, %v2390
    %v2392 = vpop.f32.mrf.mxu0
    %v2393 = vadd.f32 %v2379, %v2392
    %2394 = vdwg.mxu0
    %2395 = vmatpush.bf16.xpose.msra.mxu0 %v1670
    %2396 = vmatpush.bf16.xpose.msra.mxu0 %v1667
    %2397 = vmatpush.bf16.xpose.msra.mxu0 %v1664
    %2398 = vmatpush.bf16.xpose.msra.mxu0 %v1661
    %2399 = vmatpush.bf16.xpose.msra.mxu0 %v1658
    %2400 = vmatpush.bf16.xpose.msra.mxu0 %v1655
    %2401 = vmatpush.bf16.xpose.msra.mxu0 %v1652
    %2402 = vmatpush.bf16.xpose.msra.mxu0 %v1649
    %2403 = vmatmul.bf16.gmra.mxu0 %v491
    %v2404 = vpop.f32.mrf.mxu0
    %v2405 = vadd.f32 %v2391, %v2404
    %v2406 = vpop.f32.mrf.mxu0
    %v2407 = vadd.f32 %v2393, %v2406
    %2408 = vdwg.mxu0
    %2409 = vmatpush.bf16.xpose.msra.mxu0 %v1692
    %2410 = vmatpush.bf16.xpose.msra.mxu0 %v1689
    %2411 = vmatpush.bf16.xpose.msra.mxu0 %v1686
    %2412 = vmatpush.bf16.xpose.msra.mxu0 %v1683
    %2413 = vmatpush.bf16.xpose.msra.mxu0 %v1680
    %2414 = vmatpush.bf16.xpose.msra.mxu0 %v1677
    %2415 = vmatpush.bf16.xpose.msra.mxu0 %v1674
    %2416 = vmatpush.bf16.xpose.msra.mxu0 %v1671
    %2417 = vmatmul.bf16.gmra.mxu0 %v489
    %v2418 = vpop.f32.mrf.mxu0
    %v2419 = vadd.f32 0.0, %v2418
    %v2420 = vpop.f32.mrf.mxu0
    %v2421 = vadd.f32 0.0, %v2420
    %2422 = vdwg.mxu0
    %2423 = vmatpush.bf16.xpose.msra.mxu0 %v1693
    %2424 = vmatpush.bf16.xpose.msra.mxu0 %v1690
    %2425 = vmatpush.bf16.xpose.msra.mxu0 %v1687
    %2426 = vmatpush.bf16.xpose.msra.mxu0 %v1684
    %2427 = vmatpush.bf16.xpose.msra.mxu0 %v1681
    %2428 = vmatpush.bf16.xpose.msra.mxu0 %v1678
    %2429 = vmatpush.bf16.xpose.msra.mxu0 %v1675
    %2430 = vmatpush.bf16.xpose.msra.mxu0 %v1672
    %2431 = vmatmul.bf16.gmra.mxu0 %v490
    %v2432 = vpop.f32.mrf.mxu0
    %v2433 = vadd.f32 %v2419, %v2432
    %v2434 = vpop.f32.mrf.mxu0
    %v2435 = vadd.f32 %v2421, %v2434
    %2436 = vdwg.mxu0
    %2437 = vmatpush.bf16.xpose.msra.mxu0 %v1694
    %2438 = vmatpush.bf16.xpose.msra.mxu0 %v1691
    %2439 = vmatpush.bf16.xpose.msra.mxu0 %v1688
    %2440 = vmatpush.bf16.xpose.msra.mxu0 %v1685
    %2441 = vmatpush.bf16.xpose.msra.mxu0 %v1682
    %2442 = vmatpush.bf16.xpose.msra.mxu0 %v1679
    %2443 = vmatpush.bf16.xpose.msra.mxu0 %v1676
    %2444 = vmatpush.bf16.xpose.msra.mxu0 %v1673
    %2445 = vmatmul.bf16.gmra.mxu0 %v491
    %v2446 = vpop.f32.mrf.mxu0
    %v2447 = vadd.f32 %v2433, %v2446
    %v2448 = vpop.f32.mrf.mxu0
    %v2449 = vadd.f32 %v2435, %v2448
    %2450 = vdwg.mxu0
    %2451 = vmatpush.bf16.xpose.msra.mxu0 %v1716
    %2452 = vmatpush.bf16.xpose.msra.mxu0 %v1713
    %2453 = vmatpush.bf16.xpose.msra.mxu0 %v1710
    %2454 = vmatpush.bf16.xpose.msra.mxu0 %v1707
    %2455 = vmatpush.bf16.xpose.msra.mxu0 %v1704
    %2456 = vmatpush.bf16.xpose.msra.mxu0 %v1701
    %2457 = vmatpush.bf16.xpose.msra.mxu0 %v1698
    %2458 = vmatpush.bf16.xpose.msra.mxu0 %v1695
    %2459 = vmatmul.bf16.gmra.mxu0 %v489
    %v2460 = vpop.f32.mrf.mxu0
    %v2461 = vadd.f32 0.0, %v2460
    %v2462 = vpop.f32.mrf.mxu0
    %v2463 = vadd.f32 0.0, %v2462
    %2464 = vdwg.mxu0
    %2465 = vmatpush.bf16.xpose.msra.mxu0 %v1717
    %2466 = vmatpush.bf16.xpose.msra.mxu0 %v1714
    %2467 = vmatpush.bf16.xpose.msra.mxu0 %v1711
    %2468 = vmatpush.bf16.xpose.msra.mxu0 %v1708
    %2469 = vmatpush.bf16.xpose.msra.mxu0 %v1705
    %2470 = vmatpush.bf16.xpose.msra.mxu0 %v1702
    %2471 = vmatpush.bf16.xpose.msra.mxu0 %v1699
    %2472 = vmatpush.bf16.xpose.msra.mxu0 %v1696
    %2473 = vmatmul.bf16.gmra.mxu0 %v490
    %v2474 = vpop.f32.mrf.mxu0
    %v2475 = vadd.f32 %v2461, %v2474
    %v2476 = vpop.f32.mrf.mxu0
    %v2477 = vadd.f32 %v2463, %v2476
    %2478 = vdwg.mxu0
    %2479 = vmatpush.bf16.xpose.msra.mxu0 %v1718
    %2480 = vmatpush.bf16.xpose.msra.mxu0 %v1715
    %2481 = vmatpush.bf16.xpose.msra.mxu0 %v1712
    %2482 = vmatpush.bf16.xpose.msra.mxu0 %v1709
    %2483 = vmatpush.bf16.xpose.msra.mxu0 %v1706
    %2484 = vmatpush.bf16.xpose.msra.mxu0 %v1703
    %2485 = vmatpush.bf16.xpose.msra.mxu0 %v1700
    %2486 = vmatpush.bf16.xpose.msra.mxu0 %v1697
    %2487 = vmatmul.bf16.gmra.mxu0 %v491
    %v2488 = vpop.f32.mrf.mxu0
    %v2489 = vadd.f32 %v2475, %v2488
    %v2490 = vpop.f32.mrf.mxu0
    %v2491 = vadd.f32 %v2477, %v2490
    %2492 = vdwg.mxu0
    %2493 = vmatpush.bf16.xpose.msra.mxu0 %v1740
    %2494 = vmatpush.bf16.xpose.msra.mxu0 %v1737
    %2495 = vmatpush.bf16.xpose.msra.mxu0 %v1734
    %2496 = vmatpush.bf16.xpose.msra.mxu0 %v1731
    %2497 = vmatpush.bf16.xpose.msra.mxu0 %v1728
    %2498 = vmatpush.bf16.xpose.msra.mxu0 %v1725
    %2499 = vmatpush.bf16.xpose.msra.mxu0 %v1722
    %2500 = vmatpush.bf16.xpose.msra.mxu0 %v1719
    %2501 = vmatmul.bf16.gmra.mxu0 %v489
    %v2502 = vpop.f32.mrf.mxu0
    %v2503 = vadd.f32 0.0, %v2502
    %v2504 = vpop.f32.mrf.mxu0
    %v2505 = vadd.f32 0.0, %v2504
    %2506 = vdwg.mxu0
    %2507 = vmatpush.bf16.xpose.msra.mxu0 %v1741
    %2508 = vmatpush.bf16.xpose.msra.mxu0 %v1738
    %2509 = vmatpush.bf16.xpose.msra.mxu0 %v1735
    %2510 = vmatpush.bf16.xpose.msra.mxu0 %v1732
    %2511 = vmatpush.bf16.xpose.msra.mxu0 %v1729
    %2512 = vmatpush.bf16.xpose.msra.mxu0 %v1726
    %2513 = vmatpush.bf16.xpose.msra.mxu0 %v1723
    %2514 = vmatpush.bf16.xpose.msra.mxu0 %v1720
    %2515 = vmatmul.bf16.gmra.mxu0 %v490
    %v2516 = vpop.f32.mrf.mxu0
    %v2517 = vadd.f32 %v2503, %v2516
    %v2518 = vpop.f32.mrf.mxu0
    %v2519 = vadd.f32 %v2505, %v2518
    %2520 = vdwg.mxu0
    %2521 = vmatpush.bf16.xpose.msra.mxu0 %v1742
    %2522 = vmatpush.bf16.xpose.msra.mxu0 %v1739
    %2523 = vmatpush.bf16.xpose.msra.mxu0 %v1736
    %2524 = vmatpush.bf16.xpose.msra.mxu0 %v1733
    %2525 = vmatpush.bf16.xpose.msra.mxu0 %v1730
    %2526 = vmatpush.bf16.xpose.msra.mxu0 %v1727
    %2527 = vmatpush.bf16.xpose.msra.mxu0 %v1724
    %2528 = vmatpush.bf16.xpose.msra.mxu0 %v1721
    %2529 = vmatmul.bf16.gmra.mxu0 %v491
    %v2530 = vpop.f32.mrf.mxu0
    %v2531 = vadd.f32 %v2517, %v2530
    %v2532 = vpop.f32.mrf.mxu0
    %v2533 = vadd.f32 %v2519, %v2532
    %2534 = vdwg.mxu0
    %v2535 = vld [vmem:[#allocation8] sm:$0xff]
    %v2536 = vld [vmem:[#allocation8 + $0x8] sm:$0xf]
    %v2537 = vld [vmem:[#allocation8 + $0xc] sm:$0xff]
    %v2538 = vld [vmem:[#allocation8 + $0x14] sm:$0xf]
    %v2539 = vld [vmem:[#allocation8 + $0x18] sm:$0xff]
    %v2540 = vld [vmem:[#allocation8 + $0x20] sm:$0xf]
    %v2541 = vld [vmem:[#allocation8 + $0x24] sm:$0xff]
    %v2542 = vld [vmem:[#allocation8 + $0x2c] sm:$0xf]
    %v2543 = vld [vmem:[#allocation8 + $0x30] sm:$0xff]
    %v2544 = vld [vmem:[#allocation8 + $0x38] sm:$0xf]
    %v2545 = vld [vmem:[#allocation8 + $0x3c] sm:$0xff]
    %v2546 = vld [vmem:[#allocation8 + $0x44] sm:$0xf]
    %v2547 = vld [vmem:[#allocation8 + $0x48] sm:$0xff]
    %v2548 = vld [vmem:[#allocation8 + $0x50] sm:$0xf]
    %v2549 = vld [vmem:[#allocation8 + $0x54] sm:$0xff]
    %v2550 = vld [vmem:[#allocation8 + $0x5c] sm:$0xf]
    %v2551 = vld [vmem:[#allocation8 + $0x60] sm:$0xff]
    %v2552 = vld [vmem:[#allocation8 + $0x68] sm:$0xf]
    %v2553 = vld [vmem:[#allocation8 + $0x6c] sm:$0xff]
    %v2554 = vld [vmem:[#allocation8 + $0x74] sm:$0xf]
    %v2555 = vld [vmem:[#allocation8 + $0x78] sm:$0xff]
    %v2556 = vld [vmem:[#allocation8 + $0x80] sm:$0xf]
    %v2557 = vld [vmem:[#allocation8 + $0x84] sm:$0xff]
    %v2558 = vld [vmem:[#allocation8 + $0x8c] sm:$0xf]
    %v2559 = vld [vmem:[#allocation8 + $0x90] sm:$0xff]
    %v2560 = vld [vmem:[#allocation8 + $0x98] sm:$0xf]
    %v2561 = vld [vmem:[#allocation8 + $0x9c] sm:$0xff]
    %v2562 = vld [vmem:[#allocation8 + $0xa4] sm:$0xf]
    %v2563 = vld [vmem:[#allocation8 + $0xa8] sm:$0xff]
    %v2564 = vld [vmem:[#allocation8 + $0xb0] sm:$0xf]
    %v2565 = vld [vmem:[#allocation8 + $0xb4] sm:$0xff]
    %v2566 = vld [vmem:[#allocation8 + $0xbc] sm:$0xf]
    %v2567 = vld [vmem:[#allocation8 + $0xc0] sm:$0xff]
    %v2568 = vld [vmem:[#allocation8 + $0xc8] sm:$0xf]
    %v2569 = vld [vmem:[#allocation8 + $0xcc] sm:$0xff]
    %v2570 = vld [vmem:[#allocation8 + $0xd4] sm:$0xf]
    %v2571 = vld [vmem:[#allocation8 + $0xd8] sm:$0xff]
    %v2572 = vld [vmem:[#allocation8 + $0xe0] sm:$0xf]
    %v2573 = vld [vmem:[#allocation8 + $0xe4] sm:$0xff]
    %v2574 = vld [vmem:[#allocation8 + $0xec] sm:$0xf]
    %v2575 = vld [vmem:[#allocation8 + $0xf0] sm:$0xff]
    %v2576 = vld [vmem:[#allocation8 + $0xf8] sm:$0xf]
    %v2577 = vld [vmem:[#allocation8 + $0xfc] sm:$0xff]
    %v2578 = vld [vmem:[#allocation8 + $0x104] sm:$0xf]
    %v2579 = vld [vmem:[#allocation8 + $0x108] sm:$0xff]
    %v2580 = vld [vmem:[#allocation8 + $0x110] sm:$0xf]
    %v2581 = vld [vmem:[#allocation8 + $0x114] sm:$0xff]
    %v2582 = vld [vmem:[#allocation8 + $0x11c] sm:$0xf]
    %v2583 = vld [vmem:[#allocation8 + $0x120] sm:$0xff]
    %v2584 = vld [vmem:[#allocation8 + $0x128] sm:$0xf]
    %v2585 = vld [vmem:[#allocation8 + $0x12c] sm:$0xff]
    %v2586 = vld [vmem:[#allocation8 + $0x134] sm:$0xf]
    %v2587 = vld [vmem:[#allocation8 + $0x138] sm:$0xff]
    %v2588 = vld [vmem:[#allocation8 + $0x140] sm:$0xf]
    %v2589 = vld [vmem:[#allocation8 + $0x144] sm:$0xff]
    %v2590 = vld [vmem:[#allocation8 + $0x14c] sm:$0xf]
    %v2591 = vld [vmem:[#allocation8 + $0x150] sm:$0xff]
    %v2592 = vld [vmem:[#allocation8 + $0x158] sm:$0xf]
    %v2593 = vld [vmem:[#allocation8 + $0x15c] sm:$0xff]
    %v2594 = vld [vmem:[#allocation8 + $0x164] sm:$0xf]
    %v2595 = vld [vmem:[#allocation8 + $0x168] sm:$0xff]
    %v2596 = vld [vmem:[#allocation8 + $0x170] sm:$0xf]
    %v2597 = vld [vmem:[#allocation8 + $0x174] sm:$0xff]
    %v2598 = vld [vmem:[#allocation8 + $0x17c] sm:$0xf]
    %v2599 = vld [vmem:[#allocation8 + $0x180] sm:$0xff]
    %v2600 = vld [vmem:[#allocation8 + $0x188] sm:$0xf]
    %v2601 = vld [vmem:[#allocation8 + $0x18c] sm:$0xff]
    %v2602 = vld [vmem:[#allocation8 + $0x194] sm:$0xf]
    %v2603 = vld [vmem:[#allocation8 + $0x198] sm:$0xff]
    %v2604 = vld [vmem:[#allocation8 + $0x1a0] sm:$0xf]
    %v2605 = vld [vmem:[#allocation8 + $0x1a4] sm:$0xff]
    %v2606 = vld [vmem:[#allocation8 + $0x1ac] sm:$0xf]
    %v2607 = vld [vmem:[#allocation8 + $0x1b0] sm:$0xff]
    %v2608 = vld [vmem:[#allocation8 + $0x1b8] sm:$0xf]
    %v2609 = vld [vmem:[#allocation8 + $0x1bc] sm:$0xff]
    %v2610 = vld [vmem:[#allocation8 + $0x1c4] sm:$0xf]
    %v2611 = vld [vmem:[#allocation8 + $0x1c8] sm:$0xff]
    %v2612 = vld [vmem:[#allocation8 + $0x1d0] sm:$0xf]
    %v2613 = vld [vmem:[#allocation8 + $0x1d4] sm:$0xff]
    %v2614 = vld [vmem:[#allocation8 + $0x1dc] sm:$0xf]
    %v2615 = vld [vmem:[#allocation8 + $0x1e0] sm:$0xff]
    %v2616 = vld [vmem:[#allocation8 + $0x1e8] sm:$0xf]
    %v2617 = vld [vmem:[#allocation8 + $0x1ec] sm:$0xff]
    %v2618 = vld [vmem:[#allocation8 + $0x1f4] sm:$0xf]
    %v2619 = vld [vmem:[#allocation8 + $0x1f8] sm:$0xff]
    %v2620 = vld [vmem:[#allocation8 + $0x200] sm:$0xf]
    %v2621 = vld [vmem:[#allocation8 + $0x204] sm:$0xff]
    %v2622 = vld [vmem:[#allocation8 + $0x20c] sm:$0xf]
    %v2623 = vld [vmem:[#allocation8 + $0x210] sm:$0xff]
    %v2624 = vld [vmem:[#allocation8 + $0x218] sm:$0xf]
    %v2625 = vld [vmem:[#allocation8 + $0x21c] sm:$0xff]
    %v2626 = vld [vmem:[#allocation8 + $0x224] sm:$0xf]
    %v2627 = vld [vmem:[#allocation8 + $0x228] sm:$0xff]
    %v2628 = vld [vmem:[#allocation8 + $0x230] sm:$0xf]
    %v2629 = vld [vmem:[#allocation8 + $0x234] sm:$0xff]
    %v2630 = vld [vmem:[#allocation8 + $0x23c] sm:$0xf]
    %v2631 = vld [vmem:[#allocation8 + $0x240] sm:$0xff]
    %v2632 = vld [vmem:[#allocation8 + $0x248] sm:$0xf]
    %v2633 = vld [vmem:[#allocation8 + $0x24c] sm:$0xff]
    %v2634 = vld [vmem:[#allocation8 + $0x254] sm:$0xf]
    %v2635 = vld [vmem:[#allocation8 + $0x258] sm:$0xff]
    %v2636 = vld [vmem:[#allocation8 + $0x260] sm:$0xf]
    %v2637 = vld [vmem:[#allocation8 + $0x264] sm:$0xff]
    %v2638 = vld [vmem:[#allocation8 + $0x26c] sm:$0xf]
    %v2639 = vld [vmem:[#allocation8 + $0x270] sm:$0xff]
    %v2640 = vld [vmem:[#allocation8 + $0x278] sm:$0xf]
    %v2641 = vld [vmem:[#allocation8 + $0x27c] sm:$0xff]
    %v2642 = vld [vmem:[#allocation8 + $0x284] sm:$0xf]
    %v2643 = vld [vmem:[#allocation8 + $0x288] sm:$0xff]
    %v2644 = vld [vmem:[#allocation8 + $0x290] sm:$0xf]
    %v2645 = vld [vmem:[#allocation8 + $0x294] sm:$0xff]
    %v2646 = vld [vmem:[#allocation8 + $0x29c] sm:$0xf]
    %v2647 = vld [vmem:[#allocation8 + $0x2a0] sm:$0xff]
    %v2648 = vld [vmem:[#allocation8 + $0x2a8] sm:$0xf]
    %v2649 = vld [vmem:[#allocation8 + $0x2ac] sm:$0xff]
    %v2650 = vld [vmem:[#allocation8 + $0x2b4] sm:$0xf]
    %v2651 = vld [vmem:[#allocation8 + $0x2b8] sm:$0xff]
    %v2652 = vld [vmem:[#allocation8 + $0x2c0] sm:$0xf]
    %v2653 = vld [vmem:[#allocation8 + $0x2c4] sm:$0xff]
    %v2654 = vld [vmem:[#allocation8 + $0x2cc] sm:$0xf]
    %v2655 = vld [vmem:[#allocation8 + $0x2d0] sm:$0xff]
    %v2656 = vld [vmem:[#allocation8 + $0x2d8] sm:$0xf]
    %v2657 = vld [vmem:[#allocation8 + $0x2dc] sm:$0xff]
    %v2658 = vld [vmem:[#allocation8 + $0x2e4] sm:$0xf]
    %v2659 = vld [vmem:[#allocation8 + $0x2e8] sm:$0xff]
    %v2660 = vld [vmem:[#allocation8 + $0x2f0] sm:$0xf]
    %v2661 = vld [vmem:[#allocation8 + $0x2f4] sm:$0xff]
    %v2662 = vld [vmem:[#allocation8 + $0x2fc] sm:$0xf]
    %v2663 = vld [vmem:[#allocation8 + $0x300] sm:$0xff]
    %v2664 = vld [vmem:[#allocation8 + $0x308] sm:$0xf]
    %v2665 = vld [vmem:[#allocation8 + $0x30c] sm:$0xff]
    %v2666 = vld [vmem:[#allocation8 + $0x314] sm:$0xf]
    %v2667 = vld [vmem:[#allocation8 + $0x318] sm:$0xff]
    %v2668 = vld [vmem:[#allocation8 + $0x320] sm:$0xf]
    %v2669 = vld [vmem:[#allocation8 + $0x324] sm:$0xff]
    %v2670 = vld [vmem:[#allocation8 + $0x32c] sm:$0xf]
    %v2671 = vld [vmem:[#allocation8 + $0x330] sm:$0xff]
    %v2672 = vld [vmem:[#allocation8 + $0x338] sm:$0xf]
    %v2673 = vld [vmem:[#allocation8 + $0x33c] sm:$0xff]
    %v2674 = vld [vmem:[#allocation8 + $0x344] sm:$0xf]
    %v2675 = vld [vmem:[#allocation8 + $0x348] sm:$0xff]
    %v2676 = vld [vmem:[#allocation8 + $0x350] sm:$0xf]
    %v2677 = vld [vmem:[#allocation8 + $0x354] sm:$0xff]
    %v2678 = vld [vmem:[#allocation8 + $0x35c] sm:$0xf]
    %v2679 = vld [vmem:[#allocation8 + $0x360] sm:$0xff]
    %v2680 = vld [vmem:[#allocation8 + $0x368] sm:$0xf]
    %v2681 = vld [vmem:[#allocation8 + $0x36c] sm:$0xff]
    %v2682 = vld [vmem:[#allocation8 + $0x374] sm:$0xf]
    %v2683 = vld [vmem:[#allocation8 + $0x378] sm:$0xff]
    %v2684 = vld [vmem:[#allocation8 + $0x380] sm:$0xf]
    %v2685 = vld [vmem:[#allocation8 + $0x384] sm:$0xff]
    %v2686 = vld [vmem:[#allocation8 + $0x38c] sm:$0xf]
    %v2687 = vld [vmem:[#allocation8 + $0x390] sm:$0xff]
    %v2688 = vld [vmem:[#allocation8 + $0x398] sm:$0xf]
    %v2689 = vld [vmem:[#allocation8 + $0x39c] sm:$0xff]
    %v2690 = vld [vmem:[#allocation8 + $0x3a4] sm:$0xf]
    %v2691 = vld [vmem:[#allocation8 + $0x3a8] sm:$0xff]
    %v2692 = vld [vmem:[#allocation8 + $0x3b0] sm:$0xf]
    %v2693 = vld [vmem:[#allocation8 + $0x3b4] sm:$0xff]
    %v2694 = vld [vmem:[#allocation8 + $0x3bc] sm:$0xf]
    %v2695 = vld [vmem:[#allocation8 + $0x3c0] sm:$0xff]
    %v2696 = vld [vmem:[#allocation8 + $0x3c8] sm:$0xf]
    %v2697 = vld [vmem:[#allocation8 + $0x3cc] sm:$0xff]
    %v2698 = vld [vmem:[#allocation8 + $0x3d4] sm:$0xf]
    %v2699 = vld [vmem:[#allocation8 + $0x3d8] sm:$0xff]
    %v2700 = vld [vmem:[#allocation8 + $0x3e0] sm:$0xf]
    %v2701 = vld [vmem:[#allocation8 + $0x3e4] sm:$0xff]
    %v2702 = vld [vmem:[#allocation8 + $0x3ec] sm:$0xf]
    %v2703 = vld [vmem:[#allocation8 + $0x3f0] sm:$0xff]
    %v2704 = vld [vmem:[#allocation8 + $0x3f8] sm:$0xf]
    %v2705 = vld [vmem:[#allocation8 + $0x3fc] sm:$0xff]
    %v2706 = vld [vmem:[#allocation8 + $0x404] sm:$0xf]
    %v2707 = vld [vmem:[#allocation8 + $0x408] sm:$0xff]
    %v2708 = vld [vmem:[#allocation8 + $0x410] sm:$0xf]
    %v2709 = vld [vmem:[#allocation8 + $0x414] sm:$0xff]
    %v2710 = vld [vmem:[#allocation8 + $0x41c] sm:$0xf]
    %v2711 = vld [vmem:[#allocation8 + $0x420] sm:$0xff]
    %v2712 = vld [vmem:[#allocation8 + $0x428] sm:$0xf]
    %v2713 = vld [vmem:[#allocation8 + $0x42c] sm:$0xff]
    %v2714 = vld [vmem:[#allocation8 + $0x434] sm:$0xf]
    %v2715 = vld [vmem:[#allocation8 + $0x438] sm:$0xff]
    %v2716 = vld [vmem:[#allocation8 + $0x440] sm:$0xf]
    %v2717 = vld [vmem:[#allocation8 + $0x444] sm:$0xff]
    %v2718 = vld [vmem:[#allocation8 + $0x44c] sm:$0xf]
    %v2719 = vld [vmem:[#allocation8 + $0x450] sm:$0xff]
    %v2720 = vld [vmem:[#allocation8 + $0x458] sm:$0xf]
    %v2721 = vld [vmem:[#allocation8 + $0x45c] sm:$0xff]
    %v2722 = vld [vmem:[#allocation8 + $0x464] sm:$0xf]
    %v2723 = vld [vmem:[#allocation8 + $0x468] sm:$0xff]
    %v2724 = vld [vmem:[#allocation8 + $0x470] sm:$0xf]
    %v2725 = vld [vmem:[#allocation8 + $0x474] sm:$0xff]
    %v2726 = vld [vmem:[#allocation8 + $0x47c] sm:$0xf]
    %v2727 = vld [vmem:[#allocation8 + $0x480] sm:$0xff]
    %v2728 = vld [vmem:[#allocation8 + $0x488] sm:$0xf]
    %v2729 = vld [vmem:[#allocation8 + $0x48c] sm:$0xff]
    %v2730 = vld [vmem:[#allocation8 + $0x494] sm:$0xf]
    %v2731 = vld [vmem:[#allocation8 + $0x498] sm:$0xff]
    %v2732 = vld [vmem:[#allocation8 + $0x4a0] sm:$0xf]
    %v2733 = vld [vmem:[#allocation8 + $0x4a4] sm:$0xff]
    %v2734 = vld [vmem:[#allocation8 + $0x4ac] sm:$0xf]
    %v2735 = vld [vmem:[#allocation8 + $0x4b0] sm:$0xff]
    %v2736 = vld [vmem:[#allocation8 + $0x4b8] sm:$0xf]
    %v2737 = vld [vmem:[#allocation8 + $0x4bc] sm:$0xff]
    %v2738 = vld [vmem:[#allocation8 + $0x4c4] sm:$0xf]
    %v2739 = vld [vmem:[#allocation8 + $0x4c8] sm:$0xff]
    %v2740 = vld [vmem:[#allocation8 + $0x4d0] sm:$0xf]
    %v2741 = vld [vmem:[#allocation8 + $0x4d4] sm:$0xff]
    %v2742 = vld [vmem:[#allocation8 + $0x4dc] sm:$0xf]
    %v2743 = vld [vmem:[#allocation8 + $0x4e0] sm:$0xff]
    %v2744 = vld [vmem:[#allocation8 + $0x4e8] sm:$0xf]
    %v2745 = vld [vmem:[#allocation8 + $0x4ec] sm:$0xff]
    %v2746 = vld [vmem:[#allocation8 + $0x4f4] sm:$0xf]
    %v2747 = vld [vmem:[#allocation8 + $0x4f8] sm:$0xff]
    %v2748 = vld [vmem:[#allocation8 + $0x500] sm:$0xf]
    %v2749 = vld [vmem:[#allocation8 + $0x504] sm:$0xff]
    %v2750 = vld [vmem:[#allocation8 + $0x50c] sm:$0xf]
    %v2751 = vld [vmem:[#allocation8 + $0x510] sm:$0xff]
    %v2752 = vld [vmem:[#allocation8 + $0x518] sm:$0xf]
    %v2753 = vld [vmem:[#allocation8 + $0x51c] sm:$0xff]
    %v2754 = vld [vmem:[#allocation8 + $0x524] sm:$0xf]
    %v2755 = vld [vmem:[#allocation8 + $0x528] sm:$0xff]
    %v2756 = vld [vmem:[#allocation8 + $0x530] sm:$0xf]
    %v2757 = vld [vmem:[#allocation8 + $0x534] sm:$0xff]
    %v2758 = vld [vmem:[#allocation8 + $0x53c] sm:$0xf]
    %v2759 = vld [vmem:[#allocation8 + $0x540] sm:$0xff]
    %v2760 = vld [vmem:[#allocation8 + $0x548] sm:$0xf]
    %v2761 = vld [vmem:[#allocation8 + $0x54c] sm:$0xff]
    %v2762 = vld [vmem:[#allocation8 + $0x554] sm:$0xf]
    %v2763 = vld [vmem:[#allocation8 + $0x558] sm:$0xff]
    %v2764 = vld [vmem:[#allocation8 + $0x560] sm:$0xf]
    %v2765 = vld [vmem:[#allocation8 + $0x564] sm:$0xff]
    %v2766 = vld [vmem:[#allocation8 + $0x56c] sm:$0xf]
    %v2767 = vld [vmem:[#allocation8 + $0x570] sm:$0xff]
    %v2768 = vld [vmem:[#allocation8 + $0x578] sm:$0xf]
    %v2769 = vld [vmem:[#allocation8 + $0x57c] sm:$0xff]
    %v2770 = vld [vmem:[#allocation8 + $0x584] sm:$0xf]
    %v2771 = vld [vmem:[#allocation8 + $0x588] sm:$0xff]
    %v2772 = vld [vmem:[#allocation8 + $0x590] sm:$0xf]
    %v2773 = vld [vmem:[#allocation8 + $0x594] sm:$0xff]
    %v2774 = vld [vmem:[#allocation8 + $0x59c] sm:$0xf]
    %v2775 = vld [vmem:[#allocation8 + $0x5a0] sm:$0xff]
    %v2776 = vld [vmem:[#allocation8 + $0x5a8] sm:$0xf]
    %v2777 = vld [vmem:[#allocation8 + $0x5ac] sm:$0xff]
    %v2778 = vld [vmem:[#allocation8 + $0x5b4] sm:$0xf]
    %v2779 = vld [vmem:[#allocation8 + $0x5b8] sm:$0xff]
    %v2780 = vld [vmem:[#allocation8 + $0x5c0] sm:$0xf]
    %v2781 = vld [vmem:[#allocation8 + $0x5c4] sm:$0xff]
    %v2782 = vld [vmem:[#allocation8 + $0x5cc] sm:$0xf]
    %v2783 = vld [vmem:[#allocation8 + $0x5d0] sm:$0xff]
    %v2784 = vld [vmem:[#allocation8 + $0x5d8] sm:$0xf]
    %v2785 = vld [vmem:[#allocation8 + $0x5dc] sm:$0xff]
    %v2786 = vld [vmem:[#allocation8 + $0x5e4] sm:$0xf]
    %v2787 = vld [vmem:[#allocation8 + $0x5e8] sm:$0xff]
    %v2788 = vld [vmem:[#allocation8 + $0x5f0] sm:$0xf]
    %v2789 = vld [vmem:[#allocation8 + $0x5f4] sm:$0xff]
    %v2790 = vld [vmem:[#allocation8 + $0x5fc] sm:$0xf]
    %v2791 = vld [vmem:[#allocation8 + $0x600] sm:$0xff]
    %v2792 = vld [vmem:[#allocation8 + $0x608] sm:$0xf]
    %v2793 = vld [vmem:[#allocation8 + $0x60c] sm:$0xff]
    %v2794 = vld [vmem:[#allocation8 + $0x614] sm:$0xf]
    %v2795 = vld [vmem:[#allocation8 + $0x618] sm:$0xff]
    %v2796 = vld [vmem:[#allocation8 + $0x620] sm:$0xf]
    %v2797 = vld [vmem:[#allocation8 + $0x624] sm:$0xff]
    %v2798 = vld [vmem:[#allocation8 + $0x62c] sm:$0xf]
    %v2799 = vld [vmem:[#allocation8 + $0x630] sm:$0xff]
    %v2800 = vld [vmem:[#allocation8 + $0x638] sm:$0xf]
    %v2801 = vld [vmem:[#allocation8 + $0x63c] sm:$0xff]
    %v2802 = vld [vmem:[#allocation8 + $0x644] sm:$0xf]
    %v2803 = vld [vmem:[#allocation8 + $0x648] sm:$0xff]
    %v2804 = vld [vmem:[#allocation8 + $0x650] sm:$0xf]
    %v2805 = vld [vmem:[#allocation8 + $0x654] sm:$0xff]
    %v2806 = vld [vmem:[#allocation8 + $0x65c] sm:$0xf]
    %v2807 = vld [vmem:[#allocation8 + $0x660] sm:$0xff]
    %v2808 = vld [vmem:[#allocation8 + $0x668] sm:$0xf]
    %v2809 = vld [vmem:[#allocation8 + $0x66c] sm:$0xff]
    %v2810 = vld [vmem:[#allocation8 + $0x674] sm:$0xf]
    %v2811 = vld [vmem:[#allocation8 + $0x678] sm:$0xff]
    %v2812 = vld [vmem:[#allocation8 + $0x680] sm:$0xf]
    %v2813 = vld [vmem:[#allocation8 + $0x684] sm:$0xff]
    %v2814 = vld [vmem:[#allocation8 + $0x68c] sm:$0xf]
    %v2815 = vld [vmem:[#allocation8 + $0x690] sm:$0xff]
    %v2816 = vld [vmem:[#allocation8 + $0x698] sm:$0xf]
    %v2817 = vld [vmem:[#allocation8 + $0x69c] sm:$0xff]
    %v2818 = vld [vmem:[#allocation8 + $0x6a4] sm:$0xf]
    %v2819 = vld [vmem:[#allocation8 + $0x6a8] sm:$0xff]
    %v2820 = vld [vmem:[#allocation8 + $0x6b0] sm:$0xf]
    %v2821 = vld [vmem:[#allocation8 + $0x6b4] sm:$0xff]
    %v2822 = vld [vmem:[#allocation8 + $0x6bc] sm:$0xf]
    %v2823 = vld [vmem:[#allocation8 + $0x6c0] sm:$0xff]
    %v2824 = vld [vmem:[#allocation8 + $0x6c8] sm:$0xf]
    %v2825 = vld [vmem:[#allocation8 + $0x6cc] sm:$0xff]
    %v2826 = vld [vmem:[#allocation8 + $0x6d4] sm:$0xf]
    %v2827 = vld [vmem:[#allocation8 + $0x6d8] sm:$0xff]
    %v2828 = vld [vmem:[#allocation8 + $0x6e0] sm:$0xf]
    %v2829 = vld [vmem:[#allocation8 + $0x6e4] sm:$0xff]
    %v2830 = vld [vmem:[#allocation8 + $0x6ec] sm:$0xf]
    %v2831 = vld [vmem:[#allocation8 + $0x6f0] sm:$0xff]
    %v2832 = vld [vmem:[#allocation8 + $0x6f8] sm:$0xf]
    %v2833 = vld [vmem:[#allocation8 + $0x6fc] sm:$0xff]
    %v2834 = vld [vmem:[#allocation8 + $0x704] sm:$0xf]
    %v2835 = vld [vmem:[#allocation8 + $0x708] sm:$0xff]
    %v2836 = vld [vmem:[#allocation8 + $0x710] sm:$0xf]
    %v2837 = vld [vmem:[#allocation8 + $0x714] sm:$0xff]
    %v2838 = vld [vmem:[#allocation8 + $0x71c] sm:$0xf]
    %v2839 = vld [vmem:[#allocation8 + $0x720] sm:$0xff]
    %v2840 = vld [vmem:[#allocation8 + $0x728] sm:$0xf]
    %v2841 = vld [vmem:[#allocation8 + $0x72c] sm:$0xff]
    %v2842 = vld [vmem:[#allocation8 + $0x734] sm:$0xf]
    %v2843 = vld [vmem:[#allocation8 + $0x738] sm:$0xff]
    %v2844 = vld [vmem:[#allocation8 + $0x740] sm:$0xf]
    %v2845 = vld [vmem:[#allocation8 + $0x744] sm:$0xff]
    %v2846 = vld [vmem:[#allocation8 + $0x74c] sm:$0xf]
    %v2847 = vld [vmem:[#allocation8 + $0x750] sm:$0xff]
    %v2848 = vld [vmem:[#allocation8 + $0x758] sm:$0xf]
    %v2849 = vld [vmem:[#allocation8 + $0x75c] sm:$0xff]
    %v2850 = vld [vmem:[#allocation8 + $0x764] sm:$0xf]
    %v2851 = vld [vmem:[#allocation8 + $0x768] sm:$0xff]
    %v2852 = vld [vmem:[#allocation8 + $0x770] sm:$0xf]
    %v2853 = vld [vmem:[#allocation8 + $0x774] sm:$0xff]
    %v2854 = vld [vmem:[#allocation8 + $0x77c] sm:$0xf]
    %v2855 = vld [vmem:[#allocation8 + $0x780] sm:$0xff]
    %v2856 = vld [vmem:[#allocation8 + $0x788] sm:$0xf]
    %v2857 = vld [vmem:[#allocation8 + $0x78c] sm:$0xff]
    %v2858 = vld [vmem:[#allocation8 + $0x794] sm:$0xf]
    %v2859 = vld [vmem:[#allocation8 + $0x798] sm:$0xff]
    %v2860 = vld [vmem:[#allocation8 + $0x7a0] sm:$0xf]
    %v2861 = vld [vmem:[#allocation8 + $0x7a4] sm:$0xff]
    %v2862 = vld [vmem:[#allocation8 + $0x7ac] sm:$0xf]
    %v2863 = vld [vmem:[#allocation8 + $0x7b0] sm:$0xff]
    %v2864 = vld [vmem:[#allocation8 + $0x7b8] sm:$0xf]
    %v2865 = vld [vmem:[#allocation8 + $0x7bc] sm:$0xff]
    %v2866 = vld [vmem:[#allocation8 + $0x7c4] sm:$0xf]
    %v2867 = vld [vmem:[#allocation8 + $0x7c8] sm:$0xff]
    %v2868 = vld [vmem:[#allocation8 + $0x7d0] sm:$0xf]
    %v2869 = vld [vmem:[#allocation8 + $0x7d4] sm:$0xff]
    %v2870 = vld [vmem:[#allocation8 + $0x7dc] sm:$0xf]
    %v2871 = vld [vmem:[#allocation8 + $0x7e0] sm:$0xff]
    %v2872 = vld [vmem:[#allocation8 + $0x7e8] sm:$0xf]
    %v2873 = vld [vmem:[#allocation8 + $0x7ec] sm:$0xff]
    %v2874 = vld [vmem:[#allocation8 + $0x7f4] sm:$0xf]
    %v2875 = vld [vmem:[#allocation8 + $0x7f8] sm:$0xff]
    %v2876 = vld [vmem:[#allocation8 + $0x800] sm:$0xf]
    %v2877 = vld [vmem:[#allocation8 + $0x804] sm:$0xff]
    %v2878 = vld [vmem:[#allocation8 + $0x80c] sm:$0xf]
    %v2879 = vld [vmem:[#allocation8 + $0x810] sm:$0xff]
    %v2880 = vld [vmem:[#allocation8 + $0x818] sm:$0xf]
    %v2881 = vld [vmem:[#allocation8 + $0x81c] sm:$0xff]
    %v2882 = vld [vmem:[#allocation8 + $0x824] sm:$0xf]
    %v2883 = vld [vmem:[#allocation8 + $0x828] sm:$0xff]
    %v2884 = vld [vmem:[#allocation8 + $0x830] sm:$0xf]
    %v2885 = vld [vmem:[#allocation8 + $0x834] sm:$0xff]
    %v2886 = vld [vmem:[#allocation8 + $0x83c] sm:$0xf]
    %v2887 = vld [vmem:[#allocation8 + $0x840] sm:$0xff]
    %v2888 = vld [vmem:[#allocation8 + $0x848] sm:$0xf]
    %v2889 = vld [vmem:[#allocation8 + $0x84c] sm:$0xff]
    %v2890 = vld [vmem:[#allocation8 + $0x854] sm:$0xf]
    %v2891 = vld [vmem:[#allocation8 + $0x858] sm:$0xff]
    %v2892 = vld [vmem:[#allocation8 + $0x860] sm:$0xf]
    %v2893 = vld [vmem:[#allocation8 + $0x864] sm:$0xff]
    %v2894 = vld [vmem:[#allocation8 + $0x86c] sm:$0xf]
    %v2895 = vld [vmem:[#allocation8 + $0x870] sm:$0xff]
    %v2896 = vld [vmem:[#allocation8 + $0x878] sm:$0xf]
    %v2897 = vld [vmem:[#allocation8 + $0x87c] sm:$0xff]
    %v2898 = vld [vmem:[#allocation8 + $0x884] sm:$0xf]
    %v2899 = vld [vmem:[#allocation8 + $0x888] sm:$0xff]
    %v2900 = vld [vmem:[#allocation8 + $0x890] sm:$0xf]
    %v2901 = vld [vmem:[#allocation8 + $0x894] sm:$0xff]
    %v2902 = vld [vmem:[#allocation8 + $0x89c] sm:$0xf]
    %v2903 = vld [vmem:[#allocation8 + $0x8a0] sm:$0xff]
    %v2904 = vld [vmem:[#allocation8 + $0x8a8] sm:$0xf]
    %v2905 = vld [vmem:[#allocation8 + $0x8ac] sm:$0xff]
    %v2906 = vld [vmem:[#allocation8 + $0x8b4] sm:$0xf]
    %v2907 = vld [vmem:[#allocation8 + $0x8b8] sm:$0xff]
    %v2908 = vld [vmem:[#allocation8 + $0x8c0] sm:$0xf]
    %v2909 = vld [vmem:[#allocation8 + $0x8c4] sm:$0xff]
    %v2910 = vld [vmem:[#allocation8 + $0x8cc] sm:$0xf]
    %v2911 = vld [vmem:[#allocation8 + $0x8d0] sm:$0xff]
    %v2912 = vld [vmem:[#allocation8 + $0x8d8] sm:$0xf]
    %v2913 = vld [vmem:[#allocation8 + $0x8dc] sm:$0xff]
    %v2914 = vld [vmem:[#allocation8 + $0x8e4] sm:$0xf]
    %v2915 = vld [vmem:[#allocation8 + $0x8e8] sm:$0xff]
    %v2916 = vld [vmem:[#allocation8 + $0x8f0] sm:$0xf]
    %v2917 = vld [vmem:[#allocation8 + $0x8f4] sm:$0xff]
    %v2918 = vld [vmem:[#allocation8 + $0x8fc] sm:$0xf]
    %v3303 = vunpack.c.l.b16 %v2535
    %v3304 = vunpack.c.h.b16 %v2535
    %v3305 = vunpack.c.l.b16 %v2536
    %v3306 = vunpack.c.l.b16 %v2537
    %v3307 = vunpack.c.h.b16 %v2537
    %v3308 = vunpack.c.l.b16 %v2538
    %v3309 = vunpack.c.l.b16 %v2539
    %v3310 = vunpack.c.h.b16 %v2539
    %v3311 = vunpack.c.l.b16 %v2540
    %v3312 = vunpack.c.l.b16 %v2541
    %v3313 = vunpack.c.h.b16 %v2541
    %v3314 = vunpack.c.l.b16 %v2542
    %v3315 = vunpack.c.l.b16 %v2543
    %v3316 = vunpack.c.h.b16 %v2543
    %v3317 = vunpack.c.l.b16 %v2544
    %v3318 = vunpack.c.l.b16 %v2545
    %v3319 = vunpack.c.h.b16 %v2545
    %v3320 = vunpack.c.l.b16 %v2546
    %v3321 = vunpack.c.l.b16 %v2547
    %v3322 = vunpack.c.h.b16 %v2547
    %v3323 = vunpack.c.l.b16 %v2548
    %v3324 = vunpack.c.l.b16 %v2549
    %v3325 = vunpack.c.h.b16 %v2549
    %v3326 = vunpack.c.l.b16 %v2550
    %v3327 = vunpack.c.l.b16 %v2551
    %v3328 = vunpack.c.h.b16 %v2551
    %v3329 = vunpack.c.l.b16 %v2552
    %v3330 = vunpack.c.l.b16 %v2553
    %v3331 = vunpack.c.h.b16 %v2553
    %v3332 = vunpack.c.l.b16 %v2554
    %v3333 = vunpack.c.l.b16 %v2555
    %v3334 = vunpack.c.h.b16 %v2555
    %v3335 = vunpack.c.l.b16 %v2556
    %v3336 = vunpack.c.l.b16 %v2557
    %v3337 = vunpack.c.h.b16 %v2557
    %v3338 = vunpack.c.l.b16 %v2558
    %v3339 = vunpack.c.l.b16 %v2559
    %v3340 = vunpack.c.h.b16 %v2559
    %v3341 = vunpack.c.l.b16 %v2560
    %v3342 = vunpack.c.l.b16 %v2561
    %v3343 = vunpack.c.h.b16 %v2561
    %v3344 = vunpack.c.l.b16 %v2562
    %v3345 = vunpack.c.l.b16 %v2563
    %v3346 = vunpack.c.h.b16 %v2563
    %v3347 = vunpack.c.l.b16 %v2564
    %v3348 = vunpack.c.l.b16 %v2565
    %v3349 = vunpack.c.h.b16 %v2565
    %v3350 = vunpack.c.l.b16 %v2566
    %v3351 = vunpack.c.l.b16 %v2567
    %v3352 = vunpack.c.h.b16 %v2567
    %v3353 = vunpack.c.l.b16 %v2568
    %v3354 = vunpack.c.l.b16 %v2569
    %v3355 = vunpack.c.h.b16 %v2569
    %v3356 = vunpack.c.l.b16 %v2570
    %v3357 = vunpack.c.l.b16 %v2571
    %v3358 = vunpack.c.h.b16 %v2571
    %v3359 = vunpack.c.l.b16 %v2572
    %v3360 = vunpack.c.l.b16 %v2573
    %v3361 = vunpack.c.h.b16 %v2573
    %v3362 = vunpack.c.l.b16 %v2574
    %v3363 = vunpack.c.l.b16 %v2575
    %v3364 = vunpack.c.h.b16 %v2575
    %v3365 = vunpack.c.l.b16 %v2576
    %v3366 = vunpack.c.l.b16 %v2577
    %v3367 = vunpack.c.h.b16 %v2577
    %v3368 = vunpack.c.l.b16 %v2578
    %v3369 = vunpack.c.l.b16 %v2579
    %v3370 = vunpack.c.h.b16 %v2579
    %v3371 = vunpack.c.l.b16 %v2580
    %v3372 = vunpack.c.l.b16 %v2581
    %v3373 = vunpack.c.h.b16 %v2581
    %v3374 = vunpack.c.l.b16 %v2582
    %v3375 = vunpack.c.l.b16 %v2583
    %v3376 = vunpack.c.h.b16 %v2583
    %v3377 = vunpack.c.l.b16 %v2584
    %v3378 = vunpack.c.l.b16 %v2585
    %v3379 = vunpack.c.h.b16 %v2585
    %v3380 = vunpack.c.l.b16 %v2586
    %v3381 = vunpack.c.l.b16 %v2587
    %v3382 = vunpack.c.h.b16 %v2587
    %v3383 = vunpack.c.l.b16 %v2588
    %v3384 = vunpack.c.l.b16 %v2589
    %v3385 = vunpack.c.h.b16 %v2589
    %v3386 = vunpack.c.l.b16 %v2590
    %v3387 = vunpack.c.l.b16 %v2591
    %v3388 = vunpack.c.h.b16 %v2591
    %v3389 = vunpack.c.l.b16 %v2592
    %v3390 = vunpack.c.l.b16 %v2593
    %v3391 = vunpack.c.h.b16 %v2593
    %v3392 = vunpack.c.l.b16 %v2594
    %v3393 = vunpack.c.l.b16 %v2595
    %v3394 = vunpack.c.h.b16 %v2595
    %v3395 = vunpack.c.l.b16 %v2596
    %v3396 = vunpack.c.l.b16 %v2597
    %v3397 = vunpack.c.h.b16 %v2597
    %v3398 = vunpack.c.l.b16 %v2598
    %v3399 = vunpack.c.l.b16 %v2599
    %v3400 = vunpack.c.h.b16 %v2599
    %v3401 = vunpack.c.l.b16 %v2600
    %v3402 = vunpack.c.l.b16 %v2601
    %v3403 = vunpack.c.h.b16 %v2601
    %v3404 = vunpack.c.l.b16 %v2602
    %v3405 = vunpack.c.l.b16 %v2603
    %v3406 = vunpack.c.h.b16 %v2603
    %v3407 = vunpack.c.l.b16 %v2604
    %v3408 = vunpack.c.l.b16 %v2605
    %v3409 = vunpack.c.h.b16 %v2605
    %v3410 = vunpack.c.l.b16 %v2606
    %v3411 = vunpack.c.l.b16 %v2607
    %v3412 = vunpack.c.h.b16 %v2607
    %v3413 = vunpack.c.l.b16 %v2608
    %v3414 = vunpack.c.l.b16 %v2609
    %v3415 = vunpack.c.h.b16 %v2609
    %v3416 = vunpack.c.l.b16 %v2610
    %v3417 = vunpack.c.l.b16 %v2611
    %v3418 = vunpack.c.h.b16 %v2611
    %v3419 = vunpack.c.l.b16 %v2612
    %v3420 = vunpack.c.l.b16 %v2613
    %v3421 = vunpack.c.h.b16 %v2613
    %v3422 = vunpack.c.l.b16 %v2614
    %v3423 = vunpack.c.l.b16 %v2615
    %v3424 = vunpack.c.h.b16 %v2615
    %v3425 = vunpack.c.l.b16 %v2616
    %v3426 = vunpack.c.l.b16 %v2617
    %v3427 = vunpack.c.h.b16 %v2617
    %v3428 = vunpack.c.l.b16 %v2618
    %v3429 = vunpack.c.l.b16 %v2619
    %v3430 = vunpack.c.h.b16 %v2619
    %v3431 = vunpack.c.l.b16 %v2620
    %v3432 = vunpack.c.l.b16 %v2621
    %v3433 = vunpack.c.h.b16 %v2621
    %v3434 = vunpack.c.l.b16 %v2622
    %v3435 = vunpack.c.l.b16 %v2623
    %v3436 = vunpack.c.h.b16 %v2623
    %v3437 = vunpack.c.l.b16 %v2624
    %v3438 = vunpack.c.l.b16 %v2625
    %v3439 = vunpack.c.h.b16 %v2625
    %v3440 = vunpack.c.l.b16 %v2626
    %v3441 = vunpack.c.l.b16 %v2627
    %v3442 = vunpack.c.h.b16 %v2627
    %v3443 = vunpack.c.l.b16 %v2628
    %v3444 = vunpack.c.l.b16 %v2629
    %v3445 = vunpack.c.h.b16 %v2629
    %v3446 = vunpack.c.l.b16 %v2630
    %v3447 = vunpack.c.l.b16 %v2631
    %v3448 = vunpack.c.h.b16 %v2631
    %v3449 = vunpack.c.l.b16 %v2632
    %v3450 = vunpack.c.l.b16 %v2633
    %v3451 = vunpack.c.h.b16 %v2633
    %v3452 = vunpack.c.l.b16 %v2634
    %v3453 = vunpack.c.l.b16 %v2635
    %v3454 = vunpack.c.h.b16 %v2635
    %v3455 = vunpack.c.l.b16 %v2636
    %v3456 = vunpack.c.l.b16 %v2637
    %v3457 = vunpack.c.h.b16 %v2637
    %v3458 = vunpack.c.l.b16 %v2638
    %v3459 = vunpack.c.l.b16 %v2639
    %v3460 = vunpack.c.h.b16 %v2639
    %v3461 = vunpack.c.l.b16 %v2640
    %v3462 = vunpack.c.l.b16 %v2641
    %v3463 = vunpack.c.h.b16 %v2641
    %v3464 = vunpack.c.l.b16 %v2642
    %v3465 = vunpack.c.l.b16 %v2643
    %v3466 = vunpack.c.h.b16 %v2643
    %v3467 = vunpack.c.l.b16 %v2644
    %v3468 = vunpack.c.l.b16 %v2645
    %v3469 = vunpack.c.h.b16 %v2645
    %v3470 = vunpack.c.l.b16 %v2646
    %v3471 = vunpack.c.l.b16 %v2647
    %v3472 = vunpack.c.h.b16 %v2647
    %v3473 = vunpack.c.l.b16 %v2648
    %v3474 = vunpack.c.l.b16 %v2649
    %v3475 = vunpack.c.h.b16 %v2649
    %v3476 = vunpack.c.l.b16 %v2650
    %v3477 = vunpack.c.l.b16 %v2651
    %v3478 = vunpack.c.h.b16 %v2651
    %v3479 = vunpack.c.l.b16 %v2652
    %v3480 = vunpack.c.l.b16 %v2653
    %v3481 = vunpack.c.h.b16 %v2653
    %v3482 = vunpack.c.l.b16 %v2654
    %v3483 = vunpack.c.l.b16 %v2655
    %v3484 = vunpack.c.h.b16 %v2655
    %v3485 = vunpack.c.l.b16 %v2656
    %v3486 = vunpack.c.l.b16 %v2657
    %v3487 = vunpack.c.h.b16 %v2657
    %v3488 = vunpack.c.l.b16 %v2658
    %v3489 = vunpack.c.l.b16 %v2659
    %v3490 = vunpack.c.h.b16 %v2659
    %v3491 = vunpack.c.l.b16 %v2660
    %v3492 = vunpack.c.l.b16 %v2661
    %v3493 = vunpack.c.h.b16 %v2661
    %v3494 = vunpack.c.l.b16 %v2662
    %v3495 = vunpack.c.l.b16 %v2663
    %v3496 = vunpack.c.h.b16 %v2663
    %v3497 = vunpack.c.l.b16 %v2664
    %v3498 = vunpack.c.l.b16 %v2665
    %v3499 = vunpack.c.h.b16 %v2665
    %v3500 = vunpack.c.l.b16 %v2666
    %v3501 = vunpack.c.l.b16 %v2667
    %v3502 = vunpack.c.h.b16 %v2667
    %v3503 = vunpack.c.l.b16 %v2668
    %v3504 = vunpack.c.l.b16 %v2669
    %v3505 = vunpack.c.h.b16 %v2669
    %v3506 = vunpack.c.l.b16 %v2670
    %v3507 = vunpack.c.l.b16 %v2671
    %v3508 = vunpack.c.h.b16 %v2671
    %v3509 = vunpack.c.l.b16 %v2672
    %v3510 = vunpack.c.l.b16 %v2673
    %v3511 = vunpack.c.h.b16 %v2673
    %v3512 = vunpack.c.l.b16 %v2674
    %v3513 = vunpack.c.l.b16 %v2675
    %v3514 = vunpack.c.h.b16 %v2675
    %v3515 = vunpack.c.l.b16 %v2676
    %v3516 = vunpack.c.l.b16 %v2677
    %v3517 = vunpack.c.h.b16 %v2677
    %v3518 = vunpack.c.l.b16 %v2678
    %v3519 = vunpack.c.l.b16 %v2679
    %v3520 = vunpack.c.h.b16 %v2679
    %v3521 = vunpack.c.l.b16 %v2680
    %v3522 = vunpack.c.l.b16 %v2681
    %v3523 = vunpack.c.h.b16 %v2681
    %v3524 = vunpack.c.l.b16 %v2682
    %v3525 = vunpack.c.l.b16 %v2683
    %v3526 = vunpack.c.h.b16 %v2683
    %v3527 = vunpack.c.l.b16 %v2684
    %v3528 = vunpack.c.l.b16 %v2685
    %v3529 = vunpack.c.h.b16 %v2685
    %v3530 = vunpack.c.l.b16 %v2686
    %v3531 = vunpack.c.l.b16 %v2687
    %v3532 = vunpack.c.h.b16 %v2687
    %v3533 = vunpack.c.l.b16 %v2688
    %v3534 = vunpack.c.l.b16 %v2689
    %v3535 = vunpack.c.h.b16 %v2689
    %v3536 = vunpack.c.l.b16 %v2690
    %v3537 = vunpack.c.l.b16 %v2691
    %v3538 = vunpack.c.h.b16 %v2691
    %v3539 = vunpack.c.l.b16 %v2692
    %v3540 = vunpack.c.l.b16 %v2693
    %v3541 = vunpack.c.h.b16 %v2693
    %v3542 = vunpack.c.l.b16 %v2694
    %v3543 = vunpack.c.l.b16 %v2695
    %v3544 = vunpack.c.h.b16 %v2695
    %v3545 = vunpack.c.l.b16 %v2696
    %v3546 = vunpack.c.l.b16 %v2697
    %v3547 = vunpack.c.h.b16 %v2697
    %v3548 = vunpack.c.l.b16 %v2698
    %v3549 = vunpack.c.l.b16 %v2699
    %v3550 = vunpack.c.h.b16 %v2699
    %v3551 = vunpack.c.l.b16 %v2700
    %v3552 = vunpack.c.l.b16 %v2701
    %v3553 = vunpack.c.h.b16 %v2701
    %v3554 = vunpack.c.l.b16 %v2702
    %v3555 = vunpack.c.l.b16 %v2703
    %v3556 = vunpack.c.h.b16 %v2703
    %v3557 = vunpack.c.l.b16 %v2704
    %v3558 = vunpack.c.l.b16 %v2705
    %v3559 = vunpack.c.h.b16 %v2705
    %v3560 = vunpack.c.l.b16 %v2706
    %v3561 = vunpack.c.l.b16 %v2707
    %v3562 = vunpack.c.h.b16 %v2707
    %v3563 = vunpack.c.l.b16 %v2708
    %v3564 = vunpack.c.l.b16 %v2709
    %v3565 = vunpack.c.h.b16 %v2709
    %v3566 = vunpack.c.l.b16 %v2710
    %v3567 = vunpack.c.l.b16 %v2711
    %v3568 = vunpack.c.h.b16 %v2711
    %v3569 = vunpack.c.l.b16 %v2712
    %v3570 = vunpack.c.l.b16 %v2713
    %v3571 = vunpack.c.h.b16 %v2713
    %v3572 = vunpack.c.l.b16 %v2714
    %v3573 = vunpack.c.l.b16 %v2715
    %v3574 = vunpack.c.h.b16 %v2715
    %v3575 = vunpack.c.l.b16 %v2716
    %v3576 = vunpack.c.l.b16 %v2717
    %v3577 = vunpack.c.h.b16 %v2717
    %v3578 = vunpack.c.l.b16 %v2718
    %v3579 = vunpack.c.l.b16 %v2719
    %v3580 = vunpack.c.h.b16 %v2719
    %v3581 = vunpack.c.l.b16 %v2720
    %v3582 = vunpack.c.l.b16 %v2721
    %v3583 = vunpack.c.h.b16 %v2721
    %v3584 = vunpack.c.l.b16 %v2722
    %v3585 = vunpack.c.l.b16 %v2723
    %v3586 = vunpack.c.h.b16 %v2723
    %v3587 = vunpack.c.l.b16 %v2724
    %v3588 = vunpack.c.l.b16 %v2725
    %v3589 = vunpack.c.h.b16 %v2725
    %v3590 = vunpack.c.l.b16 %v2726
    %v3591 = vunpack.c.l.b16 %v2727
    %v3592 = vunpack.c.h.b16 %v2727
    %v3593 = vunpack.c.l.b16 %v2728
    %v3594 = vunpack.c.l.b16 %v2729
    %v3595 = vunpack.c.h.b16 %v2729
    %v3596 = vunpack.c.l.b16 %v2730
    %v3597 = vunpack.c.l.b16 %v2731
    %v3598 = vunpack.c.h.b16 %v2731
    %v3599 = vunpack.c.l.b16 %v2732
    %v3600 = vunpack.c.l.b16 %v2733
    %v3601 = vunpack.c.h.b16 %v2733
    %v3602 = vunpack.c.l.b16 %v2734
    %v3603 = vunpack.c.l.b16 %v2735
    %v3604 = vunpack.c.h.b16 %v2735
    %v3605 = vunpack.c.l.b16 %v2736
    %v3606 = vunpack.c.l.b16 %v2737
    %v3607 = vunpack.c.h.b16 %v2737
    %v3608 = vunpack.c.l.b16 %v2738
    %v3609 = vunpack.c.l.b16 %v2739
    %v3610 = vunpack.c.h.b16 %v2739
    %v3611 = vunpack.c.l.b16 %v2740
    %v3612 = vunpack.c.l.b16 %v2741
    %v3613 = vunpack.c.h.b16 %v2741
    %v3614 = vunpack.c.l.b16 %v2742
    %v3615 = vunpack.c.l.b16 %v2743
    %v3616 = vunpack.c.h.b16 %v2743
    %v3617 = vunpack.c.l.b16 %v2744
    %v3618 = vunpack.c.l.b16 %v2745
    %v3619 = vunpack.c.h.b16 %v2745
    %v3620 = vunpack.c.l.b16 %v2746
    %v3621 = vunpack.c.l.b16 %v2747
    %v3622 = vunpack.c.h.b16 %v2747
    %v3623 = vunpack.c.l.b16 %v2748
    %v3624 = vunpack.c.l.b16 %v2749
    %v3625 = vunpack.c.h.b16 %v2749
    %v3626 = vunpack.c.l.b16 %v2750
    %v3627 = vunpack.c.l.b16 %v2751
    %v3628 = vunpack.c.h.b16 %v2751
    %v3629 = vunpack.c.l.b16 %v2752
    %v3630 = vunpack.c.l.b16 %v2753
    %v3631 = vunpack.c.h.b16 %v2753
    %v3632 = vunpack.c.l.b16 %v2754
    %v3633 = vunpack.c.l.b16 %v2755
    %v3634 = vunpack.c.h.b16 %v2755
    %v3635 = vunpack.c.l.b16 %v2756
    %v3636 = vunpack.c.l.b16 %v2757
    %v3637 = vunpack.c.h.b16 %v2757
    %v3638 = vunpack.c.l.b16 %v2758
    %v3639 = vunpack.c.l.b16 %v2759
    %v3640 = vunpack.c.h.b16 %v2759
    %v3641 = vunpack.c.l.b16 %v2760
    %v3642 = vunpack.c.l.b16 %v2761
    %v3643 = vunpack.c.h.b16 %v2761
    %v3644 = vunpack.c.l.b16 %v2762
    %v3645 = vunpack.c.l.b16 %v2763
    %v3646 = vunpack.c.h.b16 %v2763
    %v3647 = vunpack.c.l.b16 %v2764
    %v3648 = vunpack.c.l.b16 %v2765
    %v3649 = vunpack.c.h.b16 %v2765
    %v3650 = vunpack.c.l.b16 %v2766
    %v3651 = vunpack.c.l.b16 %v2767
    %v3652 = vunpack.c.h.b16 %v2767
    %v3653 = vunpack.c.l.b16 %v2768
    %v3654 = vunpack.c.l.b16 %v2769
    %v3655 = vunpack.c.h.b16 %v2769
    %v3656 = vunpack.c.l.b16 %v2770
    %v3657 = vunpack.c.l.b16 %v2771
    %v3658 = vunpack.c.h.b16 %v2771
    %v3659 = vunpack.c.l.b16 %v2772
    %v3660 = vunpack.c.l.b16 %v2773
    %v3661 = vunpack.c.h.b16 %v2773
    %v3662 = vunpack.c.l.b16 %v2774
    %v3663 = vunpack.c.l.b16 %v2775
    %v3664 = vunpack.c.h.b16 %v2775
    %v3665 = vunpack.c.l.b16 %v2776
    %v3666 = vunpack.c.l.b16 %v2777
    %v3667 = vunpack.c.h.b16 %v2777
    %v3668 = vunpack.c.l.b16 %v2778
    %v3669 = vunpack.c.l.b16 %v2779
    %v3670 = vunpack.c.h.b16 %v2779
    %v3671 = vunpack.c.l.b16 %v2780
    %v3672 = vunpack.c.l.b16 %v2781
    %v3673 = vunpack.c.h.b16 %v2781
    %v3674 = vunpack.c.l.b16 %v2782
    %v3675 = vunpack.c.l.b16 %v2783
    %v3676 = vunpack.c.h.b16 %v2783
    %v3677 = vunpack.c.l.b16 %v2784
    %v3678 = vunpack.c.l.b16 %v2785
    %v3679 = vunpack.c.h.b16 %v2785
    %v3680 = vunpack.c.l.b16 %v2786
    %v3681 = vunpack.c.l.b16 %v2787
    %v3682 = vunpack.c.h.b16 %v2787
    %v3683 = vunpack.c.l.b16 %v2788
    %v3684 = vunpack.c.l.b16 %v2789
    %v3685 = vunpack.c.h.b16 %v2789
    %v3686 = vunpack.c.l.b16 %v2790
    %v3687 = vunpack.c.l.b16 %v2791
    %v3688 = vunpack.c.h.b16 %v2791
    %v3689 = vunpack.c.l.b16 %v2792
    %v3690 = vunpack.c.l.b16 %v2793
    %v3691 = vunpack.c.h.b16 %v2793
    %v3692 = vunpack.c.l.b16 %v2794
    %v3693 = vunpack.c.l.b16 %v2795
    %v3694 = vunpack.c.h.b16 %v2795
    %v3695 = vunpack.c.l.b16 %v2796
    %v3696 = vunpack.c.l.b16 %v2797
    %v3697 = vunpack.c.h.b16 %v2797
    %v3698 = vunpack.c.l.b16 %v2798
    %v3699 = vunpack.c.l.b16 %v2799
    %v3700 = vunpack.c.h.b16 %v2799
    %v3701 = vunpack.c.l.b16 %v2800
    %v3702 = vunpack.c.l.b16 %v2801
    %v3703 = vunpack.c.h.b16 %v2801
    %v3704 = vunpack.c.l.b16 %v2802
    %v3705 = vunpack.c.l.b16 %v2803
    %v3706 = vunpack.c.h.b16 %v2803
    %v3707 = vunpack.c.l.b16 %v2804
    %v3708 = vunpack.c.l.b16 %v2805
    %v3709 = vunpack.c.h.b16 %v2805
    %v3710 = vunpack.c.l.b16 %v2806
    %v3711 = vunpack.c.l.b16 %v2807
    %v3712 = vunpack.c.h.b16 %v2807
    %v3713 = vunpack.c.l.b16 %v2808
    %v3714 = vunpack.c.l.b16 %v2809
    %v3715 = vunpack.c.h.b16 %v2809
    %v3716 = vunpack.c.l.b16 %v2810
    %v3717 = vunpack.c.l.b16 %v2811
    %v3718 = vunpack.c.h.b16 %v2811
    %v3719 = vunpack.c.l.b16 %v2812
    %v3720 = vunpack.c.l.b16 %v2813
    %v3721 = vunpack.c.h.b16 %v2813
    %v3722 = vunpack.c.l.b16 %v2814
    %v3723 = vunpack.c.l.b16 %v2815
    %v3724 = vunpack.c.h.b16 %v2815
    %v3725 = vunpack.c.l.b16 %v2816
    %v3726 = vunpack.c.l.b16 %v2817
    %v3727 = vunpack.c.h.b16 %v2817
    %v3728 = vunpack.c.l.b16 %v2818
    %v3729 = vunpack.c.l.b16 %v2819
    %v3730 = vunpack.c.h.b16 %v2819
    %v3731 = vunpack.c.l.b16 %v2820
    %v3732 = vunpack.c.l.b16 %v2821
    %v3733 = vunpack.c.h.b16 %v2821
    %v3734 = vunpack.c.l.b16 %v2822
    %v3735 = vunpack.c.l.b16 %v2823
    %v3736 = vunpack.c.h.b16 %v2823
    %v3737 = vunpack.c.l.b16 %v2824
    %v3738 = vunpack.c.l.b16 %v2825
    %v3739 = vunpack.c.h.b16 %v2825
    %v3740 = vunpack.c.l.b16 %v2826
    %v3741 = vunpack.c.l.b16 %v2827
    %v3742 = vunpack.c.h.b16 %v2827
    %v3743 = vunpack.c.l.b16 %v2828
    %v3744 = vunpack.c.l.b16 %v2829
    %v3745 = vunpack.c.h.b16 %v2829
    %v3746 = vunpack.c.l.b16 %v2830
    %v3747 = vunpack.c.l.b16 %v2831
    %v3748 = vunpack.c.h.b16 %v2831
    %v3749 = vunpack.c.l.b16 %v2832
    %v3750 = vunpack.c.l.b16 %v2833
    %v3751 = vunpack.c.h.b16 %v2833
    %v3752 = vunpack.c.l.b16 %v2834
    %v3753 = vunpack.c.l.b16 %v2835
    %v3754 = vunpack.c.h.b16 %v2835
    %v3755 = vunpack.c.l.b16 %v2836
    %v3756 = vunpack.c.l.b16 %v2837
    %v3757 = vunpack.c.h.b16 %v2837
    %v3758 = vunpack.c.l.b16 %v2838
    %v3759 = vunpack.c.l.b16 %v2839
    %v3760 = vunpack.c.h.b16 %v2839
    %v3761 = vunpack.c.l.b16 %v2840
    %v3762 = vunpack.c.l.b16 %v2841
    %v3763 = vunpack.c.h.b16 %v2841
    %v3764 = vunpack.c.l.b16 %v2842
    %v3765 = vunpack.c.l.b16 %v2843
    %v3766 = vunpack.c.h.b16 %v2843
    %v3767 = vunpack.c.l.b16 %v2844
    %v3768 = vunpack.c.l.b16 %v2845
    %v3769 = vunpack.c.h.b16 %v2845
    %v3770 = vunpack.c.l.b16 %v2846
    %v3771 = vunpack.c.l.b16 %v2847
    %v3772 = vunpack.c.h.b16 %v2847
    %v3773 = vunpack.c.l.b16 %v2848
    %v3774 = vunpack.c.l.b16 %v2849
    %v3775 = vunpack.c.h.b16 %v2849
    %v3776 = vunpack.c.l.b16 %v2850
    %v3777 = vunpack.c.l.b16 %v2851
    %v3778 = vunpack.c.h.b16 %v2851
    %v3779 = vunpack.c.l.b16 %v2852
    %v3780 = vunpack.c.l.b16 %v2853
    %v3781 = vunpack.c.h.b16 %v2853
    %v3782 = vunpack.c.l.b16 %v2854
    %v3783 = vunpack.c.l.b16 %v2855
    %v3784 = vunpack.c.h.b16 %v2855
    %v3785 = vunpack.c.l.b16 %v2856
    %v3786 = vunpack.c.l.b16 %v2857
    %v3787 = vunpack.c.h.b16 %v2857
    %v3788 = vunpack.c.l.b16 %v2858
    %v3789 = vunpack.c.l.b16 %v2859
    %v3790 = vunpack.c.h.b16 %v2859
    %v3791 = vunpack.c.l.b16 %v2860
    %v3792 = vunpack.c.l.b16 %v2861
    %v3793 = vunpack.c.h.b16 %v2861
    %v3794 = vunpack.c.l.b16 %v2862
    %v3795 = vunpack.c.l.b16 %v2863
    %v3796 = vunpack.c.h.b16 %v2863
    %v3797 = vunpack.c.l.b16 %v2864
    %v3798 = vunpack.c.l.b16 %v2865
    %v3799 = vunpack.c.h.b16 %v2865
    %v3800 = vunpack.c.l.b16 %v2866
    %v3801 = vunpack.c.l.b16 %v2867
    %v3802 = vunpack.c.h.b16 %v2867
    %v3803 = vunpack.c.l.b16 %v2868
    %v3804 = vunpack.c.l.b16 %v2869
    %v3805 = vunpack.c.h.b16 %v2869
    %v3806 = vunpack.c.l.b16 %v2870
    %v3807 = vunpack.c.l.b16 %v2871
    %v3808 = vunpack.c.h.b16 %v2871
    %v3809 = vunpack.c.l.b16 %v2872
    %v3810 = vunpack.c.l.b16 %v2873
    %v3811 = vunpack.c.h.b16 %v2873
    %v3812 = vunpack.c.l.b16 %v2874
    %v3813 = vunpack.c.l.b16 %v2875
    %v3814 = vunpack.c.h.b16 %v2875
    %v3815 = vunpack.c.l.b16 %v2876
    %v3816 = vunpack.c.l.b16 %v2877
    %v3817 = vunpack.c.h.b16 %v2877
    %v3818 = vunpack.c.l.b16 %v2878
    %v3819 = vunpack.c.l.b16 %v2879
    %v3820 = vunpack.c.h.b16 %v2879
    %v3821 = vunpack.c.l.b16 %v2880
    %v3822 = vunpack.c.l.b16 %v2881
    %v3823 = vunpack.c.h.b16 %v2881
    %v3824 = vunpack.c.l.b16 %v2882
    %v3825 = vunpack.c.l.b16 %v2883
    %v3826 = vunpack.c.h.b16 %v2883
    %v3827 = vunpack.c.l.b16 %v2884
    %v3828 = vunpack.c.l.b16 %v2885
    %v3829 = vunpack.c.h.b16 %v2885
    %v3830 = vunpack.c.l.b16 %v2886
    %v3831 = vunpack.c.l.b16 %v2887
    %v3832 = vunpack.c.h.b16 %v2887
    %v3833 = vunpack.c.l.b16 %v2888
    %v3834 = vunpack.c.l.b16 %v2889
    %v3835 = vunpack.c.h.b16 %v2889
    %v3836 = vunpack.c.l.b16 %v2890
    %v3837 = vunpack.c.l.b16 %v2891
    %v3838 = vunpack.c.h.b16 %v2891
    %v3839 = vunpack.c.l.b16 %v2892
    %v3840 = vunpack.c.l.b16 %v2893
    %v3841 = vunpack.c.h.b16 %v2893
    %v3842 = vunpack.c.l.b16 %v2894
    %v3843 = vunpack.c.l.b16 %v2895
    %v3844 = vunpack.c.h.b16 %v2895
    %v3845 = vunpack.c.l.b16 %v2896
    %v3846 = vunpack.c.l.b16 %v2897
    %v3847 = vunpack.c.h.b16 %v2897
    %v3848 = vunpack.c.l.b16 %v2898
    %v3849 = vunpack.c.l.b16 %v2899
    %v3850 = vunpack.c.h.b16 %v2899
    %v3851 = vunpack.c.l.b16 %v2900
    %v3852 = vunpack.c.l.b16 %v2901
    %v3853 = vunpack.c.h.b16 %v2901
    %v3854 = vunpack.c.l.b16 %v2902
    %v3855 = vunpack.c.l.b16 %v2903
    %v3856 = vunpack.c.h.b16 %v2903
    %v3857 = vunpack.c.l.b16 %v2904
    %v3858 = vunpack.c.l.b16 %v2905
    %v3859 = vunpack.c.h.b16 %v2905
    %v3860 = vunpack.c.l.b16 %v2906
    %v3861 = vunpack.c.l.b16 %v2907
    %v3862 = vunpack.c.h.b16 %v2907
    %v3863 = vunpack.c.l.b16 %v2908
    %v3864 = vunpack.c.l.b16 %v2909
    %v3865 = vunpack.c.h.b16 %v2909
    %v3866 = vunpack.c.l.b16 %v2910
    %v3867 = vunpack.c.l.b16 %v2911
    %v3868 = vunpack.c.h.b16 %v2911
    %v3869 = vunpack.c.l.b16 %v2912
    %v3870 = vunpack.c.l.b16 %v2913
    %v3871 = vunpack.c.h.b16 %v2913
    %v3872 = vunpack.c.l.b16 %v2914
    %v3873 = vunpack.c.l.b16 %v2915
    %v3874 = vunpack.c.h.b16 %v2915
    %v3875 = vunpack.c.l.b16 %v2916
    %v3876 = vunpack.c.l.b16 %v2917
    %v3877 = vunpack.c.h.b16 %v2917
    %v3878 = vunpack.c.l.b16 %v2918
    %v3879 = vpack.c.b16 %v3306, %v3303
    %v3880 = vpack.c.b16 %v3307, %v3304
    %v3881 = vpack.c.b16 %v3308, %v3305
    %v3882 = vpack.c.b16 %v3312, %v3309
    %v3883 = vpack.c.b16 %v3313, %v3310
    %v3884 = vpack.c.b16 %v3314, %v3311
    %v3885 = vpack.c.b16 %v3318, %v3315
    %v3886 = vpack.c.b16 %v3319, %v3316
    %v3887 = vpack.c.b16 %v3320, %v3317
    %v3888 = vpack.c.b16 %v3324, %v3321
    %v3889 = vpack.c.b16 %v3325, %v3322
    %v3890 = vpack.c.b16 %v3326, %v3323
    %v3891 = vpack.c.b16 %v3330, %v3327
    %v3892 = vpack.c.b16 %v3331, %v3328
    %v3893 = vpack.c.b16 %v3332, %v3329
    %v3894 = vpack.c.b16 %v3336, %v3333
    %v3895 = vpack.c.b16 %v3337, %v3334
    %v3896 = vpack.c.b16 %v3338, %v3335
    %v3897 = vpack.c.b16 %v3342, %v3339
    %v3898 = vpack.c.b16 %v3343, %v3340
    %v3899 = vpack.c.b16 %v3344, %v3341
    %v3900 = vpack.c.b16 %v3348, %v3345
    %v3901 = vpack.c.b16 %v3349, %v3346
    %v3902 = vpack.c.b16 %v3350, %v3347
    %v3903 = vpack.c.b16 %v3354, %v3351
    %v3904 = vpack.c.b16 %v3355, %v3352
    %v3905 = vpack.c.b16 %v3356, %v3353
    %v3906 = vpack.c.b16 %v3360, %v3357
    %v3907 = vpack.c.b16 %v3361, %v3358
    %v3908 = vpack.c.b16 %v3362, %v3359
    %v3909 = vpack.c.b16 %v3366, %v3363
    %v3910 = vpack.c.b16 %v3367, %v3364
    %v3911 = vpack.c.b16 %v3368, %v3365
    %v3912 = vpack.c.b16 %v3372, %v3369
    %v3913 = vpack.c.b16 %v3373, %v3370
    %v3914 = vpack.c.b16 %v3374, %v3371
    %v3915 = vpack.c.b16 %v3378, %v3375
    %v3916 = vpack.c.b16 %v3379, %v3376
    %v3917 = vpack.c.b16 %v3380, %v3377
    %v3918 = vpack.c.b16 %v3384, %v3381
    %v3919 = vpack.c.b16 %v3385, %v3382
    %v3920 = vpack.c.b16 %v3386, %v3383
    %v3921 = vpack.c.b16 %v3390, %v3387
    %v3922 = vpack.c.b16 %v3391, %v3388
    %v3923 = vpack.c.b16 %v3392, %v3389
    %v3924 = vpack.c.b16 %v3396, %v3393
    %v3925 = vpack.c.b16 %v3397, %v3394
    %v3926 = vpack.c.b16 %v3398, %v3395
    %v3927 = vpack.c.b16 %v3402, %v3399
    %v3928 = vpack.c.b16 %v3403, %v3400
    %v3929 = vpack.c.b16 %v3404, %v3401
    %v3930 = vpack.c.b16 %v3408, %v3405
    %v3931 = vpack.c.b16 %v3409, %v3406
    %v3932 = vpack.c.b16 %v3410, %v3407
    %v3933 = vpack.c.b16 %v3414, %v3411
    %v3934 = vpack.c.b16 %v3415, %v3412
    %v3935 = vpack.c.b16 %v3416, %v3413
    %v3936 = vpack.c.b16 %v3420, %v3417
    %v3937 = vpack.c.b16 %v3421, %v3418
    %v3938 = vpack.c.b16 %v3422, %v3419
    %v3939 = vpack.c.b16 %v3426, %v3423
    %v3940 = vpack.c.b16 %v3427, %v3424
    %v3941 = vpack.c.b16 %v3428, %v3425
    %v3942 = vpack.c.b16 %v3432, %v3429
    %v3943 = vpack.c.b16 %v3433, %v3430
    %v3944 = vpack.c.b16 %v3434, %v3431
    %v3945 = vpack.c.b16 %v3438, %v3435
    %v3946 = vpack.c.b16 %v3439, %v3436
    %v3947 = vpack.c.b16 %v3440, %v3437
    %v3948 = vpack.c.b16 %v3444, %v3441
    %v3949 = vpack.c.b16 %v3445, %v3442
    %v3950 = vpack.c.b16 %v3446, %v3443
    %v3951 = vpack.c.b16 %v3450, %v3447
    %v3952 = vpack.c.b16 %v3451, %v3448
    %v3953 = vpack.c.b16 %v3452, %v3449
    %v3954 = vpack.c.b16 %v3456, %v3453
    %v3955 = vpack.c.b16 %v3457, %v3454
    %v3956 = vpack.c.b16 %v3458, %v3455
    %v3957 = vpack.c.b16 %v3462, %v3459
    %v3958 = vpack.c.b16 %v3463, %v3460
    %v3959 = vpack.c.b16 %v3464, %v3461
    %v3960 = vpack.c.b16 %v3468, %v3465
    %v3961 = vpack.c.b16 %v3469, %v3466
    %v3962 = vpack.c.b16 %v3470, %v3467
    %v3963 = vpack.c.b16 %v3474, %v3471
    %v3964 = vpack.c.b16 %v3475, %v3472
    %v3965 = vpack.c.b16 %v3476, %v3473
    %v3966 = vpack.c.b16 %v3480, %v3477
    %v3967 = vpack.c.b16 %v3481, %v3478
    %v3968 = vpack.c.b16 %v3482, %v3479
    %v3969 = vpack.c.b16 %v3486, %v3483
    %v3970 = vpack.c.b16 %v3487, %v3484
    %v3971 = vpack.c.b16 %v3488, %v3485
    %v3972 = vpack.c.b16 %v3492, %v3489
    %v3973 = vpack.c.b16 %v3493, %v3490
    %v3974 = vpack.c.b16 %v3494, %v3491
    %v3975 = vpack.c.b16 %v3498, %v3495
    %v3976 = vpack.c.b16 %v3499, %v3496
    %v3977 = vpack.c.b16 %v3500, %v3497
    %v3978 = vpack.c.b16 %v3504, %v3501
    %v3979 = vpack.c.b16 %v3505, %v3502
    %v3980 = vpack.c.b16 %v3506, %v3503
    %v3981 = vpack.c.b16 %v3510, %v3507
    %v3982 = vpack.c.b16 %v3511, %v3508
    %v3983 = vpack.c.b16 %v3512, %v3509
    %v3984 = vpack.c.b16 %v3516, %v3513
    %v3985 = vpack.c.b16 %v3517, %v3514
    %v3986 = vpack.c.b16 %v3518, %v3515
    %v3987 = vpack.c.b16 %v3522, %v3519
    %v3988 = vpack.c.b16 %v3523, %v3520
    %v3989 = vpack.c.b16 %v3524, %v3521
    %v3990 = vpack.c.b16 %v3528, %v3525
    %v3991 = vpack.c.b16 %v3529, %v3526
    %v3992 = vpack.c.b16 %v3530, %v3527
    %v3993 = vpack.c.b16 %v3534, %v3531
    %v3994 = vpack.c.b16 %v3535, %v3532
    %v3995 = vpack.c.b16 %v3536, %v3533
    %v3996 = vpack.c.b16 %v3540, %v3537
    %v3997 = vpack.c.b16 %v3541, %v3538
    %v3998 = vpack.c.b16 %v3542, %v3539
    %v3999 = vpack.c.b16 %v3546, %v3543
    %v4000 = vpack.c.b16 %v3547, %v3544
    %v4001 = vpack.c.b16 %v3548, %v3545
    %v4002 = vpack.c.b16 %v3552, %v3549
    %v4003 = vpack.c.b16 %v3553, %v3550
    %v4004 = vpack.c.b16 %v3554, %v3551
    %v4005 = vpack.c.b16 %v3558, %v3555
    %v4006 = vpack.c.b16 %v3559, %v3556
    %v4007 = vpack.c.b16 %v3560, %v3557
    %v4008 = vpack.c.b16 %v3564, %v3561
    %v4009 = vpack.c.b16 %v3565, %v3562
    %v4010 = vpack.c.b16 %v3566, %v3563
    %v4011 = vpack.c.b16 %v3570, %v3567
    %v4012 = vpack.c.b16 %v3571, %v3568
    %v4013 = vpack.c.b16 %v3572, %v3569
    %v4014 = vpack.c.b16 %v3576, %v3573
    %v4015 = vpack.c.b16 %v3577, %v3574
    %v4016 = vpack.c.b16 %v3578, %v3575
    %v4017 = vpack.c.b16 %v3582, %v3579
    %v4018 = vpack.c.b16 %v3583, %v3580
    %v4019 = vpack.c.b16 %v3584, %v3581
    %v4020 = vpack.c.b16 %v3588, %v3585
    %v4021 = vpack.c.b16 %v3589, %v3586
    %v4022 = vpack.c.b16 %v3590, %v3587
    %v4023 = vpack.c.b16 %v3594, %v3591
    %v4024 = vpack.c.b16 %v3595, %v3592
    %v4025 = vpack.c.b16 %v3596, %v3593
    %v4026 = vpack.c.b16 %v3600, %v3597
    %v4027 = vpack.c.b16 %v3601, %v3598
    %v4028 = vpack.c.b16 %v3602, %v3599
    %v4029 = vpack.c.b16 %v3606, %v3603
    %v4030 = vpack.c.b16 %v3607, %v3604
    %v4031 = vpack.c.b16 %v3608, %v3605
    %v4032 = vpack.c.b16 %v3612, %v3609
    %v4033 = vpack.c.b16 %v3613, %v3610
    %v4034 = vpack.c.b16 %v3614, %v3611
    %v4035 = vpack.c.b16 %v3618, %v3615
    %v4036 = vpack.c.b16 %v3619, %v3616
    %v4037 = vpack.c.b16 %v3620, %v3617
    %v4038 = vpack.c.b16 %v3624, %v3621
    %v4039 = vpack.c.b16 %v3625, %v3622
    %v4040 = vpack.c.b16 %v3626, %v3623
    %v4041 = vpack.c.b16 %v3630, %v3627
    %v4042 = vpack.c.b16 %v3631, %v3628
    %v4043 = vpack.c.b16 %v3632, %v3629
    %v4044 = vpack.c.b16 %v3636, %v3633
    %v4045 = vpack.c.b16 %v3637, %v3634
    %v4046 = vpack.c.b16 %v3638, %v3635
    %v4047 = vpack.c.b16 %v3642, %v3639
    %v4048 = vpack.c.b16 %v3643, %v3640
    %v4049 = vpack.c.b16 %v3644, %v3641
    %v4050 = vpack.c.b16 %v3648, %v3645
    %v4051 = vpack.c.b16 %v3649, %v3646
    %v4052 = vpack.c.b16 %v3650, %v3647
    %v4053 = vpack.c.b16 %v3654, %v3651
    %v4054 = vpack.c.b16 %v3655, %v3652
    %v4055 = vpack.c.b16 %v3656, %v3653
    %v4056 = vpack.c.b16 %v3660, %v3657
    %v4057 = vpack.c.b16 %v3661, %v3658
    %v4058 = vpack.c.b16 %v3662, %v3659
    %v4059 = vpack.c.b16 %v3666, %v3663
    %v4060 = vpack.c.b16 %v3667, %v3664
    %v4061 = vpack.c.b16 %v3668, %v3665
    %v4062 = vpack.c.b16 %v3672, %v3669
    %v4063 = vpack.c.b16 %v3673, %v3670
    %v4064 = vpack.c.b16 %v3674, %v3671
    %v4065 = vpack.c.b16 %v3678, %v3675
    %v4066 = vpack.c.b16 %v3679, %v3676
    %v4067 = vpack.c.b16 %v3680, %v3677
    %v4068 = vpack.c.b16 %v3684, %v3681
    %v4069 = vpack.c.b16 %v3685, %v3682
    %v4070 = vpack.c.b16 %v3686, %v3683
    %v4071 = vpack.c.b16 %v3690, %v3687
    %v4072 = vpack.c.b16 %v3691, %v3688
    %v4073 = vpack.c.b16 %v3692, %v3689
    %v4074 = vpack.c.b16 %v3696, %v3693
    %v4075 = vpack.c.b16 %v3697, %v3694
    %v4076 = vpack.c.b16 %v3698, %v3695
    %v4077 = vpack.c.b16 %v3702, %v3699
    %v4078 = vpack.c.b16 %v3703, %v3700
    %v4079 = vpack.c.b16 %v3704, %v3701
    %v4080 = vpack.c.b16 %v3708, %v3705
    %v4081 = vpack.c.b16 %v3709, %v3706
    %v4082 = vpack.c.b16 %v3710, %v3707
    %v4083 = vpack.c.b16 %v3714, %v3711
    %v4084 = vpack.c.b16 %v3715, %v3712
    %v4085 = vpack.c.b16 %v3716, %v3713
    %v4086 = vpack.c.b16 %v3720, %v3717
    %v4087 = vpack.c.b16 %v3721, %v3718
    %v4088 = vpack.c.b16 %v3722, %v3719
    %v4089 = vpack.c.b16 %v3726, %v3723
    %v4090 = vpack.c.b16 %v3727, %v3724
    %v4091 = vpack.c.b16 %v3728, %v3725
    %v4092 = vpack.c.b16 %v3732, %v3729
    %v4093 = vpack.c.b16 %v3733, %v3730
    %v4094 = vpack.c.b16 %v3734, %v3731
    %v4095 = vpack.c.b16 %v3738, %v3735
    %v4096 = vpack.c.b16 %v3739, %v3736
    %v4097 = vpack.c.b16 %v3740, %v3737
    %v4098 = vpack.c.b16 %v3744, %v3741
    %v4099 = vpack.c.b16 %v3745, %v3742
    %v4100 = vpack.c.b16 %v3746, %v3743
    %v4101 = vpack.c.b16 %v3750, %v3747
    %v4102 = vpack.c.b16 %v3751, %v3748
    %v4103 = vpack.c.b16 %v3752, %v3749
    %v4104 = vpack.c.b16 %v3756, %v3753
    %v4105 = vpack.c.b16 %v3757, %v3754
    %v4106 = vpack.c.b16 %v3758, %v3755
    %v4107 = vpack.c.b16 %v3762, %v3759
    %v4108 = vpack.c.b16 %v3763, %v3760
    %v4109 = vpack.c.b16 %v3764, %v3761
    %v4110 = vpack.c.b16 %v3768, %v3765
    %v4111 = vpack.c.b16 %v3769, %v3766
    %v4112 = vpack.c.b16 %v3770, %v3767
    %v4113 = vpack.c.b16 %v3774, %v3771
    %v4114 = vpack.c.b16 %v3775, %v3772
    %v4115 = vpack.c.b16 %v3776, %v3773
    %v4116 = vpack.c.b16 %v3780, %v3777
    %v4117 = vpack.c.b16 %v3781, %v3778
    %v4118 = vpack.c.b16 %v3782, %v3779
    %v4119 = vpack.c.b16 %v3786, %v3783
    %v4120 = vpack.c.b16 %v3787, %v3784
    %v4121 = vpack.c.b16 %v3788, %v3785
    %v4122 = vpack.c.b16 %v3792, %v3789
    %v4123 = vpack.c.b16 %v3793, %v3790
    %v4124 = vpack.c.b16 %v3794, %v3791
    %v4125 = vpack.c.b16 %v3798, %v3795
    %v4126 = vpack.c.b16 %v3799, %v3796
    %v4127 = vpack.c.b16 %v3800, %v3797
    %v4128 = vpack.c.b16 %v3804, %v3801
    %v4129 = vpack.c.b16 %v3805, %v3802
    %v4130 = vpack.c.b16 %v3806, %v3803
    %v4131 = vpack.c.b16 %v3810, %v3807
    %v4132 = vpack.c.b16 %v3811, %v3808
    %v4133 = vpack.c.b16 %v3812, %v3809
    %v4134 = vpack.c.b16 %v3816, %v3813
    %v4135 = vpack.c.b16 %v3817, %v3814
    %v4136 = vpack.c.b16 %v3818, %v3815
    %v4137 = vpack.c.b16 %v3822, %v3819
    %v4138 = vpack.c.b16 %v3823, %v3820
    %v4139 = vpack.c.b16 %v3824, %v3821
    %v4140 = vpack.c.b16 %v3828, %v3825
    %v4141 = vpack.c.b16 %v3829, %v3826
    %v4142 = vpack.c.b16 %v3830, %v3827
    %v4143 = vpack.c.b16 %v3834, %v3831
    %v4144 = vpack.c.b16 %v3835, %v3832
    %v4145 = vpack.c.b16 %v3836, %v3833
    %v4146 = vpack.c.b16 %v3840, %v3837
    %v4147 = vpack.c.b16 %v3841, %v3838
    %v4148 = vpack.c.b16 %v3842, %v3839
    %v4149 = vpack.c.b16 %v3846, %v3843
    %v4150 = vpack.c.b16 %v3847, %v3844
    %v4151 = vpack.c.b16 %v3848, %v3845
    %v4152 = vpack.c.b16 %v3852, %v3849
    %v4153 = vpack.c.b16 %v3853, %v3850
    %v4154 = vpack.c.b16 %v3854, %v3851
    %v4155 = vpack.c.b16 %v3858, %v3855
    %v4156 = vpack.c.b16 %v3859, %v3856
    %v4157 = vpack.c.b16 %v3860, %v3857
    %v4158 = vpack.c.b16 %v3864, %v3861
    %v4159 = vpack.c.b16 %v3865, %v3862
    %v4160 = vpack.c.b16 %v3866, %v3863
    %v4161 = vpack.c.b16 %v3870, %v3867
    %v4162 = vpack.c.b16 %v3871, %v3868
    %v4163 = vpack.c.b16 %v3872, %v3869
    %v4164 = vpack.c.b16 %v3876, %v3873
    %v4165 = vpack.c.b16 %v3877, %v3874
    %v4166 = vpack.c.b16 %v3878, %v3875
    %4455 = vmatpush.bf16.xpose.msra.mxu0 %v3900
    %4456 = vmatpush.bf16.xpose.msra.mxu0 %v3897
    %4457 = vmatpush.bf16.xpose.msra.mxu0 %v3894
    %4458 = vmatpush.bf16.xpose.msra.mxu0 %v3891
    %4459 = vmatpush.bf16.xpose.msra.mxu0 %v3888
    %4460 = vmatpush.bf16.xpose.msra.mxu0 %v3885
    %4461 = vmatpush.bf16.xpose.msra.mxu0 %v3882
    %4462 = vmatpush.bf16.xpose.msra.mxu0 %v3879
    %4463 = vmatmul.bf16.gmra.mxu0 %v489
    %v4464 = vpop.f32.mrf.mxu0
    %v4465 = vadd.f32 0.0, %v4464
    %v4466 = vpop.f32.mrf.mxu0
    %v4467 = vadd.f32 0.0, %v4466
    %4468 = vdwg.mxu0
    %4469 = vmatpush.bf16.xpose.msra.mxu0 %v3901
    %4470 = vmatpush.bf16.xpose.msra.mxu0 %v3898
    %4471 = vmatpush.bf16.xpose.msra.mxu0 %v3895
    %4472 = vmatpush.bf16.xpose.msra.mxu0 %v3892
    %4473 = vmatpush.bf16.xpose.msra.mxu0 %v3889
    %4474 = vmatpush.bf16.xpose.msra.mxu0 %v3886
    %4475 = vmatpush.bf16.xpose.msra.mxu0 %v3883
    %4476 = vmatpush.bf16.xpose.msra.mxu0 %v3880
    %4477 = vmatmul.bf16.gmra.mxu0 %v490
    %v4478 = vpop.f32.mrf.mxu0
    %v4479 = vadd.f32 %v4465, %v4478
    %v4480 = vpop.f32.mrf.mxu0
    %v4481 = vadd.f32 %v4467, %v4480
    %4482 = vdwg.mxu0
    %4483 = vmatpush.bf16.xpose.msra.mxu0 %v3902
    %4484 = vmatpush.bf16.xpose.msra.mxu0 %v3899
    %4485 = vmatpush.bf16.xpose.msra.mxu0 %v3896
    %4486 = vmatpush.bf16.xpose.msra.mxu0 %v3893
    %4487 = vmatpush.bf16.xpose.msra.mxu0 %v3890
    %4488 = vmatpush.bf16.xpose.msra.mxu0 %v3887
    %4489 = vmatpush.bf16.xpose.msra.mxu0 %v3884
    %4490 = vmatpush.bf16.xpose.msra.mxu0 %v3881
    %4491 = vmatmul.bf16.gmra.mxu0 %v491
    %v4492 = vpop.f32.mrf.mxu0
    %v4493 = vadd.f32 %v4479, %v4492
    %v4494 = vpop.f32.mrf.mxu0
    %v4495 = vadd.f32 %v4481, %v4494
    %4496 = vdwg.mxu0
    %4497 = vmatpush.bf16.xpose.msra.mxu0 %v3924
    %4498 = vmatpush.bf16.xpose.msra.mxu0 %v3921
    %4499 = vmatpush.bf16.xpose.msra.mxu0 %v3918
    %4500 = vmatpush.bf16.xpose.msra.mxu0 %v3915
    %4501 = vmatpush.bf16.xpose.msra.mxu0 %v3912
    %4502 = vmatpush.bf16.xpose.msra.mxu0 %v3909
    %4503 = vmatpush.bf16.xpose.msra.mxu0 %v3906
    %4504 = vmatpush.bf16.xpose.msra.mxu0 %v3903
    %4505 = vmatmul.bf16.gmra.mxu0 %v489
    %v4506 = vpop.f32.mrf.mxu0
    %v4507 = vadd.f32 0.0, %v4506
    %v4508 = vpop.f32.mrf.mxu0
    %v4509 = vadd.f32 0.0, %v4508
    %4510 = vdwg.mxu0
    %4511 = vmatpush.bf16.xpose.msra.mxu0 %v3925
    %4512 = vmatpush.bf16.xpose.msra.mxu0 %v3922
    %4513 = vmatpush.bf16.xpose.msra.mxu0 %v3919
    %4514 = vmatpush.bf16.xpose.msra.mxu0 %v3916
    %4515 = vmatpush.bf16.xpose.msra.mxu0 %v3913
    %4516 = vmatpush.bf16.xpose.msra.mxu0 %v3910
    %4517 = vmatpush.bf16.xpose.msra.mxu0 %v3907
    %4518 = vmatpush.bf16.xpose.msra.mxu0 %v3904
    %4519 = vmatmul.bf16.gmra.mxu0 %v490
    %v4520 = vpop.f32.mrf.mxu0
    %v4521 = vadd.f32 %v4507, %v4520
    %v4522 = vpop.f32.mrf.mxu0
    %v4523 = vadd.f32 %v4509, %v4522
    %4524 = vdwg.mxu0
    %4525 = vmatpush.bf16.xpose.msra.mxu0 %v3926
    %4526 = vmatpush.bf16.xpose.msra.mxu0 %v3923
    %4527 = vmatpush.bf16.xpose.msra.mxu0 %v3920
    %4528 = vmatpush.bf16.xpose.msra.mxu0 %v3917
    %4529 = vmatpush.bf16.xpose.msra.mxu0 %v3914
    %4530 = vmatpush.bf16.xpose.msra.mxu0 %v3911
    %4531 = vmatpush.bf16.xpose.msra.mxu0 %v3908
    %4532 = vmatpush.bf16.xpose.msra.mxu0 %v3905
    %4533 = vmatmul.bf16.gmra.mxu0 %v491
    %v4534 = vpop.f32.mrf.mxu0
    %v4535 = vadd.f32 %v4521, %v4534
    %v4536 = vpop.f32.mrf.mxu0
    %v4537 = vadd.f32 %v4523, %v4536
    %4538 = vdwg.mxu0
    %4539 = vmatpush.bf16.xpose.msra.mxu0 %v3948
    %4540 = vmatpush.bf16.xpose.msra.mxu0 %v3945
    %4541 = vmatpush.bf16.xpose.msra.mxu0 %v3942
    %4542 = vmatpush.bf16.xpose.msra.mxu0 %v3939
    %4543 = vmatpush.bf16.xpose.msra.mxu0 %v3936
    %4544 = vmatpush.bf16.xpose.msra.mxu0 %v3933
    %4545 = vmatpush.bf16.xpose.msra.mxu0 %v3930
    %4546 = vmatpush.bf16.xpose.msra.mxu0 %v3927
    %4547 = vmatmul.bf16.gmra.mxu0 %v489
    %v4548 = vpop.f32.mrf.mxu0
    %v4549 = vadd.f32 0.0, %v4548
    %v4550 = vpop.f32.mrf.mxu0
    %v4551 = vadd.f32 0.0, %v4550
    %4552 = vdwg.mxu0
    %4553 = vmatpush.bf16.xpose.msra.mxu0 %v3949
    %4554 = vmatpush.bf16.xpose.msra.mxu0 %v3946
    %4555 = vmatpush.bf16.xpose.msra.mxu0 %v3943
    %4556 = vmatpush.bf16.xpose.msra.mxu0 %v3940
    %4557 = vmatpush.bf16.xpose.msra.mxu0 %v3937
    %4558 = vmatpush.bf16.xpose.msra.mxu0 %v3934
    %4559 = vmatpush.bf16.xpose.msra.mxu0 %v3931
    %4560 = vmatpush.bf16.xpose.msra.mxu0 %v3928
    %4561 = vmatmul.bf16.gmra.mxu0 %v490
    %v4562 = vpop.f32.mrf.mxu0
    %v4563 = vadd.f32 %v4549, %v4562
    %v4564 = vpop.f32.mrf.mxu0
    %v4565 = vadd.f32 %v4551, %v4564
    %4566 = vdwg.mxu0
    %4567 = vmatpush.bf16.xpose.msra.mxu0 %v3950
    %4568 = vmatpush.bf16.xpose.msra.mxu0 %v3947
    %4569 = vmatpush.bf16.xpose.msra.mxu0 %v3944
    %4570 = vmatpush.bf16.xpose.msra.mxu0 %v3941
    %4571 = vmatpush.bf16.xpose.msra.mxu0 %v3938
    %4572 = vmatpush.bf16.xpose.msra.mxu0 %v3935
    %4573 = vmatpush.bf16.xpose.msra.mxu0 %v3932
    %4574 = vmatpush.bf16.xpose.msra.mxu0 %v3929
    %4575 = vmatmul.bf16.gmra.mxu0 %v491
    %v4576 = vpop.f32.mrf.mxu0
    %v4577 = vadd.f32 %v4563, %v4576
    %v4578 = vpop.f32.mrf.mxu0
    %v4579 = vadd.f32 %v4565, %v4578
    %4580 = vdwg.mxu0
    %4581 = vmatpush.bf16.xpose.msra.mxu0 %v3972
    %4582 = vmatpush.bf16.xpose.msra.mxu0 %v3969
    %4583 = vmatpush.bf16.xpose.msra.mxu0 %v3966
    %4584 = vmatpush.bf16.xpose.msra.mxu0 %v3963
    %4585 = vmatpush.bf16.xpose.msra.mxu0 %v3960
    %4586 = vmatpush.bf16.xpose.msra.mxu0 %v3957
    %4587 = vmatpush.bf16.xpose.msra.mxu0 %v3954
    %4588 = vmatpush.bf16.xpose.msra.mxu0 %v3951
    %4589 = vmatmul.bf16.gmra.mxu0 %v489
    %v4590 = vpop.f32.mrf.mxu0
    %v4591 = vadd.f32 0.0, %v4590
    %v4592 = vpop.f32.mrf.mxu0
    %v4593 = vadd.f32 0.0, %v4592
    %4594 = vdwg.mxu0
    %4595 = vmatpush.bf16.xpose.msra.mxu0 %v3973
    %4596 = vmatpush.bf16.xpose.msra.mxu0 %v3970
    %4597 = vmatpush.bf16.xpose.msra.mxu0 %v3967
    %4598 = vmatpush.bf16.xpose.msra.mxu0 %v3964
    %4599 = vmatpush.bf16.xpose.msra.mxu0 %v3961
    %4600 = vmatpush.bf16.xpose.msra.mxu0 %v3958
    %4601 = vmatpush.bf16.xpose.msra.mxu0 %v3955
    %4602 = vmatpush.bf16.xpose.msra.mxu0 %v3952
    %4603 = vmatmul.bf16.gmra.mxu0 %v490
    %v4604 = vpop.f32.mrf.mxu0
    %v4605 = vadd.f32 %v4591, %v4604
    %v4606 = vpop.f32.mrf.mxu0
    %v4607 = vadd.f32 %v4593, %v4606
    %4608 = vdwg.mxu0
    %4609 = vmatpush.bf16.xpose.msra.mxu0 %v3974
    %4610 = vmatpush.bf16.xpose.msra.mxu0 %v3971
    %4611 = vmatpush.bf16.xpose.msra.mxu0 %v3968
    %4612 = vmatpush.bf16.xpose.msra.mxu0 %v3965
    %4613 = vmatpush.bf16.xpose.msra.mxu0 %v3962
    %4614 = vmatpush.bf16.xpose.msra.mxu0 %v3959
    %4615 = vmatpush.bf16.xpose.msra.mxu0 %v3956
    %4616 = vmatpush.bf16.xpose.msra.mxu0 %v3953
    %4617 = vmatmul.bf16.gmra.mxu0 %v491
    %v4618 = vpop.f32.mrf.mxu0
    %v4619 = vadd.f32 %v4605, %v4618
    %v4620 = vpop.f32.mrf.mxu0
    %v4621 = vadd.f32 %v4607, %v4620
    %4622 = vdwg.mxu0
    %4623 = vmatpush.bf16.xpose.msra.mxu0 %v3996
    %4624 = vmatpush.bf16.xpose.msra.mxu0 %v3993
    %4625 = vmatpush.bf16.xpose.msra.mxu0 %v3990
    %4626 = vmatpush.bf16.xpose.msra.mxu0 %v3987
    %4627 = vmatpush.bf16.xpose.msra.mxu0 %v3984
    %4628 = vmatpush.bf16.xpose.msra.mxu0 %v3981
    %4629 = vmatpush.bf16.xpose.msra.mxu0 %v3978
    %4630 = vmatpush.bf16.xpose.msra.mxu0 %v3975
    %4631 = vmatmul.bf16.gmra.mxu0 %v489
    %v4632 = vpop.f32.mrf.mxu0
    %v4633 = vadd.f32 0.0, %v4632
    %v4634 = vpop.f32.mrf.mxu0
    %v4635 = vadd.f32 0.0, %v4634
    %4636 = vdwg.mxu0
    %4637 = vmatpush.bf16.xpose.msra.mxu0 %v3997
    %4638 = vmatpush.bf16.xpose.msra.mxu0 %v3994
    %4639 = vmatpush.bf16.xpose.msra.mxu0 %v3991
    %4640 = vmatpush.bf16.xpose.msra.mxu0 %v3988
    %4641 = vmatpush.bf16.xpose.msra.mxu0 %v3985
    %4642 = vmatpush.bf16.xpose.msra.mxu0 %v3982
    %4643 = vmatpush.bf16.xpose.msra.mxu0 %v3979
    %4644 = vmatpush.bf16.xpose.msra.mxu0 %v3976
    %4645 = vmatmul.bf16.gmra.mxu0 %v490
    %v4646 = vpop.f32.mrf.mxu0
    %v4647 = vadd.f32 %v4633, %v4646
    %v4648 = vpop.f32.mrf.mxu0
    %v4649 = vadd.f32 %v4635, %v4648
    %4650 = vdwg.mxu0
    %4651 = vmatpush.bf16.xpose.msra.mxu0 %v3998
    %4652 = vmatpush.bf16.xpose.msra.mxu0 %v3995
    %4653 = vmatpush.bf16.xpose.msra.mxu0 %v3992
    %4654 = vmatpush.bf16.xpose.msra.mxu0 %v3989
    %4655 = vmatpush.bf16.xpose.msra.mxu0 %v3986
    %4656 = vmatpush.bf16.xpose.msra.mxu0 %v3983
    %4657 = vmatpush.bf16.xpose.msra.mxu0 %v3980
    %4658 = vmatpush.bf16.xpose.msra.mxu0 %v3977
    %4659 = vmatmul.bf16.gmra.mxu0 %v491
    %v4660 = vpop.f32.mrf.mxu0
    %v4661 = vadd.f32 %v4647, %v4660
    %v4662 = vpop.f32.mrf.mxu0
    %v4663 = vadd.f32 %v4649, %v4662
    %4664 = vdwg.mxu0
    %4665 = vmatpush.bf16.xpose.msra.mxu0 %v4020
    %4666 = vmatpush.bf16.xpose.msra.mxu0 %v4017
    %4667 = vmatpush.bf16.xpose.msra.mxu0 %v4014
    %4668 = vmatpush.bf16.xpose.msra.mxu0 %v4011
    %4669 = vmatpush.bf16.xpose.msra.mxu0 %v4008
    %4670 = vmatpush.bf16.xpose.msra.mxu0 %v4005
    %4671 = vmatpush.bf16.xpose.msra.mxu0 %v4002
    %4672 = vmatpush.bf16.xpose.msra.mxu0 %v3999
    %4673 = vmatmul.bf16.gmra.mxu0 %v489
    %v4674 = vpop.f32.mrf.mxu0
    %v4675 = vadd.f32 0.0, %v4674
    %v4676 = vpop.f32.mrf.mxu0
    %v4677 = vadd.f32 0.0, %v4676
    %4678 = vdwg.mxu0
    %4679 = vmatpush.bf16.xpose.msra.mxu0 %v4021
    %4680 = vmatpush.bf16.xpose.msra.mxu0 %v4018
    %4681 = vmatpush.bf16.xpose.msra.mxu0 %v4015
    %4682 = vmatpush.bf16.xpose.msra.mxu0 %v4012
    %4683 = vmatpush.bf16.xpose.msra.mxu0 %v4009
    %4684 = vmatpush.bf16.xpose.msra.mxu0 %v4006
    %4685 = vmatpush.bf16.xpose.msra.mxu0 %v4003
    %4686 = vmatpush.bf16.xpose.msra.mxu0 %v4000
    %4687 = vmatmul.bf16.gmra.mxu0 %v490
    %v4688 = vpop.f32.mrf.mxu0
    %v4689 = vadd.f32 %v4675, %v4688
    %v4690 = vpop.f32.mrf.mxu0
    %v4691 = vadd.f32 %v4677, %v4690
    %4692 = vdwg.mxu0
    %4693 = vmatpush.bf16.xpose.msra.mxu0 %v4022
    %4694 = vmatpush.bf16.xpose.msra.mxu0 %v4019
    %4695 = vmatpush.bf16.xpose.msra.mxu0 %v4016
    %4696 = vmatpush.bf16.xpose.msra.mxu0 %v4013
    %4697 = vmatpush.bf16.xpose.msra.mxu0 %v4010
    %4698 = vmatpush.bf16.xpose.msra.mxu0 %v4007
    %4699 = vmatpush.bf16.xpose.msra.mxu0 %v4004
    %4700 = vmatpush.bf16.xpose.msra.mxu0 %v4001
    %4701 = vmatmul.bf16.gmra.mxu0 %v491
    %v4702 = vpop.f32.mrf.mxu0
    %v4703 = vadd.f32 %v4689, %v4702
    %v4704 = vpop.f32.mrf.mxu0
    %v4705 = vadd.f32 %v4691, %v4704
    %4706 = vdwg.mxu0
    %4707 = vmatpush.bf16.xpose.msra.mxu0 %v4044
    %4708 = vmatpush.bf16.xpose.msra.mxu0 %v4041
    %4709 = vmatpush.bf16.xpose.msra.mxu0 %v4038
    %4710 = vmatpush.bf16.xpose.msra.mxu0 %v4035
    %4711 = vmatpush.bf16.xpose.msra.mxu0 %v4032
    %4712 = vmatpush.bf16.xpose.msra.mxu0 %v4029
    %4713 = vmatpush.bf16.xpose.msra.mxu0 %v4026
    %4714 = vmatpush.bf16.xpose.msra.mxu0 %v4023
    %4715 = vmatmul.bf16.gmra.mxu0 %v489
    %v4716 = vpop.f32.mrf.mxu0
    %v4717 = vadd.f32 0.0, %v4716
    %v4718 = vpop.f32.mrf.mxu0
    %v4719 = vadd.f32 0.0, %v4718
    %4720 = vdwg.mxu0
    %4721 = vmatpush.bf16.xpose.msra.mxu0 %v4045
    %4722 = vmatpush.bf16.xpose.msra.mxu0 %v4042
    %4723 = vmatpush.bf16.xpose.msra.mxu0 %v4039
    %4724 = vmatpush.bf16.xpose.msra.mxu0 %v4036
    %4725 = vmatpush.bf16.xpose.msra.mxu0 %v4033
    %4726 = vmatpush.bf16.xpose.msra.mxu0 %v4030
    %4727 = vmatpush.bf16.xpose.msra.mxu0 %v4027
    %4728 = vmatpush.bf16.xpose.msra.mxu0 %v4024
    %4729 = vmatmul.bf16.gmra.mxu0 %v490
    %v4730 = vpop.f32.mrf.mxu0
    %v4731 = vadd.f32 %v4717, %v4730
    %v4732 = vpop.f32.mrf.mxu0
    %v4733 = vadd.f32 %v4719, %v4732
    %4734 = vdwg.mxu0
    %4735 = vmatpush.bf16.xpose.msra.mxu0 %v4046
    %4736 = vmatpush.bf16.xpose.msra.mxu0 %v4043
    %4737 = vmatpush.bf16.xpose.msra.mxu0 %v4040
    %4738 = vmatpush.bf16.xpose.msra.mxu0 %v4037
    %4739 = vmatpush.bf16.xpose.msra.mxu0 %v4034
    %4740 = vmatpush.bf16.xpose.msra.mxu0 %v4031
    %4741 = vmatpush.bf16.xpose.msra.mxu0 %v4028
    %4742 = vmatpush.bf16.xpose.msra.mxu0 %v4025
    %4743 = vmatmul.bf16.gmra.mxu0 %v491
    %v4744 = vpop.f32.mrf.mxu0
    %v4745 = vadd.f32 %v4731, %v4744
    %v4746 = vpop.f32.mrf.mxu0
    %v4747 = vadd.f32 %v4733, %v4746
    %4748 = vdwg.mxu0
    %4749 = vmatpush.bf16.xpose.msra.mxu0 %v4068
    %4750 = vmatpush.bf16.xpose.msra.mxu0 %v4065
    %4751 = vmatpush.bf16.xpose.msra.mxu0 %v4062
    %4752 = vmatpush.bf16.xpose.msra.mxu0 %v4059
    %4753 = vmatpush.bf16.xpose.msra.mxu0 %v4056
    %4754 = vmatpush.bf16.xpose.msra.mxu0 %v4053
    %4755 = vmatpush.bf16.xpose.msra.mxu0 %v4050
    %4756 = vmatpush.bf16.xpose.msra.mxu0 %v4047
    %4757 = vmatmul.bf16.gmra.mxu0 %v489
    %v4758 = vpop.f32.mrf.mxu0
    %v4759 = vadd.f32 0.0, %v4758
    %v4760 = vpop.f32.mrf.mxu0
    %v4761 = vadd.f32 0.0, %v4760
    %4762 = vdwg.mxu0
    %4763 = vmatpush.bf16.xpose.msra.mxu0 %v4069
    %4764 = vmatpush.bf16.xpose.msra.mxu0 %v4066
    %4765 = vmatpush.bf16.xpose.msra.mxu0 %v4063
    %4766 = vmatpush.bf16.xpose.msra.mxu0 %v4060
    %4767 = vmatpush.bf16.xpose.msra.mxu0 %v4057
    %4768 = vmatpush.bf16.xpose.msra.mxu0 %v4054
    %4769 = vmatpush.bf16.xpose.msra.mxu0 %v4051
    %4770 = vmatpush.bf16.xpose.msra.mxu0 %v4048
    %4771 = vmatmul.bf16.gmra.mxu0 %v490
    %v4772 = vpop.f32.mrf.mxu0
    %v4773 = vadd.f32 %v4759, %v4772
    %v4774 = vpop.f32.mrf.mxu0
    %v4775 = vadd.f32 %v4761, %v4774
    %4776 = vdwg.mxu0
    %4777 = vmatpush.bf16.xpose.msra.mxu0 %v4070
    %4778 = vmatpush.bf16.xpose.msra.mxu0 %v4067
    %4779 = vmatpush.bf16.xpose.msra.mxu0 %v4064
    %4780 = vmatpush.bf16.xpose.msra.mxu0 %v4061
    %4781 = vmatpush.bf16.xpose.msra.mxu0 %v4058
    %4782 = vmatpush.bf16.xpose.msra.mxu0 %v4055
    %4783 = vmatpush.bf16.xpose.msra.mxu0 %v4052
    %4784 = vmatpush.bf16.xpose.msra.mxu0 %v4049
    %4785 = vmatmul.bf16.gmra.mxu0 %v491
    %v4786 = vpop.f32.mrf.mxu0
    %v4787 = vadd.f32 %v4773, %v4786
    %v4788 = vpop.f32.mrf.mxu0
    %v4789 = vadd.f32 %v4775, %v4788
    %4790 = vdwg.mxu0
    %4791 = vmatpush.bf16.xpose.msra.mxu0 %v4092
    %4792 = vmatpush.bf16.xpose.msra.mxu0 %v4089
    %4793 = vmatpush.bf16.xpose.msra.mxu0 %v4086
    %4794 = vmatpush.bf16.xpose.msra.mxu0 %v4083
    %4795 = vmatpush.bf16.xpose.msra.mxu0 %v4080
    %4796 = vmatpush.bf16.xpose.msra.mxu0 %v4077
    %4797 = vmatpush.bf16.xpose.msra.mxu0 %v4074
    %4798 = vmatpush.bf16.xpose.msra.mxu0 %v4071
    %4799 = vmatmul.bf16.gmra.mxu0 %v489
    %v4800 = vpop.f32.mrf.mxu0
    %v4801 = vadd.f32 0.0, %v4800
    %v4802 = vpop.f32.mrf.mxu0
    %v4803 = vadd.f32 0.0, %v4802
    %4804 = vdwg.mxu0
    %4805 = vmatpush.bf16.xpose.msra.mxu0 %v4093
    %4806 = vmatpush.bf16.xpose.msra.mxu0 %v4090
    %4807 = vmatpush.bf16.xpose.msra.mxu0 %v4087
    %4808 = vmatpush.bf16.xpose.msra.mxu0 %v4084
    %4809 = vmatpush.bf16.xpose.msra.mxu0 %v4081
    %4810 = vmatpush.bf16.xpose.msra.mxu0 %v4078
    %4811 = vmatpush.bf16.xpose.msra.mxu0 %v4075
    %4812 = vmatpush.bf16.xpose.msra.mxu0 %v4072
    %4813 = vmatmul.bf16.gmra.mxu0 %v490
    %v4814 = vpop.f32.mrf.mxu0
    %v4815 = vadd.f32 %v4801, %v4814
    %v4816 = vpop.f32.mrf.mxu0
    %v4817 = vadd.f32 %v4803, %v4816
    %4818 = vdwg.mxu0
    %4819 = vmatpush.bf16.xpose.msra.mxu0 %v4094
    %4820 = vmatpush.bf16.xpose.msra.mxu0 %v4091
    %4821 = vmatpush.bf16.xpose.msra.mxu0 %v4088
    %4822 = vmatpush.bf16.xpose.msra.mxu0 %v4085
    %4823 = vmatpush.bf16.xpose.msra.mxu0 %v4082
    %4824 = vmatpush.bf16.xpose.msra.mxu0 %v4079
    %4825 = vmatpush.bf16.xpose.msra.mxu0 %v4076
    %4826 = vmatpush.bf16.xpose.msra.mxu0 %v4073
    %4827 = vmatmul.bf16.gmra.mxu0 %v491
    %v4828 = vpop.f32.mrf.mxu0
    %v4829 = vadd.f32 %v4815, %v4828
    %v4830 = vpop.f32.mrf.mxu0
    %v4831 = vadd.f32 %v4817, %v4830
    %4832 = vdwg.mxu0
    %4833 = vmatpush.bf16.xpose.msra.mxu0 %v4116
    %4834 = vmatpush.bf16.xpose.msra.mxu0 %v4113
    %4835 = vmatpush.bf16.xpose.msra.mxu0 %v4110
    %4836 = vmatpush.bf16.xpose.msra.mxu0 %v4107
    %4837 = vmatpush.bf16.xpose.msra.mxu0 %v4104
    %4838 = vmatpush.bf16.xpose.msra.mxu0 %v4101
    %4839 = vmatpush.bf16.xpose.msra.mxu0 %v4098
    %4840 = vmatpush.bf16.xpose.msra.mxu0 %v4095
    %4841 = vmatmul.bf16.gmra.mxu0 %v489
    %v4842 = vpop.f32.mrf.mxu0
    %v4843 = vadd.f32 0.0, %v4842
    %v4844 = vpop.f32.mrf.mxu0
    %v4845 = vadd.f32 0.0, %v4844
    %4846 = vdwg.mxu0
    %4847 = vmatpush.bf16.xpose.msra.mxu0 %v4117
    %4848 = vmatpush.bf16.xpose.msra.mxu0 %v4114
    %4849 = vmatpush.bf16.xpose.msra.mxu0 %v4111
    %4850 = vmatpush.bf16.xpose.msra.mxu0 %v4108
    %4851 = vmatpush.bf16.xpose.msra.mxu0 %v4105
    %4852 = vmatpush.bf16.xpose.msra.mxu0 %v4102
    %4853 = vmatpush.bf16.xpose.msra.mxu0 %v4099
    %4854 = vmatpush.bf16.xpose.msra.mxu0 %v4096
    %4855 = vmatmul.bf16.gmra.mxu0 %v490
    %v4856 = vpop.f32.mrf.mxu0
    %v4857 = vadd.f32 %v4843, %v4856
    %v4858 = vpop.f32.mrf.mxu0
    %v4859 = vadd.f32 %v4845, %v4858
    %4860 = vdwg.mxu0
    %4861 = vmatpush.bf16.xpose.msra.mxu0 %v4118
    %4862 = vmatpush.bf16.xpose.msra.mxu0 %v4115
    %4863 = vmatpush.bf16.xpose.msra.mxu0 %v4112
    %4864 = vmatpush.bf16.xpose.msra.mxu0 %v4109
    %4865 = vmatpush.bf16.xpose.msra.mxu0 %v4106
    %4866 = vmatpush.bf16.xpose.msra.mxu0 %v4103
    %4867 = vmatpush.bf16.xpose.msra.mxu0 %v4100
    %4868 = vmatpush.bf16.xpose.msra.mxu0 %v4097
    %4869 = vmatmul.bf16.gmra.mxu0 %v491
    %v4870 = vpop.f32.mrf.mxu0
    %v4871 = vadd.f32 %v4857, %v4870
    %v4872 = vpop.f32.mrf.mxu0
    %v4873 = vadd.f32 %v4859, %v4872
    %4874 = vdwg.mxu0
    %4875 = vmatpush.bf16.xpose.msra.mxu0 %v4140
    %4876 = vmatpush.bf16.xpose.msra.mxu0 %v4137
    %4877 = vmatpush.bf16.xpose.msra.mxu0 %v4134
    %4878 = vmatpush.bf16.xpose.msra.mxu0 %v4131
    %4879 = vmatpush.bf16.xpose.msra.mxu0 %v4128
    %4880 = vmatpush.bf16.xpose.msra.mxu0 %v4125
    %4881 = vmatpush.bf16.xpose.msra.mxu0 %v4122
    %4882 = vmatpush.bf16.xpose.msra.mxu0 %v4119
    %4883 = vmatmul.bf16.gmra.mxu0 %v489
    %v4884 = vpop.f32.mrf.mxu0
    %v4885 = vadd.f32 0.0, %v4884
    %v4886 = vpop.f32.mrf.mxu0
    %v4887 = vadd.f32 0.0, %v4886
    %4888 = vdwg.mxu0
    %4889 = vmatpush.bf16.xpose.msra.mxu0 %v4141
    %4890 = vmatpush.bf16.xpose.msra.mxu0 %v4138
    %4891 = vmatpush.bf16.xpose.msra.mxu0 %v4135
    %4892 = vmatpush.bf16.xpose.msra.mxu0 %v4132
    %4893 = vmatpush.bf16.xpose.msra.mxu0 %v4129
    %4894 = vmatpush.bf16.xpose.msra.mxu0 %v4126
    %4895 = vmatpush.bf16.xpose.msra.mxu0 %v4123
    %4896 = vmatpush.bf16.xpose.msra.mxu0 %v4120
    %4897 = vmatmul.bf16.gmra.mxu0 %v490
    %v4898 = vpop.f32.mrf.mxu0
    %v4899 = vadd.f32 %v4885, %v4898
    %v4900 = vpop.f32.mrf.mxu0
    %v4901 = vadd.f32 %v4887, %v4900
    %4902 = vdwg.mxu0
    %4903 = vmatpush.bf16.xpose.msra.mxu0 %v4142
    %4904 = vmatpush.bf16.xpose.msra.mxu0 %v4139
    %4905 = vmatpush.bf16.xpose.msra.mxu0 %v4136
    %4906 = vmatpush.bf16.xpose.msra.mxu0 %v4133
    %4907 = vmatpush.bf16.xpose.msra.mxu0 %v4130
    %4908 = vmatpush.bf16.xpose.msra.mxu0 %v4127
    %4909 = vmatpush.bf16.xpose.msra.mxu0 %v4124
    %4910 = vmatpush.bf16.xpose.msra.mxu0 %v4121
    %4911 = vmatmul.bf16.gmra.mxu0 %v491
    %v4912 = vpop.f32.mrf.mxu0
    %v4913 = vadd.f32 %v4899, %v4912
    %v4914 = vpop.f32.mrf.mxu0
    %v4915 = vadd.f32 %v4901, %v4914
    %4916 = vdwg.mxu0
    %4917 = vmatpush.bf16.xpose.msra.mxu0 %v4164
    %4918 = vmatpush.bf16.xpose.msra.mxu0 %v4161
    %4919 = vmatpush.bf16.xpose.msra.mxu0 %v4158
    %4920 = vmatpush.bf16.xpose.msra.mxu0 %v4155
    %4921 = vmatpush.bf16.xpose.msra.mxu0 %v4152
    %4922 = vmatpush.bf16.xpose.msra.mxu0 %v4149
    %4923 = vmatpush.bf16.xpose.msra.mxu0 %v4146
    %4924 = vmatpush.bf16.xpose.msra.mxu0 %v4143
    %4925 = vmatmul.bf16.gmra.mxu0 %v489
    %v4926 = vpop.f32.mrf.mxu0
    %v4927 = vadd.f32 0.0, %v4926
    %v4928 = vpop.f32.mrf.mxu0
    %v4929 = vadd.f32 0.0, %v4928
    %4930 = vdwg.mxu0
    %4931 = vmatpush.bf16.xpose.msra.mxu0 %v4165
    %4932 = vmatpush.bf16.xpose.msra.mxu0 %v4162
    %4933 = vmatpush.bf16.xpose.msra.mxu0 %v4159
    %4934 = vmatpush.bf16.xpose.msra.mxu0 %v4156
    %4935 = vmatpush.bf16.xpose.msra.mxu0 %v4153
    %4936 = vmatpush.bf16.xpose.msra.mxu0 %v4150
    %4937 = vmatpush.bf16.xpose.msra.mxu0 %v4147
    %4938 = vmatpush.bf16.xpose.msra.mxu0 %v4144
    %4939 = vmatmul.bf16.gmra.mxu0 %v490
    %v4940 = vpop.f32.mrf.mxu0
    %v4941 = vadd.f32 %v4927, %v4940
    %v4942 = vpop.f32.mrf.mxu0
    %v4943 = vadd.f32 %v4929, %v4942
    %4944 = vdwg.mxu0
    %4945 = vmatpush.bf16.xpose.msra.mxu0 %v4166
    %4946 = vmatpush.bf16.xpose.msra.mxu0 %v4163
    %4947 = vmatpush.bf16.xpose.msra.mxu0 %v4160
    %4948 = vmatpush.bf16.xpose.msra.mxu0 %v4157
    %4949 = vmatpush.bf16.xpose.msra.mxu0 %v4154
    %4950 = vmatpush.bf16.xpose.msra.mxu0 %v4151
    %4951 = vmatpush.bf16.xpose.msra.mxu0 %v4148
    %4952 = vmatpush.bf16.xpose.msra.mxu0 %v4145
    %4953 = vmatmul.bf16.gmra.mxu0 %v491
    %v4954 = vpop.f32.mrf.mxu0
    %v4955 = vadd.f32 %v4941, %v4954
    %v4956 = vpop.f32.mrf.mxu0
    %v4957 = vadd.f32 %v4943, %v4956
    %4958 = vdwg.mxu0
    %v4959 = vsub.f32 0.0, %v2069
    %v4960 = vsub.f32 0.0, %v2111
    %v4961 = vsub.f32 0.0, %v2153
    %v4962 = vsub.f32 0.0, %v2195
    %v4963 = vsub.f32 0.0, %v2237
    %v4964 = vsub.f32 0.0, %v2279
    %v4965 = vsub.f32 0.0, %v2321
    %v4966 = vsub.f32 0.0, %v2363
    %v4967 = vsub.f32 0.0, %v2405
    %v4968 = vsub.f32 0.0, %v2447
    %v4969 = vsub.f32 0.0, %v2489
    %v4970 = vsub.f32 0.0, %v2531
    %v4971 = vsub.f32 0.0, %v2071
    %v4972 = vsub.f32 0.0, %v2113
    %v4973 = vsub.f32 0.0, %v2155
    %v4974 = vsub.f32 0.0, %v2197
    %v4975 = vsub.f32 0.0, %v2239
    %v4976 = vsub.f32 0.0, %v2281
    %v4977 = vsub.f32 0.0, %v2323
    %v4978 = vsub.f32 0.0, %v2365
    %v4979 = vsub.f32 0.0, %v2407
    %v4980 = vsub.f32 0.0, %v2449
    %v4981 = vsub.f32 0.0, %v2491
    %v4982 = vsub.f32 0.0, %v2533
    %v4983 = vmin.f32 %v4959, 80.0
    %v4984 = vmin.f32 %v4960, 80.0
    %v4985 = vmin.f32 %v4961, 80.0
    %v4986 = vmin.f32 %v4962, 80.0
    %v4987 = vmin.f32 %v4963, 80.0
    %v4988 = vmin.f32 %v4964, 80.0
    %v4989 = vmin.f32 %v4965, 80.0
    %v4990 = vmin.f32 %v4966, 80.0
    %v4991 = vmin.f32 %v4967, 80.0
    %v4992 = vmin.f32 %v4968, 80.0
    %v4993 = vmin.f32 %v4969, 80.0
    %v4994 = vmin.f32 %v4970, 80.0
    %v4995 = vmin.f32 %v4971, 80.0
    %v4996 = vmin.f32 %v4972, 80.0
    %v4997 = vmin.f32 %v4973, 80.0
    %v4998 = vmin.f32 %v4974, 80.0
    %v4999 = vmin.f32 %v4975, 80.0
    %v5000 = vmin.f32 %v4976, 80.0
    %v5001 = vmin.f32 %v4977, 80.0
    %v5002 = vmin.f32 %v4978, 80.0
    %v5003 = vmin.f32 %v4979, 80.0
    %v5004 = vmin.f32 %v4980, 80.0
    %v5005 = vmin.f32 %v4981, 80.0
    %v5006 = vmin.f32 %v4982, 80.0
    %v5007 = vmul.f32 %v4983, 1.442695
    %v5008 = vpow.pop %v5007
    %v5009 = vmul.f32 %v4984, 1.442695
    %v5010 = vpow.pop %v5009
    %v5011 = vmul.f32 %v4985, 1.442695
    %v5012 = vpow.pop %v5011
    %v5013 = vmul.f32 %v4986, 1.442695
    %v5014 = vpow.pop %v5013
    %v5015 = vmul.f32 %v4987, 1.442695
    %v5016 = vpow.pop %v5015
    %v5017 = vmul.f32 %v4988, 1.442695
    %v5018 = vpow.pop %v5017
    %v5019 = vmul.f32 %v4989, 1.442695
    %v5020 = vpow.pop %v5019
    %v5021 = vmul.f32 %v4990, 1.442695
    %v5022 = vpow.pop %v5021
    %v5023 = vmul.f32 %v4991, 1.442695
    %v5024 = vpow.pop %v5023
    %v5025 = vmul.f32 %v4992, 1.442695
    %v5026 = vpow.pop %v5025
    %v5027 = vmul.f32 %v4993, 1.442695
    %v5028 = vpow.pop %v5027
    %v5029 = vmul.f32 %v4994, 1.442695
    %v5030 = vpow.pop %v5029
    %v5031 = vmul.f32 %v4995, 1.442695
    %v5032 = vpow.pop %v5031
    %v5033 = vmul.f32 %v4996, 1.442695
    %v5034 = vpow.pop %v5033
    %v5035 = vmul.f32 %v4997, 1.442695
    %v5036 = vpow.pop %v5035
    %v5037 = vmul.f32 %v4998, 1.442695
    %v5038 = vpow.pop %v5037
    %v5039 = vmul.f32 %v4999, 1.442695
    %v5040 = vpow.pop %v5039
    %v5041 = vmul.f32 %v5000, 1.442695
    %v5042 = vpow.pop %v5041
    %v5043 = vmul.f32 %v5001, 1.442695
    %v5044 = vpow.pop %v5043
    %v5045 = vmul.f32 %v5002, 1.442695
    %v5046 = vpow.pop %v5045
    %v5047 = vmul.f32 %v5003, 1.442695
    %v5048 = vpow.pop %v5047
    %v5049 = vmul.f32 %v5004, 1.442695
    %v5050 = vpow.pop %v5049
    %v5051 = vmul.f32 %v5005, 1.442695
    %v5052 = vpow.pop %v5051
    %v5053 = vmul.f32 %v5006, 1.442695
    %v5054 = vpow.pop %v5053
    %v5055 = vadd.f32 %v5008, 1.0
    %v5056 = vadd.f32 %v5010, 1.0
    %v5057 = vadd.f32 %v5012, 1.0
    %v5058 = vadd.f32 %v5014, 1.0
    %v5059 = vadd.f32 %v5016, 1.0
    %v5060 = vadd.f32 %v5018, 1.0
    %v5061 = vadd.f32 %v5020, 1.0
    %v5062 = vadd.f32 %v5022, 1.0
    %v5063 = vadd.f32 %v5024, 1.0
    %v5064 = vadd.f32 %v5026, 1.0
    %v5065 = vadd.f32 %v5028, 1.0
    %v5066 = vadd.f32 %v5030, 1.0
    %v5067 = vadd.f32 %v5032, 1.0
    %v5068 = vadd.f32 %v5034, 1.0
    %v5069 = vadd.f32 %v5036, 1.0
    %v5070 = vadd.f32 %v5038, 1.0
    %v5071 = vadd.f32 %v5040, 1.0
    %v5072 = vadd.f32 %v5042, 1.0
    %v5073 = vadd.f32 %v5044, 1.0
    %v5074 = vadd.f32 %v5046, 1.0
    %v5075 = vadd.f32 %v5048, 1.0
    %v5076 = vadd.f32 %v5050, 1.0
    %v5077 = vadd.f32 %v5052, 1.0
    %v5078 = vadd.f32 %v5054, 1.0
    %v5079 = vrcp.pop %v5055
    %v5080 = vrcp.pop %v5056
    %v5081 = vrcp.pop %v5057
    %v5082 = vrcp.pop %v5058
    %v5083 = vrcp.pop %v5059
    %v5084 = vrcp.pop %v5060
    %v5085 = vrcp.pop %v5061
    %v5086 = vrcp.pop %v5062
    %v5087 = vrcp.pop %v5063
    %v5088 = vrcp.pop %v5064
    %v5089 = vrcp.pop %v5065
    %v5090 = vrcp.pop %v5066
    %v5091 = vrcp.pop %v5067
    %v5092 = vrcp.pop %v5068
    %v5093 = vrcp.pop %v5069
    %v5094 = vrcp.pop %v5070
    %v5095 = vrcp.pop %v5071
    %v5096 = vrcp.pop %v5072
    %v5097 = vrcp.pop %v5073
    %v5098 = vrcp.pop %v5074
    %v5099 = vrcp.pop %v5075
    %v5100 = vrcp.pop %v5076
    %v5101 = vrcp.pop %v5077
    %v5102 = vrcp.pop %v5078
    %v5103 = vmul.f32 %v2069, %v5079
    %v5104 = vmul.f32 %v2111, %v5080
    %v5105 = vmul.f32 %v2153, %v5081
    %v5106 = vmul.f32 %v2195, %v5082
    %v5107 = vmul.f32 %v2237, %v5083
    %v5108 = vmul.f32 %v2279, %v5084
    %v5109 = vmul.f32 %v2321, %v5085
    %v5110 = vmul.f32 %v2363, %v5086
    %v5111 = vmul.f32 %v2405, %v5087
    %v5112 = vmul.f32 %v2447, %v5088
    %v5113 = vmul.f32 %v2489, %v5089
    %v5114 = vmul.f32 %v2531, %v5090
    %v5115 = vmul.f32 %v2071, %v5091
    %v5116 = vmul.f32 %v2113, %v5092
    %v5117 = vmul.f32 %v2155, %v5093
    %v5118 = vmul.f32 %v2197, %v5094
    %v5119 = vmul.f32 %v2239, %v5095
    %v5120 = vmul.f32 %v2281, %v5096
    %v5121 = vmul.f32 %v2323, %v5097
    %v5122 = vmul.f32 %v2365, %v5098
    %v5123 = vmul.f32 %v2407, %v5099
    %v5124 = vmul.f32 %v2449, %v5100
    %v5125 = vmul.f32 %v2491, %v5101
    %v5126 = vmul.f32 %v2533, %v5102
    %v5127 = vmul.f32 %v5103, %v4493
    %v5128 = vmul.f32 %v5104, %v4535
    %v5129 = vmul.f32 %v5105, %v4577
    %v5130 = vmul.f32 %v5106, %v4619
    %v5131 = vmul.f32 %v5107, %v4661
    %v5132 = vmul.f32 %v5108, %v4703
    %v5133 = vmul.f32 %v5109, %v4745
    %v5134 = vmul.f32 %v5110, %v4787
    %v5135 = vmul.f32 %v5111, %v4829
    %v5136 = vmul.f32 %v5112, %v4871
    %v5137 = vmul.f32 %v5113, %v4913
    %v5138 = vmul.f32 %v5114, %v4955
    %v5139 = vmul.f32 %v5115, %v4495
    %v5140 = vmul.f32 %v5116, %v4537
    %v5141 = vmul.f32 %v5117, %v4579
    %v5142 = vmul.f32 %v5118, %v4621
    %v5143 = vmul.f32 %v5119, %v4663
    %v5144 = vmul.f32 %v5120, %v4705
    %v5145 = vmul.f32 %v5121, %v4747
    %v5146 = vmul.f32 %v5122, %v4789
    %v5147 = vmul.f32 %v5123, %v4831
    %v5148 = vmul.f32 %v5124, %v4873
    %v5149 = vmul.f32 %v5125, %v4915
    %v5150 = vmul.f32 %v5126, %v4957
    %v5151 = vpack.c.bf16 %v5139, %v5127
    %v5152 = vpack.c.bf16 %v5140, %v5128
    %v5153 = vpack.c.bf16 %v5141, %v5129
    %v5154 = vpack.c.bf16 %v5142, %v5130
    %v5155 = vpack.c.bf16 %v5143, %v5131
    %v5156 = vpack.c.bf16 %v5144, %v5132
    %v5157 = vpack.c.bf16 %v5145, %v5133
    %v5158 = vpack.c.bf16 %v5146, %v5134
    %v5159 = vpack.c.bf16 %v5147, %v5135
    %v5160 = vpack.c.bf16 %v5148, %v5136
    %v5161 = vpack.c.bf16 %v5149, %v5137
    %v5162 = vpack.c.bf16 %v5150, %v5138
    %v5163 = vld [vmem:[#allocation2] sm:$0xff]
    %v5164 = vld [vmem:[#allocation2 + $0x8] sm:$0xff]
    %v5165 = vld [vmem:[#allocation2 + $0x10] sm:$0xff]
    %v5166 = vld [vmem:[#allocation2 + $0x18] sm:$0xff]
    %v5167 = vld [vmem:[#allocation2 + $0x20] sm:$0xff]
    %v5168 = vld [vmem:[#allocation2 + $0x28] sm:$0xff]
    %v5169 = vld [vmem:[#allocation9] sm:$0xff]
    %v5170 = vld [vmem:[#allocation9 + $0x8] sm:$0xf]
    %v5171 = vld [vmem:[#allocation9 + $0xc] sm:$0xff]
    %v5172 = vld [vmem:[#allocation9 + $0x14] sm:$0xf]
    %v5173 = vld [vmem:[#allocation9 + $0x18] sm:$0xff]
    %v5174 = vld [vmem:[#allocation9 + $0x20] sm:$0xf]
    %v5175 = vld [vmem:[#allocation9 + $0x24] sm:$0xff]
    %v5176 = vld [vmem:[#allocation9 + $0x2c] sm:$0xf]
    %v5177 = vld [vmem:[#allocation9 + $0x30] sm:$0xff]
    %v5178 = vld [vmem:[#allocation9 + $0x38] sm:$0xf]
    %v5179 = vld [vmem:[#allocation9 + $0x3c] sm:$0xff]
    %v5180 = vld [vmem:[#allocation9 + $0x44] sm:$0xf]
    %v5181 = vld [vmem:[#allocation9 + $0x48] sm:$0xff]
    %v5182 = vld [vmem:[#allocation9 + $0x50] sm:$0xf]
    %v5183 = vld [vmem:[#allocation9 + $0x54] sm:$0xff]
    %v5184 = vld [vmem:[#allocation9 + $0x5c] sm:$0xf]
    %v5185 = vld [vmem:[#allocation9 + $0x60] sm:$0xff]
    %v5186 = vld [vmem:[#allocation9 + $0x68] sm:$0xf]
    %v5187 = vld [vmem:[#allocation9 + $0x6c] sm:$0xff]
    %v5188 = vld [vmem:[#allocation9 + $0x74] sm:$0xf]
    %v5189 = vld [vmem:[#allocation9 + $0x78] sm:$0xff]
    %v5190 = vld [vmem:[#allocation9 + $0x80] sm:$0xf]
    %v5191 = vld [vmem:[#allocation9 + $0x84] sm:$0xff]
    %v5192 = vld [vmem:[#allocation9 + $0x8c] sm:$0xf]
    %v5193 = vld [vmem:[#allocation9 + $0x90] sm:$0xff]
    %v5194 = vld [vmem:[#allocation9 + $0x98] sm:$0xf]
    %v5195 = vld [vmem:[#allocation9 + $0x9c] sm:$0xff]
    %v5196 = vld [vmem:[#allocation9 + $0xa4] sm:$0xf]
    %v5197 = vld [vmem:[#allocation9 + $0xa8] sm:$0xff]
    %v5198 = vld [vmem:[#allocation9 + $0xb0] sm:$0xf]
    %v5199 = vld [vmem:[#allocation9 + $0xb4] sm:$0xff]
    %v5200 = vld [vmem:[#allocation9 + $0xbc] sm:$0xf]
    %v5201 = vld [vmem:[#allocation9 + $0xc0] sm:$0xff]
    %v5202 = vld [vmem:[#allocation9 + $0xc8] sm:$0xf]
    %v5203 = vld [vmem:[#allocation9 + $0xcc] sm:$0xff]
    %v5204 = vld [vmem:[#allocation9 + $0xd4] sm:$0xf]
    %v5205 = vld [vmem:[#allocation9 + $0xd8] sm:$0xff]
    %v5206 = vld [vmem:[#allocation9 + $0xe0] sm:$0xf]
    %v5207 = vld [vmem:[#allocation9 + $0xe4] sm:$0xff]
    %v5208 = vld [vmem:[#allocation9 + $0xec] sm:$0xf]
    %v5209 = vld [vmem:[#allocation9 + $0xf0] sm:$0xff]
    %v5210 = vld [vmem:[#allocation9 + $0xf8] sm:$0xf]
    %v5211 = vld [vmem:[#allocation9 + $0xfc] sm:$0xff]
    %v5212 = vld [vmem:[#allocation9 + $0x104] sm:$0xf]
    %v5213 = vld [vmem:[#allocation9 + $0x108] sm:$0xff]
    %v5214 = vld [vmem:[#allocation9 + $0x110] sm:$0xf]
    %v5215 = vld [vmem:[#allocation9 + $0x114] sm:$0xff]
    %v5216 = vld [vmem:[#allocation9 + $0x11c] sm:$0xf]
    %v5217 = vld [vmem:[#allocation9 + $0x120] sm:$0xff]
    %v5218 = vld [vmem:[#allocation9 + $0x128] sm:$0xf]
    %v5219 = vld [vmem:[#allocation9 + $0x12c] sm:$0xff]
    %v5220 = vld [vmem:[#allocation9 + $0x134] sm:$0xf]
    %v5221 = vld [vmem:[#allocation9 + $0x138] sm:$0xff]
    %v5222 = vld [vmem:[#allocation9 + $0x140] sm:$0xf]
    %v5223 = vld [vmem:[#allocation9 + $0x144] sm:$0xff]
    %v5224 = vld [vmem:[#allocation9 + $0x14c] sm:$0xf]
    %v5225 = vld [vmem:[#allocation9 + $0x150] sm:$0xff]
    %v5226 = vld [vmem:[#allocation9 + $0x158] sm:$0xf]
    %v5227 = vld [vmem:[#allocation9 + $0x15c] sm:$0xff]
    %v5228 = vld [vmem:[#allocation9 + $0x164] sm:$0xf]
    %v5229 = vld [vmem:[#allocation9 + $0x168] sm:$0xff]
    %v5230 = vld [vmem:[#allocation9 + $0x170] sm:$0xf]
    %v5231 = vld [vmem:[#allocation9 + $0x174] sm:$0xff]
    %v5232 = vld [vmem:[#allocation9 + $0x17c] sm:$0xf]
    %v5233 = vld [vmem:[#allocation9 + $0x180] sm:$0xff]
    %v5234 = vld [vmem:[#allocation9 + $0x188] sm:$0xf]
    %v5235 = vld [vmem:[#allocation9 + $0x18c] sm:$0xff]
    %v5236 = vld [vmem:[#allocation9 + $0x194] sm:$0xf]
    %v5237 = vld [vmem:[#allocation9 + $0x198] sm:$0xff]
    %v5238 = vld [vmem:[#allocation9 + $0x1a0] sm:$0xf]
    %v5239 = vld [vmem:[#allocation9 + $0x1a4] sm:$0xff]
    %v5240 = vld [vmem:[#allocation9 + $0x1ac] sm:$0xf]
    %v5241 = vld [vmem:[#allocation9 + $0x1b0] sm:$0xff]
    %v5242 = vld [vmem:[#allocation9 + $0x1b8] sm:$0xf]
    %v5243 = vld [vmem:[#allocation9 + $0x1bc] sm:$0xff]
    %v5244 = vld [vmem:[#allocation9 + $0x1c4] sm:$0xf]
    %v5245 = vld [vmem:[#allocation9 + $0x1c8] sm:$0xff]
    %v5246 = vld [vmem:[#allocation9 + $0x1d0] sm:$0xf]
    %v5247 = vld [vmem:[#allocation9 + $0x1d4] sm:$0xff]
    %v5248 = vld [vmem:[#allocation9 + $0x1dc] sm:$0xf]
    %v5249 = vld [vmem:[#allocation9 + $0x1e0] sm:$0xff]
    %v5250 = vld [vmem:[#allocation9 + $0x1e8] sm:$0xf]
    %v5251 = vld [vmem:[#allocation9 + $0x1ec] sm:$0xff]
    %v5252 = vld [vmem:[#allocation9 + $0x1f4] sm:$0xf]
    %v5253 = vld [vmem:[#allocation9 + $0x1f8] sm:$0xff]
    %v5254 = vld [vmem:[#allocation9 + $0x200] sm:$0xf]
    %v5255 = vld [vmem:[#allocation9 + $0x204] sm:$0xff]
    %v5256 = vld [vmem:[#allocation9 + $0x20c] sm:$0xf]
    %v5257 = vld [vmem:[#allocation9 + $0x210] sm:$0xff]
    %v5258 = vld [vmem:[#allocation9 + $0x218] sm:$0xf]
    %v5259 = vld [vmem:[#allocation9 + $0x21c] sm:$0xff]
    %v5260 = vld [vmem:[#allocation9 + $0x224] sm:$0xf]
    %v5261 = vld [vmem:[#allocation9 + $0x228] sm:$0xff]
    %v5262 = vld [vmem:[#allocation9 + $0x230] sm:$0xf]
    %v5263 = vld [vmem:[#allocation9 + $0x234] sm:$0xff]
    %v5264 = vld [vmem:[#allocation9 + $0x23c] sm:$0xf]
    %v5265 = vld [vmem:[#allocation9 + $0x240] sm:$0xff]
    %v5266 = vld [vmem:[#allocation9 + $0x248] sm:$0xf]
    %v5267 = vld [vmem:[#allocation9 + $0x24c] sm:$0xff]
    %v5268 = vld [vmem:[#allocation9 + $0x254] sm:$0xf]
    %v5269 = vld [vmem:[#allocation9 + $0x258] sm:$0xff]
    %v5270 = vld [vmem:[#allocation9 + $0x260] sm:$0xf]
    %v5271 = vld [vmem:[#allocation9 + $0x264] sm:$0xff]
    %v5272 = vld [vmem:[#allocation9 + $0x26c] sm:$0xf]
    %v5273 = vld [vmem:[#allocation9 + $0x270] sm:$0xff]
    %v5274 = vld [vmem:[#allocation9 + $0x278] sm:$0xf]
    %v5275 = vld [vmem:[#allocation9 + $0x27c] sm:$0xff]
    %v5276 = vld [vmem:[#allocation9 + $0x284] sm:$0xf]
    %v5277 = vld [vmem:[#allocation9 + $0x288] sm:$0xff]
    %v5278 = vld [vmem:[#allocation9 + $0x290] sm:$0xf]
    %v5279 = vld [vmem:[#allocation9 + $0x294] sm:$0xff]
    %v5280 = vld [vmem:[#allocation9 + $0x29c] sm:$0xf]
    %v5281 = vld [vmem:[#allocation9 + $0x2a0] sm:$0xff]
    %v5282 = vld [vmem:[#allocation9 + $0x2a8] sm:$0xf]
    %v5283 = vld [vmem:[#allocation9 + $0x2ac] sm:$0xff]
    %v5284 = vld [vmem:[#allocation9 + $0x2b4] sm:$0xf]
    %v5285 = vld [vmem:[#allocation9 + $0x2b8] sm:$0xff]
    %v5286 = vld [vmem:[#allocation9 + $0x2c0] sm:$0xf]
    %v5287 = vld [vmem:[#allocation9 + $0x2c4] sm:$0xff]
    %v5288 = vld [vmem:[#allocation9 + $0x2cc] sm:$0xf]
    %v5289 = vld [vmem:[#allocation9 + $0x2d0] sm:$0xff]
    %v5290 = vld [vmem:[#allocation9 + $0x2d8] sm:$0xf]
    %v5291 = vld [vmem:[#allocation9 + $0x2dc] sm:$0xff]
    %v5292 = vld [vmem:[#allocation9 + $0x2e4] sm:$0xf]
    %v5293 = vld [vmem:[#allocation9 + $0x2e8] sm:$0xff]
    %v5294 = vld [vmem:[#allocation9 + $0x2f0] sm:$0xf]
    %v5295 = vld [vmem:[#allocation9 + $0x2f4] sm:$0xff]
    %v5296 = vld [vmem:[#allocation9 + $0x2fc] sm:$0xf]
    %v5297 = vld [vmem:[#allocation9 + $0x300] sm:$0xff]
    %v5298 = vld [vmem:[#allocation9 + $0x308] sm:$0xf]
    %v5299 = vld [vmem:[#allocation9 + $0x30c] sm:$0xff]
    %v5300 = vld [vmem:[#allocation9 + $0x314] sm:$0xf]
    %v5301 = vld [vmem:[#allocation9 + $0x318] sm:$0xff]
    %v5302 = vld [vmem:[#allocation9 + $0x320] sm:$0xf]
    %v5303 = vld [vmem:[#allocation9 + $0x324] sm:$0xff]
    %v5304 = vld [vmem:[#allocation9 + $0x32c] sm:$0xf]
    %v5305 = vld [vmem:[#allocation9 + $0x330] sm:$0xff]
    %v5306 = vld [vmem:[#allocation9 + $0x338] sm:$0xf]
    %v5307 = vld [vmem:[#allocation9 + $0x33c] sm:$0xff]
    %v5308 = vld [vmem:[#allocation9 + $0x344] sm:$0xf]
    %v5309 = vld [vmem:[#allocation9 + $0x348] sm:$0xff]
    %v5310 = vld [vmem:[#allocation9 + $0x350] sm:$0xf]
    %v5311 = vld [vmem:[#allocation9 + $0x354] sm:$0xff]
    %v5312 = vld [vmem:[#allocation9 + $0x35c] sm:$0xf]
    %v5313 = vld [vmem:[#allocation9 + $0x360] sm:$0xff]
    %v5314 = vld [vmem:[#allocation9 + $0x368] sm:$0xf]
    %v5315 = vld [vmem:[#allocation9 + $0x36c] sm:$0xff]
    %v5316 = vld [vmem:[#allocation9 + $0x374] sm:$0xf]
    %v5317 = vld [vmem:[#allocation9 + $0x378] sm:$0xff]
    %v5318 = vld [vmem:[#allocation9 + $0x380] sm:$0xf]
    %v5319 = vld [vmem:[#allocation9 + $0x384] sm:$0xff]
    %v5320 = vld [vmem:[#allocation9 + $0x38c] sm:$0xf]
    %v5321 = vld [vmem:[#allocation9 + $0x390] sm:$0xff]
    %v5322 = vld [vmem:[#allocation9 + $0x398] sm:$0xf]
    %v5323 = vld [vmem:[#allocation9 + $0x39c] sm:$0xff]
    %v5324 = vld [vmem:[#allocation9 + $0x3a4] sm:$0xf]
    %v5325 = vld [vmem:[#allocation9 + $0x3a8] sm:$0xff]
    %v5326 = vld [vmem:[#allocation9 + $0x3b0] sm:$0xf]
    %v5327 = vld [vmem:[#allocation9 + $0x3b4] sm:$0xff]
    %v5328 = vld [vmem:[#allocation9 + $0x3bc] sm:$0xf]
    %v5329 = vld [vmem:[#allocation9 + $0x3c0] sm:$0xff]
    %v5330 = vld [vmem:[#allocation9 + $0x3c8] sm:$0xf]
    %v5331 = vld [vmem:[#allocation9 + $0x3cc] sm:$0xff]
    %v5332 = vld [vmem:[#allocation9 + $0x3d4] sm:$0xf]
    %v5333 = vld [vmem:[#allocation9 + $0x3d8] sm:$0xff]
    %v5334 = vld [vmem:[#allocation9 + $0x3e0] sm:$0xf]
    %v5335 = vld [vmem:[#allocation9 + $0x3e4] sm:$0xff]
    %v5336 = vld [vmem:[#allocation9 + $0x3ec] sm:$0xf]
    %v5337 = vld [vmem:[#allocation9 + $0x3f0] sm:$0xff]
    %v5338 = vld [vmem:[#allocation9 + $0x3f8] sm:$0xf]
    %v5339 = vld [vmem:[#allocation9 + $0x3fc] sm:$0xff]
    %v5340 = vld [vmem:[#allocation9 + $0x404] sm:$0xf]
    %v5341 = vld [vmem:[#allocation9 + $0x408] sm:$0xff]
    %v5342 = vld [vmem:[#allocation9 + $0x410] sm:$0xf]
    %v5343 = vld [vmem:[#allocation9 + $0x414] sm:$0xff]
    %v5344 = vld [vmem:[#allocation9 + $0x41c] sm:$0xf]
    %v5345 = vld [vmem:[#allocation9 + $0x420] sm:$0xff]
    %v5346 = vld [vmem:[#allocation9 + $0x428] sm:$0xf]
    %v5347 = vld [vmem:[#allocation9 + $0x42c] sm:$0xff]
    %v5348 = vld [vmem:[#allocation9 + $0x434] sm:$0xf]
    %v5349 = vld [vmem:[#allocation9 + $0x438] sm:$0xff]
    %v5350 = vld [vmem:[#allocation9 + $0x440] sm:$0xf]
    %v5351 = vld [vmem:[#allocation9 + $0x444] sm:$0xff]
    %v5352 = vld [vmem:[#allocation9 + $0x44c] sm:$0xf]
    %v5353 = vld [vmem:[#allocation9 + $0x450] sm:$0xff]
    %v5354 = vld [vmem:[#allocation9 + $0x458] sm:$0xf]
    %v5355 = vld [vmem:[#allocation9 + $0x45c] sm:$0xff]
    %v5356 = vld [vmem:[#allocation9 + $0x464] sm:$0xf]
    %v5357 = vld [vmem:[#allocation9 + $0x468] sm:$0xff]
    %v5358 = vld [vmem:[#allocation9 + $0x470] sm:$0xf]
    %v5359 = vld [vmem:[#allocation9 + $0x474] sm:$0xff]
    %v5360 = vld [vmem:[#allocation9 + $0x47c] sm:$0xf]
    %v5361 = vld [vmem:[#allocation9 + $0x480] sm:$0xff]
    %v5362 = vld [vmem:[#allocation9 + $0x488] sm:$0xf]
    %v5363 = vld [vmem:[#allocation9 + $0x48c] sm:$0xff]
    %v5364 = vld [vmem:[#allocation9 + $0x494] sm:$0xf]
    %v5365 = vld [vmem:[#allocation9 + $0x498] sm:$0xff]
    %v5366 = vld [vmem:[#allocation9 + $0x4a0] sm:$0xf]
    %v5367 = vld [vmem:[#allocation9 + $0x4a4] sm:$0xff]
    %v5368 = vld [vmem:[#allocation9 + $0x4ac] sm:$0xf]
    %v5369 = vld [vmem:[#allocation9 + $0x4b0] sm:$0xff]
    %v5370 = vld [vmem:[#allocation9 + $0x4b8] sm:$0xf]
    %v5371 = vld [vmem:[#allocation9 + $0x4bc] sm:$0xff]
    %v5372 = vld [vmem:[#allocation9 + $0x4c4] sm:$0xf]
    %v5373 = vld [vmem:[#allocation9 + $0x4c8] sm:$0xff]
    %v5374 = vld [vmem:[#allocation9 + $0x4d0] sm:$0xf]
    %v5375 = vld [vmem:[#allocation9 + $0x4d4] sm:$0xff]
    %v5376 = vld [vmem:[#allocation9 + $0x4dc] sm:$0xf]
    %v5377 = vld [vmem:[#allocation9 + $0x4e0] sm:$0xff]
    %v5378 = vld [vmem:[#allocation9 + $0x4e8] sm:$0xf]
    %v5379 = vld [vmem:[#allocation9 + $0x4ec] sm:$0xff]
    %v5380 = vld [vmem:[#allocation9 + $0x4f4] sm:$0xf]
    %v5381 = vld [vmem:[#allocation9 + $0x4f8] sm:$0xff]
    %v5382 = vld [vmem:[#allocation9 + $0x500] sm:$0xf]
    %v5383 = vld [vmem:[#allocation9 + $0x504] sm:$0xff]
    %v5384 = vld [vmem:[#allocation9 + $0x50c] sm:$0xf]
    %v5385 = vld [vmem:[#allocation9 + $0x510] sm:$0xff]
    %v5386 = vld [vmem:[#allocation9 + $0x518] sm:$0xf]
    %v5387 = vld [vmem:[#allocation9 + $0x51c] sm:$0xff]
    %v5388 = vld [vmem:[#allocation9 + $0x524] sm:$0xf]
    %v5389 = vld [vmem:[#allocation9 + $0x528] sm:$0xff]
    %v5390 = vld [vmem:[#allocation9 + $0x530] sm:$0xf]
    %v5391 = vld [vmem:[#allocation9 + $0x534] sm:$0xff]
    %v5392 = vld [vmem:[#allocation9 + $0x53c] sm:$0xf]
    %v5393 = vld [vmem:[#allocation9 + $0x540] sm:$0xff]
    %v5394 = vld [vmem:[#allocation9 + $0x548] sm:$0xf]
    %v5395 = vld [vmem:[#allocation9 + $0x54c] sm:$0xff]
    %v5396 = vld [vmem:[#allocation9 + $0x554] sm:$0xf]
    %v5397 = vld [vmem:[#allocation9 + $0x558] sm:$0xff]
    %v5398 = vld [vmem:[#allocation9 + $0x560] sm:$0xf]
    %v5399 = vld [vmem:[#allocation9 + $0x564] sm:$0xff]
    %v5400 = vld [vmem:[#allocation9 + $0x56c] sm:$0xf]
    %v5401 = vld [vmem:[#allocation9 + $0x570] sm:$0xff]
    %v5402 = vld [vmem:[#allocation9 + $0x578] sm:$0xf]
    %v5403 = vld [vmem:[#allocation9 + $0x57c] sm:$0xff]
    %v5404 = vld [vmem:[#allocation9 + $0x584] sm:$0xf]
    %v5405 = vld [vmem:[#allocation9 + $0x588] sm:$0xff]
    %v5406 = vld [vmem:[#allocation9 + $0x590] sm:$0xf]
    %v5407 = vld [vmem:[#allocation9 + $0x594] sm:$0xff]
    %v5408 = vld [vmem:[#allocation9 + $0x59c] sm:$0xf]
    %v5409 = vld [vmem:[#allocation9 + $0x5a0] sm:$0xff]
    %v5410 = vld [vmem:[#allocation9 + $0x5a8] sm:$0xf]
    %v5411 = vld [vmem:[#allocation9 + $0x5ac] sm:$0xff]
    %v5412 = vld [vmem:[#allocation9 + $0x5b4] sm:$0xf]
    %v5413 = vld [vmem:[#allocation9 + $0x5b8] sm:$0xff]
    %v5414 = vld [vmem:[#allocation9 + $0x5c0] sm:$0xf]
    %v5415 = vld [vmem:[#allocation9 + $0x5c4] sm:$0xff]
    %v5416 = vld [vmem:[#allocation9 + $0x5cc] sm:$0xf]
    %v5417 = vld [vmem:[#allocation9 + $0x5d0] sm:$0xff]
    %v5418 = vld [vmem:[#allocation9 + $0x5d8] sm:$0xf]
    %v5419 = vld [vmem:[#allocation9 + $0x5dc] sm:$0xff]
    %v5420 = vld [vmem:[#allocation9 + $0x5e4] sm:$0xf]
    %v5421 = vld [vmem:[#allocation9 + $0x5e8] sm:$0xff]
    %v5422 = vld [vmem:[#allocation9 + $0x5f0] sm:$0xf]
    %v5423 = vld [vmem:[#allocation9 + $0x5f4] sm:$0xff]
    %v5424 = vld [vmem:[#allocation9 + $0x5fc] sm:$0xf]
    %v5425 = vld [vmem:[#allocation9 + $0x600] sm:$0xff]
    %v5426 = vld [vmem:[#allocation9 + $0x608] sm:$0xf]
    %v5427 = vld [vmem:[#allocation9 + $0x60c] sm:$0xff]
    %v5428 = vld [vmem:[#allocation9 + $0x614] sm:$0xf]
    %v5429 = vld [vmem:[#allocation9 + $0x618] sm:$0xff]
    %v5430 = vld [vmem:[#allocation9 + $0x620] sm:$0xf]
    %v5431 = vld [vmem:[#allocation9 + $0x624] sm:$0xff]
    %v5432 = vld [vmem:[#allocation9 + $0x62c] sm:$0xf]
    %v5433 = vld [vmem:[#allocation9 + $0x630] sm:$0xff]
    %v5434 = vld [vmem:[#allocation9 + $0x638] sm:$0xf]
    %v5435 = vld [vmem:[#allocation9 + $0x63c] sm:$0xff]
    %v5436 = vld [vmem:[#allocation9 + $0x644] sm:$0xf]
    %v5437 = vld [vmem:[#allocation9 + $0x648] sm:$0xff]
    %v5438 = vld [vmem:[#allocation9 + $0x650] sm:$0xf]
    %v5439 = vld [vmem:[#allocation9 + $0x654] sm:$0xff]
    %v5440 = vld [vmem:[#allocation9 + $0x65c] sm:$0xf]
    %v5441 = vld [vmem:[#allocation9 + $0x660] sm:$0xff]
    %v5442 = vld [vmem:[#allocation9 + $0x668] sm:$0xf]
    %v5443 = vld [vmem:[#allocation9 + $0x66c] sm:$0xff]
    %v5444 = vld [vmem:[#allocation9 + $0x674] sm:$0xf]
    %v5445 = vld [vmem:[#allocation9 + $0x678] sm:$0xff]
    %v5446 = vld [vmem:[#allocation9 + $0x680] sm:$0xf]
    %v5447 = vld [vmem:[#allocation9 + $0x684] sm:$0xff]
    %v5448 = vld [vmem:[#allocation9 + $0x68c] sm:$0xf]
    %v5449 = vld [vmem:[#allocation9 + $0x690] sm:$0xff]
    %v5450 = vld [vmem:[#allocation9 + $0x698] sm:$0xf]
    %v5451 = vld [vmem:[#allocation9 + $0x69c] sm:$0xff]
    %v5452 = vld [vmem:[#allocation9 + $0x6a4] sm:$0xf]
    %v5453 = vld [vmem:[#allocation9 + $0x6a8] sm:$0xff]
    %v5454 = vld [vmem:[#allocation9 + $0x6b0] sm:$0xf]
    %v5455 = vld [vmem:[#allocation9 + $0x6b4] sm:$0xff]
    %v5456 = vld [vmem:[#allocation9 + $0x6bc] sm:$0xf]
    %v5457 = vld [vmem:[#allocation9 + $0x6c0] sm:$0xff]
    %v5458 = vld [vmem:[#allocation9 + $0x6c8] sm:$0xf]
    %v5459 = vld [vmem:[#allocation9 + $0x6cc] sm:$0xff]
    %v5460 = vld [vmem:[#allocation9 + $0x6d4] sm:$0xf]
    %v5461 = vld [vmem:[#allocation9 + $0x6d8] sm:$0xff]
    %v5462 = vld [vmem:[#allocation9 + $0x6e0] sm:$0xf]
    %v5463 = vld [vmem:[#allocation9 + $0x6e4] sm:$0xff]
    %v5464 = vld [vmem:[#allocation9 + $0x6ec] sm:$0xf]
    %v5465 = vld [vmem:[#allocation9 + $0x6f0] sm:$0xff]
    %v5466 = vld [vmem:[#allocation9 + $0x6f8] sm:$0xf]
    %v5467 = vld [vmem:[#allocation9 + $0x6fc] sm:$0xff]
    %v5468 = vld [vmem:[#allocation9 + $0x704] sm:$0xf]
    %v5469 = vld [vmem:[#allocation9 + $0x708] sm:$0xff]
    %v5470 = vld [vmem:[#allocation9 + $0x710] sm:$0xf]
    %v5471 = vld [vmem:[#allocation9 + $0x714] sm:$0xff]
    %v5472 = vld [vmem:[#allocation9 + $0x71c] sm:$0xf]
    %v5473 = vld [vmem:[#allocation9 + $0x720] sm:$0xff]
    %v5474 = vld [vmem:[#allocation9 + $0x728] sm:$0xf]
    %v5475 = vld [vmem:[#allocation9 + $0x72c] sm:$0xff]
    %v5476 = vld [vmem:[#allocation9 + $0x734] sm:$0xf]
    %v5477 = vld [vmem:[#allocation9 + $0x738] sm:$0xff]
    %v5478 = vld [vmem:[#allocation9 + $0x740] sm:$0xf]
    %v5479 = vld [vmem:[#allocation9 + $0x744] sm:$0xff]
    %v5480 = vld [vmem:[#allocation9 + $0x74c] sm:$0xf]
    %v5481 = vld [vmem:[#allocation9 + $0x750] sm:$0xff]
    %v5482 = vld [vmem:[#allocation9 + $0x758] sm:$0xf]
    %v5483 = vld [vmem:[#allocation9 + $0x75c] sm:$0xff]
    %v5484 = vld [vmem:[#allocation9 + $0x764] sm:$0xf]
    %v5485 = vld [vmem:[#allocation9 + $0x768] sm:$0xff]
    %v5486 = vld [vmem:[#allocation9 + $0x770] sm:$0xf]
    %v5487 = vld [vmem:[#allocation9 + $0x774] sm:$0xff]
    %v5488 = vld [vmem:[#allocation9 + $0x77c] sm:$0xf]
    %v5489 = vld [vmem:[#allocation9 + $0x780] sm:$0xff]
    %v5490 = vld [vmem:[#allocation9 + $0x788] sm:$0xf]
    %v5491 = vld [vmem:[#allocation9 + $0x78c] sm:$0xff]
    %v5492 = vld [vmem:[#allocation9 + $0x794] sm:$0xf]
    %v5493 = vld [vmem:[#allocation9 + $0x798] sm:$0xff]
    %v5494 = vld [vmem:[#allocation9 + $0x7a0] sm:$0xf]
    %v5495 = vld [vmem:[#allocation9 + $0x7a4] sm:$0xff]
    %v5496 = vld [vmem:[#allocation9 + $0x7ac] sm:$0xf]
    %v5497 = vld [vmem:[#allocation9 + $0x7b0] sm:$0xff]
    %v5498 = vld [vmem:[#allocation9 + $0x7b8] sm:$0xf]
    %v5499 = vld [vmem:[#allocation9 + $0x7bc] sm:$0xff]
    %v5500 = vld [vmem:[#allocation9 + $0x7c4] sm:$0xf]
    %v5501 = vld [vmem:[#allocation9 + $0x7c8] sm:$0xff]
    %v5502 = vld [vmem:[#allocation9 + $0x7d0] sm:$0xf]
    %v5503 = vld [vmem:[#allocation9 + $0x7d4] sm:$0xff]
    %v5504 = vld [vmem:[#allocation9 + $0x7dc] sm:$0xf]
    %v5505 = vld [vmem:[#allocation9 + $0x7e0] sm:$0xff]
    %v5506 = vld [vmem:[#allocation9 + $0x7e8] sm:$0xf]
    %v5507 = vld [vmem:[#allocation9 + $0x7ec] sm:$0xff]
    %v5508 = vld [vmem:[#allocation9 + $0x7f4] sm:$0xf]
    %v5509 = vld [vmem:[#allocation9 + $0x7f8] sm:$0xff]
    %v5510 = vld [vmem:[#allocation9 + $0x800] sm:$0xf]
    %v5511 = vld [vmem:[#allocation9 + $0x804] sm:$0xff]
    %v5512 = vld [vmem:[#allocation9 + $0x80c] sm:$0xf]
    %v5513 = vld [vmem:[#allocation9 + $0x810] sm:$0xff]
    %v5514 = vld [vmem:[#allocation9 + $0x818] sm:$0xf]
    %v5515 = vld [vmem:[#allocation9 + $0x81c] sm:$0xff]
    %v5516 = vld [vmem:[#allocation9 + $0x824] sm:$0xf]
    %v5517 = vld [vmem:[#allocation9 + $0x828] sm:$0xff]
    %v5518 = vld [vmem:[#allocation9 + $0x830] sm:$0xf]
    %v5519 = vld [vmem:[#allocation9 + $0x834] sm:$0xff]
    %v5520 = vld [vmem:[#allocation9 + $0x83c] sm:$0xf]
    %v5521 = vld [vmem:[#allocation9 + $0x840] sm:$0xff]
    %v5522 = vld [vmem:[#allocation9 + $0x848] sm:$0xf]
    %v5523 = vld [vmem:[#allocation9 + $0x84c] sm:$0xff]
    %v5524 = vld [vmem:[#allocation9 + $0x854] sm:$0xf]
    %v5525 = vld [vmem:[#allocation9 + $0x858] sm:$0xff]
    %v5526 = vld [vmem:[#allocation9 + $0x860] sm:$0xf]
    %v5527 = vld [vmem:[#allocation9 + $0x864] sm:$0xff]
    %v5528 = vld [vmem:[#allocation9 + $0x86c] sm:$0xf]
    %v5529 = vld [vmem:[#allocation9 + $0x870] sm:$0xff]
    %v5530 = vld [vmem:[#allocation9 + $0x878] sm:$0xf]
    %v5531 = vld [vmem:[#allocation9 + $0x87c] sm:$0xff]
    %v5532 = vld [vmem:[#allocation9 + $0x884] sm:$0xf]
    %v5533 = vld [vmem:[#allocation9 + $0x888] sm:$0xff]
    %v5534 = vld [vmem:[#allocation9 + $0x890] sm:$0xf]
    %v5535 = vld [vmem:[#allocation9 + $0x894] sm:$0xff]
    %v5536 = vld [vmem:[#allocation9 + $0x89c] sm:$0xf]
    %v5537 = vld [vmem:[#allocation9 + $0x8a0] sm:$0xff]
    %v5538 = vld [vmem:[#allocation9 + $0x8a8] sm:$0xf]
    %v5539 = vld [vmem:[#allocation9 + $0x8ac] sm:$0xff]
    %v5540 = vld [vmem:[#allocation9 + $0x8b4] sm:$0xf]
    %v5541 = vld [vmem:[#allocation9 + $0x8b8] sm:$0xff]
    %v5542 = vld [vmem:[#allocation9 + $0x8c0] sm:$0xf]
    %v5543 = vld [vmem:[#allocation9 + $0x8c4] sm:$0xff]
    %v5544 = vld [vmem:[#allocation9 + $0x8cc] sm:$0xf]
    %v5545 = vld [vmem:[#allocation9 + $0x8d0] sm:$0xff]
    %v5546 = vld [vmem:[#allocation9 + $0x8d8] sm:$0xf]
    %v5547 = vld [vmem:[#allocation9 + $0x8dc] sm:$0xff]
    %v5548 = vld [vmem:[#allocation9 + $0x8e4] sm:$0xf]
    %v5549 = vld [vmem:[#allocation9 + $0x8e8] sm:$0xff]
    %v5550 = vld [vmem:[#allocation9 + $0x8f0] sm:$0xf]
    %v5551 = vld [vmem:[#allocation9 + $0x8f4] sm:$0xff]
    %v5552 = vld [vmem:[#allocation9 + $0x8fc] sm:$0xf]
    %v5937 = vunpack.c.l.b16 %v5169
    %v5938 = vunpack.c.h.b16 %v5169
    %v5939 = vunpack.c.l.b16 %v5170
    %v5940 = vunpack.c.l.b16 %v5171
    %v5941 = vunpack.c.h.b16 %v5171
    %v5942 = vunpack.c.l.b16 %v5172
    %v5943 = vunpack.c.l.b16 %v5173
    %v5944 = vunpack.c.h.b16 %v5173
    %v5945 = vunpack.c.l.b16 %v5174
    %v5946 = vunpack.c.l.b16 %v5175
    %v5947 = vunpack.c.h.b16 %v5175
    %v5948 = vunpack.c.l.b16 %v5176
    %v5949 = vunpack.c.l.b16 %v5177
    %v5950 = vunpack.c.h.b16 %v5177
    %v5951 = vunpack.c.l.b16 %v5178
    %v5952 = vunpack.c.l.b16 %v5179
    %v5953 = vunpack.c.h.b16 %v5179
    %v5954 = vunpack.c.l.b16 %v5180
    %v5955 = vunpack.c.l.b16 %v5181
    %v5956 = vunpack.c.h.b16 %v5181
    %v5957 = vunpack.c.l.b16 %v5182
    %v5958 = vunpack.c.l.b16 %v5183
    %v5959 = vunpack.c.h.b16 %v5183
    %v5960 = vunpack.c.l.b16 %v5184
    %v5961 = vunpack.c.l.b16 %v5185
    %v5962 = vunpack.c.h.b16 %v5185
    %v5963 = vunpack.c.l.b16 %v5186
    %v5964 = vunpack.c.l.b16 %v5187
    %v5965 = vunpack.c.h.b16 %v5187
    %v5966 = vunpack.c.l.b16 %v5188
    %v5967 = vunpack.c.l.b16 %v5189
    %v5968 = vunpack.c.h.b16 %v5189
    %v5969 = vunpack.c.l.b16 %v5190
    %v5970 = vunpack.c.l.b16 %v5191
    %v5971 = vunpack.c.h.b16 %v5191
    %v5972 = vunpack.c.l.b16 %v5192
    %v5973 = vunpack.c.l.b16 %v5193
    %v5974 = vunpack.c.h.b16 %v5193
    %v5975 = vunpack.c.l.b16 %v5194
    %v5976 = vunpack.c.l.b16 %v5195
    %v5977 = vunpack.c.h.b16 %v5195
    %v5978 = vunpack.c.l.b16 %v5196
    %v5979 = vunpack.c.l.b16 %v5197
    %v5980 = vunpack.c.h.b16 %v5197
    %v5981 = vunpack.c.l.b16 %v5198
    %v5982 = vunpack.c.l.b16 %v5199
    %v5983 = vunpack.c.h.b16 %v5199
    %v5984 = vunpack.c.l.b16 %v5200
    %v5985 = vunpack.c.l.b16 %v5201
    %v5986 = vunpack.c.h.b16 %v5201
    %v5987 = vunpack.c.l.b16 %v5202
    %v5988 = vunpack.c.l.b16 %v5203
    %v5989 = vunpack.c.h.b16 %v5203
    %v5990 = vunpack.c.l.b16 %v5204
    %v5991 = vunpack.c.l.b16 %v5205
    %v5992 = vunpack.c.h.b16 %v5205
    %v5993 = vunpack.c.l.b16 %v5206
    %v5994 = vunpack.c.l.b16 %v5207
    %v5995 = vunpack.c.h.b16 %v5207
    %v5996 = vunpack.c.l.b16 %v5208
    %v5997 = vunpack.c.l.b16 %v5209
    %v5998 = vunpack.c.h.b16 %v5209
    %v5999 = vunpack.c.l.b16 %v5210
    %v6000 = vunpack.c.l.b16 %v5211
    %v6001 = vunpack.c.h.b16 %v5211
    %v6002 = vunpack.c.l.b16 %v5212
    %v6003 = vunpack.c.l.b16 %v5213
    %v6004 = vunpack.c.h.b16 %v5213
    %v6005 = vunpack.c.l.b16 %v5214
    %v6006 = vunpack.c.l.b16 %v5215
    %v6007 = vunpack.c.h.b16 %v5215
    %v6008 = vunpack.c.l.b16 %v5216
    %v6009 = vunpack.c.l.b16 %v5217
    %v6010 = vunpack.c.h.b16 %v5217
    %v6011 = vunpack.c.l.b16 %v5218
    %v6012 = vunpack.c.l.b16 %v5219
    %v6013 = vunpack.c.h.b16 %v5219
    %v6014 = vunpack.c.l.b16 %v5220
    %v6015 = vunpack.c.l.b16 %v5221
    %v6016 = vunpack.c.h.b16 %v5221
    %v6017 = vunpack.c.l.b16 %v5222
    %v6018 = vunpack.c.l.b16 %v5223
    %v6019 = vunpack.c.h.b16 %v5223
    %v6020 = vunpack.c.l.b16 %v5224
    %v6021 = vunpack.c.l.b16 %v5225
    %v6022 = vunpack.c.h.b16 %v5225
    %v6023 = vunpack.c.l.b16 %v5226
    %v6024 = vunpack.c.l.b16 %v5227
    %v6025 = vunpack.c.h.b16 %v5227
    %v6026 = vunpack.c.l.b16 %v5228
    %v6027 = vunpack.c.l.b16 %v5229
    %v6028 = vunpack.c.h.b16 %v5229
    %v6029 = vunpack.c.l.b16 %v5230
    %v6030 = vunpack.c.l.b16 %v5231
    %v6031 = vunpack.c.h.b16 %v5231
    %v6032 = vunpack.c.l.b16 %v5232
    %v6033 = vunpack.c.l.b16 %v5233
    %v6034 = vunpack.c.h.b16 %v5233
    %v6035 = vunpack.c.l.b16 %v5234
    %v6036 = vunpack.c.l.b16 %v5235
    %v6037 = vunpack.c.h.b16 %v5235
    %v6038 = vunpack.c.l.b16 %v5236
    %v6039 = vunpack.c.l.b16 %v5237
    %v6040 = vunpack.c.h.b16 %v5237
    %v6041 = vunpack.c.l.b16 %v5238
    %v6042 = vunpack.c.l.b16 %v5239
    %v6043 = vunpack.c.h.b16 %v5239
    %v6044 = vunpack.c.l.b16 %v5240
    %v6045 = vunpack.c.l.b16 %v5241
    %v6046 = vunpack.c.h.b16 %v5241
    %v6047 = vunpack.c.l.b16 %v5242
    %v6048 = vunpack.c.l.b16 %v5243
    %v6049 = vunpack.c.h.b16 %v5243
    %v6050 = vunpack.c.l.b16 %v5244
    %v6051 = vunpack.c.l.b16 %v5245
    %v6052 = vunpack.c.h.b16 %v5245
    %v6053 = vunpack.c.l.b16 %v5246
    %v6054 = vunpack.c.l.b16 %v5247
    %v6055 = vunpack.c.h.b16 %v5247
    %v6056 = vunpack.c.l.b16 %v5248
    %v6057 = vunpack.c.l.b16 %v5249
    %v6058 = vunpack.c.h.b16 %v5249
    %v6059 = vunpack.c.l.b16 %v5250
    %v6060 = vunpack.c.l.b16 %v5251
    %v6061 = vunpack.c.h.b16 %v5251
    %v6062 = vunpack.c.l.b16 %v5252
    %v6063 = vunpack.c.l.b16 %v5253
    %v6064 = vunpack.c.h.b16 %v5253
    %v6065 = vunpack.c.l.b16 %v5254
    %v6066 = vunpack.c.l.b16 %v5255
    %v6067 = vunpack.c.h.b16 %v5255
    %v6068 = vunpack.c.l.b16 %v5256
    %v6069 = vunpack.c.l.b16 %v5257
    %v6070 = vunpack.c.h.b16 %v5257
    %v6071 = vunpack.c.l.b16 %v5258
    %v6072 = vunpack.c.l.b16 %v5259
    %v6073 = vunpack.c.h.b16 %v5259
    %v6074 = vunpack.c.l.b16 %v5260
    %v6075 = vunpack.c.l.b16 %v5261
    %v6076 = vunpack.c.h.b16 %v5261
    %v6077 = vunpack.c.l.b16 %v5262
    %v6078 = vunpack.c.l.b16 %v5263
    %v6079 = vunpack.c.h.b16 %v5263
    %v6080 = vunpack.c.l.b16 %v5264
    %v6081 = vunpack.c.l.b16 %v5265
    %v6082 = vunpack.c.h.b16 %v5265
    %v6083 = vunpack.c.l.b16 %v5266
    %v6084 = vunpack.c.l.b16 %v5267
    %v6085 = vunpack.c.h.b16 %v5267
    %v6086 = vunpack.c.l.b16 %v5268
    %v6087 = vunpack.c.l.b16 %v5269
    %v6088 = vunpack.c.h.b16 %v5269
    %v6089 = vunpack.c.l.b16 %v5270
    %v6090 = vunpack.c.l.b16 %v5271
    %v6091 = vunpack.c.h.b16 %v5271
    %v6092 = vunpack.c.l.b16 %v5272
    %v6093 = vunpack.c.l.b16 %v5273
    %v6094 = vunpack.c.h.b16 %v5273
    %v6095 = vunpack.c.l.b16 %v5274
    %v6096 = vunpack.c.l.b16 %v5275
    %v6097 = vunpack.c.h.b16 %v5275
    %v6098 = vunpack.c.l.b16 %v5276
    %v6099 = vunpack.c.l.b16 %v5277
    %v6100 = vunpack.c.h.b16 %v5277
    %v6101 = vunpack.c.l.b16 %v5278
    %v6102 = vunpack.c.l.b16 %v5279
    %v6103 = vunpack.c.h.b16 %v5279
    %v6104 = vunpack.c.l.b16 %v5280
    %v6105 = vunpack.c.l.b16 %v5281
    %v6106 = vunpack.c.h.b16 %v5281
    %v6107 = vunpack.c.l.b16 %v5282
    %v6108 = vunpack.c.l.b16 %v5283
    %v6109 = vunpack.c.h.b16 %v5283
    %v6110 = vunpack.c.l.b16 %v5284
    %v6111 = vunpack.c.l.b16 %v5285
    %v6112 = vunpack.c.h.b16 %v5285
    %v6113 = vunpack.c.l.b16 %v5286
    %v6114 = vunpack.c.l.b16 %v5287
    %v6115 = vunpack.c.h.b16 %v5287
    %v6116 = vunpack.c.l.b16 %v5288
    %v6117 = vunpack.c.l.b16 %v5289
    %v6118 = vunpack.c.h.b16 %v5289
    %v6119 = vunpack.c.l.b16 %v5290
    %v6120 = vunpack.c.l.b16 %v5291
    %v6121 = vunpack.c.h.b16 %v5291
    %v6122 = vunpack.c.l.b16 %v5292
    %v6123 = vunpack.c.l.b16 %v5293
    %v6124 = vunpack.c.h.b16 %v5293
    %v6125 = vunpack.c.l.b16 %v5294
    %v6126 = vunpack.c.l.b16 %v5295
    %v6127 = vunpack.c.h.b16 %v5295
    %v6128 = vunpack.c.l.b16 %v5296
    %v6129 = vunpack.c.l.b16 %v5297
    %v6130 = vunpack.c.h.b16 %v5297
    %v6131 = vunpack.c.l.b16 %v5298
    %v6132 = vunpack.c.l.b16 %v5299
    %v6133 = vunpack.c.h.b16 %v5299
    %v6134 = vunpack.c.l.b16 %v5300
    %v6135 = vunpack.c.l.b16 %v5301
    %v6136 = vunpack.c.h.b16 %v5301
    %v6137 = vunpack.c.l.b16 %v5302
    %v6138 = vunpack.c.l.b16 %v5303
    %v6139 = vunpack.c.h.b16 %v5303
    %v6140 = vunpack.c.l.b16 %v5304
    %v6141 = vunpack.c.l.b16 %v5305
    %v6142 = vunpack.c.h.b16 %v5305
    %v6143 = vunpack.c.l.b16 %v5306
    %v6144 = vunpack.c.l.b16 %v5307
    %v6145 = vunpack.c.h.b16 %v5307
    %v6146 = vunpack.c.l.b16 %v5308
    %v6147 = vunpack.c.l.b16 %v5309
    %v6148 = vunpack.c.h.b16 %v5309
    %v6149 = vunpack.c.l.b16 %v5310
    %v6150 = vunpack.c.l.b16 %v5311
    %v6151 = vunpack.c.h.b16 %v5311
    %v6152 = vunpack.c.l.b16 %v5312
    %v6153 = vunpack.c.l.b16 %v5313
    %v6154 = vunpack.c.h.b16 %v5313
    %v6155 = vunpack.c.l.b16 %v5314
    %v6156 = vunpack.c.l.b16 %v5315
    %v6157 = vunpack.c.h.b16 %v5315
    %v6158 = vunpack.c.l.b16 %v5316
    %v6159 = vunpack.c.l.b16 %v5317
    %v6160 = vunpack.c.h.b16 %v5317
    %v6161 = vunpack.c.l.b16 %v5318
    %v6162 = vunpack.c.l.b16 %v5319
    %v6163 = vunpack.c.h.b16 %v5319
    %v6164 = vunpack.c.l.b16 %v5320
    %v6165 = vunpack.c.l.b16 %v5321
    %v6166 = vunpack.c.h.b16 %v5321
    %v6167 = vunpack.c.l.b16 %v5322
    %v6168 = vunpack.c.l.b16 %v5323
    %v6169 = vunpack.c.h.b16 %v5323
    %v6170 = vunpack.c.l.b16 %v5324
    %v6171 = vunpack.c.l.b16 %v5325
    %v6172 = vunpack.c.h.b16 %v5325
    %v6173 = vunpack.c.l.b16 %v5326
    %v6174 = vunpack.c.l.b16 %v5327
    %v6175 = vunpack.c.h.b16 %v5327
    %v6176 = vunpack.c.l.b16 %v5328
    %v6177 = vunpack.c.l.b16 %v5329
    %v6178 = vunpack.c.h.b16 %v5329
    %v6179 = vunpack.c.l.b16 %v5330
    %v6180 = vunpack.c.l.b16 %v5331
    %v6181 = vunpack.c.h.b16 %v5331
    %v6182 = vunpack.c.l.b16 %v5332
    %v6183 = vunpack.c.l.b16 %v5333
    %v6184 = vunpack.c.h.b16 %v5333
    %v6185 = vunpack.c.l.b16 %v5334
    %v6186 = vunpack.c.l.b16 %v5335
    %v6187 = vunpack.c.h.b16 %v5335
    %v6188 = vunpack.c.l.b16 %v5336
    %v6189 = vunpack.c.l.b16 %v5337
    %v6190 = vunpack.c.h.b16 %v5337
    %v6191 = vunpack.c.l.b16 %v5338
    %v6192 = vunpack.c.l.b16 %v5339
    %v6193 = vunpack.c.h.b16 %v5339
    %v6194 = vunpack.c.l.b16 %v5340
    %v6195 = vunpack.c.l.b16 %v5341
    %v6196 = vunpack.c.h.b16 %v5341
    %v6197 = vunpack.c.l.b16 %v5342
    %v6198 = vunpack.c.l.b16 %v5343
    %v6199 = vunpack.c.h.b16 %v5343
    %v6200 = vunpack.c.l.b16 %v5344
    %v6201 = vunpack.c.l.b16 %v5345
    %v6202 = vunpack.c.h.b16 %v5345
    %v6203 = vunpack.c.l.b16 %v5346
    %v6204 = vunpack.c.l.b16 %v5347
    %v6205 = vunpack.c.h.b16 %v5347
    %v6206 = vunpack.c.l.b16 %v5348
    %v6207 = vunpack.c.l.b16 %v5349
    %v6208 = vunpack.c.h.b16 %v5349
    %v6209 = vunpack.c.l.b16 %v5350
    %v6210 = vunpack.c.l.b16 %v5351
    %v6211 = vunpack.c.h.b16 %v5351
    %v6212 = vunpack.c.l.b16 %v5352
    %v6213 = vunpack.c.l.b16 %v5353
    %v6214 = vunpack.c.h.b16 %v5353
    %v6215 = vunpack.c.l.b16 %v5354
    %v6216 = vunpack.c.l.b16 %v5355
    %v6217 = vunpack.c.h.b16 %v5355
    %v6218 = vunpack.c.l.b16 %v5356
    %v6219 = vunpack.c.l.b16 %v5357
    %v6220 = vunpack.c.h.b16 %v5357
    %v6221 = vunpack.c.l.b16 %v5358
    %v6222 = vunpack.c.l.b16 %v5359
    %v6223 = vunpack.c.h.b16 %v5359
    %v6224 = vunpack.c.l.b16 %v5360
    %v6225 = vunpack.c.l.b16 %v5361
    %v6226 = vunpack.c.h.b16 %v5361
    %v6227 = vunpack.c.l.b16 %v5362
    %v6228 = vunpack.c.l.b16 %v5363
    %v6229 = vunpack.c.h.b16 %v5363
    %v6230 = vunpack.c.l.b16 %v5364
    %v6231 = vunpack.c.l.b16 %v5365
    %v6232 = vunpack.c.h.b16 %v5365
    %v6233 = vunpack.c.l.b16 %v5366
    %v6234 = vunpack.c.l.b16 %v5367
    %v6235 = vunpack.c.h.b16 %v5367
    %v6236 = vunpack.c.l.b16 %v5368
    %v6237 = vunpack.c.l.b16 %v5369
    %v6238 = vunpack.c.h.b16 %v5369
    %v6239 = vunpack.c.l.b16 %v5370
    %v6240 = vunpack.c.l.b16 %v5371
    %v6241 = vunpack.c.h.b16 %v5371
    %v6242 = vunpack.c.l.b16 %v5372
    %v6243 = vunpack.c.l.b16 %v5373
    %v6244 = vunpack.c.h.b16 %v5373
    %v6245 = vunpack.c.l.b16 %v5374
    %v6246 = vunpack.c.l.b16 %v5375
    %v6247 = vunpack.c.h.b16 %v5375
    %v6248 = vunpack.c.l.b16 %v5376
    %v6249 = vunpack.c.l.b16 %v5377
    %v6250 = vunpack.c.h.b16 %v5377
    %v6251 = vunpack.c.l.b16 %v5378
    %v6252 = vunpack.c.l.b16 %v5379
    %v6253 = vunpack.c.h.b16 %v5379
    %v6254 = vunpack.c.l.b16 %v5380
    %v6255 = vunpack.c.l.b16 %v5381
    %v6256 = vunpack.c.h.b16 %v5381
    %v6257 = vunpack.c.l.b16 %v5382
    %v6258 = vunpack.c.l.b16 %v5383
    %v6259 = vunpack.c.h.b16 %v5383
    %v6260 = vunpack.c.l.b16 %v5384
    %v6261 = vunpack.c.l.b16 %v5385
    %v6262 = vunpack.c.h.b16 %v5385
    %v6263 = vunpack.c.l.b16 %v5386
    %v6264 = vunpack.c.l.b16 %v5387
    %v6265 = vunpack.c.h.b16 %v5387
    %v6266 = vunpack.c.l.b16 %v5388
    %v6267 = vunpack.c.l.b16 %v5389
    %v6268 = vunpack.c.h.b16 %v5389
    %v6269 = vunpack.c.l.b16 %v5390
    %v6270 = vunpack.c.l.b16 %v5391
    %v6271 = vunpack.c.h.b16 %v5391
    %v6272 = vunpack.c.l.b16 %v5392
    %v6273 = vunpack.c.l.b16 %v5393
    %v6274 = vunpack.c.h.b16 %v5393
    %v6275 = vunpack.c.l.b16 %v5394
    %v6276 = vunpack.c.l.b16 %v5395
    %v6277 = vunpack.c.h.b16 %v5395
    %v6278 = vunpack.c.l.b16 %v5396
    %v6279 = vunpack.c.l.b16 %v5397
    %v6280 = vunpack.c.h.b16 %v5397
    %v6281 = vunpack.c.l.b16 %v5398
    %v6282 = vunpack.c.l.b16 %v5399
    %v6283 = vunpack.c.h.b16 %v5399
    %v6284 = vunpack.c.l.b16 %v5400
    %v6285 = vunpack.c.l.b16 %v5401
    %v6286 = vunpack.c.h.b16 %v5401
    %v6287 = vunpack.c.l.b16 %v5402
    %v6288 = vunpack.c.l.b16 %v5403
    %v6289 = vunpack.c.h.b16 %v5403
    %v6290 = vunpack.c.l.b16 %v5404
    %v6291 = vunpack.c.l.b16 %v5405
    %v6292 = vunpack.c.h.b16 %v5405
    %v6293 = vunpack.c.l.b16 %v5406
    %v6294 = vunpack.c.l.b16 %v5407
    %v6295 = vunpack.c.h.b16 %v5407
    %v6296 = vunpack.c.l.b16 %v5408
    %v6297 = vunpack.c.l.b16 %v5409
    %v6298 = vunpack.c.h.b16 %v5409
    %v6299 = vunpack.c.l.b16 %v5410
    %v6300 = vunpack.c.l.b16 %v5411
    %v6301 = vunpack.c.h.b16 %v5411
    %v6302 = vunpack.c.l.b16 %v5412
    %v6303 = vunpack.c.l.b16 %v5413
    %v6304 = vunpack.c.h.b16 %v5413
    %v6305 = vunpack.c.l.b16 %v5414
    %v6306 = vunpack.c.l.b16 %v5415
    %v6307 = vunpack.c.h.b16 %v5415
    %v6308 = vunpack.c.l.b16 %v5416
    %v6309 = vunpack.c.l.b16 %v5417
    %v6310 = vunpack.c.h.b16 %v5417
    %v6311 = vunpack.c.l.b16 %v5418
    %v6312 = vunpack.c.l.b16 %v5419
    %v6313 = vunpack.c.h.b16 %v5419
    %v6314 = vunpack.c.l.b16 %v5420
    %v6315 = vunpack.c.l.b16 %v5421
    %v6316 = vunpack.c.h.b16 %v5421
    %v6317 = vunpack.c.l.b16 %v5422
    %v6318 = vunpack.c.l.b16 %v5423
    %v6319 = vunpack.c.h.b16 %v5423
    %v6320 = vunpack.c.l.b16 %v5424
    %v6321 = vunpack.c.l.b16 %v5425
    %v6322 = vunpack.c.h.b16 %v5425
    %v6323 = vunpack.c.l.b16 %v5426
    %v6324 = vunpack.c.l.b16 %v5427
    %v6325 = vunpack.c.h.b16 %v5427
    %v6326 = vunpack.c.l.b16 %v5428
    %v6327 = vunpack.c.l.b16 %v5429
    %v6328 = vunpack.c.h.b16 %v5429
    %v6329 = vunpack.c.l.b16 %v5430
    %v6330 = vunpack.c.l.b16 %v5431
    %v6331 = vunpack.c.h.b16 %v5431
    %v6332 = vunpack.c.l.b16 %v5432
    %v6333 = vunpack.c.l.b16 %v5433
    %v6334 = vunpack.c.h.b16 %v5433
    %v6335 = vunpack.c.l.b16 %v5434
    %v6336 = vunpack.c.l.b16 %v5435
    %v6337 = vunpack.c.h.b16 %v5435
    %v6338 = vunpack.c.l.b16 %v5436
    %v6339 = vunpack.c.l.b16 %v5437
    %v6340 = vunpack.c.h.b16 %v5437
    %v6341 = vunpack.c.l.b16 %v5438
    %v6342 = vunpack.c.l.b16 %v5439
    %v6343 = vunpack.c.h.b16 %v5439
    %v6344 = vunpack.c.l.b16 %v5440
    %v6345 = vunpack.c.l.b16 %v5441
    %v6346 = vunpack.c.h.b16 %v5441
    %v6347 = vunpack.c.l.b16 %v5442
    %v6348 = vunpack.c.l.b16 %v5443
    %v6349 = vunpack.c.h.b16 %v5443
    %v6350 = vunpack.c.l.b16 %v5444
    %v6351 = vunpack.c.l.b16 %v5445
    %v6352 = vunpack.c.h.b16 %v5445
    %v6353 = vunpack.c.l.b16 %v5446
    %v6354 = vunpack.c.l.b16 %v5447
    %v6355 = vunpack.c.h.b16 %v5447
    %v6356 = vunpack.c.l.b16 %v5448
    %v6357 = vunpack.c.l.b16 %v5449
    %v6358 = vunpack.c.h.b16 %v5449
    %v6359 = vunpack.c.l.b16 %v5450
    %v6360 = vunpack.c.l.b16 %v5451
    %v6361 = vunpack.c.h.b16 %v5451
    %v6362 = vunpack.c.l.b16 %v5452
    %v6363 = vunpack.c.l.b16 %v5453
    %v6364 = vunpack.c.h.b16 %v5453
    %v6365 = vunpack.c.l.b16 %v5454
    %v6366 = vunpack.c.l.b16 %v5455
    %v6367 = vunpack.c.h.b16 %v5455
    %v6368 = vunpack.c.l.b16 %v5456
    %v6369 = vunpack.c.l.b16 %v5457
    %v6370 = vunpack.c.h.b16 %v5457
    %v6371 = vunpack.c.l.b16 %v5458
    %v6372 = vunpack.c.l.b16 %v5459
    %v6373 = vunpack.c.h.b16 %v5459
    %v6374 = vunpack.c.l.b16 %v5460
    %v6375 = vunpack.c.l.b16 %v5461
    %v6376 = vunpack.c.h.b16 %v5461
    %v6377 = vunpack.c.l.b16 %v5462
    %v6378 = vunpack.c.l.b16 %v5463
    %v6379 = vunpack.c.h.b16 %v5463
    %v6380 = vunpack.c.l.b16 %v5464
    %v6381 = vunpack.c.l.b16 %v5465
    %v6382 = vunpack.c.h.b16 %v5465
    %v6383 = vunpack.c.l.b16 %v5466
    %v6384 = vunpack.c.l.b16 %v5467
    %v6385 = vunpack.c.h.b16 %v5467
    %v6386 = vunpack.c.l.b16 %v5468
    %v6387 = vunpack.c.l.b16 %v5469
    %v6388 = vunpack.c.h.b16 %v5469
    %v6389 = vunpack.c.l.b16 %v5470
    %v6390 = vunpack.c.l.b16 %v5471
    %v6391 = vunpack.c.h.b16 %v5471
    %v6392 = vunpack.c.l.b16 %v5472
    %v6393 = vunpack.c.l.b16 %v5473
    %v6394 = vunpack.c.h.b16 %v5473
    %v6395 = vunpack.c.l.b16 %v5474
    %v6396 = vunpack.c.l.b16 %v5475
    %v6397 = vunpack.c.h.b16 %v5475
    %v6398 = vunpack.c.l.b16 %v5476
    %v6399 = vunpack.c.l.b16 %v5477
    %v6400 = vunpack.c.h.b16 %v5477
    %v6401 = vunpack.c.l.b16 %v5478
    %v6402 = vunpack.c.l.b16 %v5479
    %v6403 = vunpack.c.h.b16 %v5479
    %v6404 = vunpack.c.l.b16 %v5480
    %v6405 = vunpack.c.l.b16 %v5481
    %v6406 = vunpack.c.h.b16 %v5481
    %v6407 = vunpack.c.l.b16 %v5482
    %v6408 = vunpack.c.l.b16 %v5483
    %v6409 = vunpack.c.h.b16 %v5483
    %v6410 = vunpack.c.l.b16 %v5484
    %v6411 = vunpack.c.l.b16 %v5485
    %v6412 = vunpack.c.h.b16 %v5485
    %v6413 = vunpack.c.l.b16 %v5486
    %v6414 = vunpack.c.l.b16 %v5487
    %v6415 = vunpack.c.h.b16 %v5487
    %v6416 = vunpack.c.l.b16 %v5488
    %v6417 = vunpack.c.l.b16 %v5489
    %v6418 = vunpack.c.h.b16 %v5489
    %v6419 = vunpack.c.l.b16 %v5490
    %v6420 = vunpack.c.l.b16 %v5491
    %v6421 = vunpack.c.h.b16 %v5491
    %v6422 = vunpack.c.l.b16 %v5492
    %v6423 = vunpack.c.l.b16 %v5493
    %v6424 = vunpack.c.h.b16 %v5493
    %v6425 = vunpack.c.l.b16 %v5494
    %v6426 = vunpack.c.l.b16 %v5495
    %v6427 = vunpack.c.h.b16 %v5495
    %v6428 = vunpack.c.l.b16 %v5496
    %v6429 = vunpack.c.l.b16 %v5497
    %v6430 = vunpack.c.h.b16 %v5497
    %v6431 = vunpack.c.l.b16 %v5498
    %v6432 = vunpack.c.l.b16 %v5499
    %v6433 = vunpack.c.h.b16 %v5499
    %v6434 = vunpack.c.l.b16 %v5500
    %v6435 = vunpack.c.l.b16 %v5501
    %v6436 = vunpack.c.h.b16 %v5501
    %v6437 = vunpack.c.l.b16 %v5502
    %v6438 = vunpack.c.l.b16 %v5503
    %v6439 = vunpack.c.h.b16 %v5503
    %v6440 = vunpack.c.l.b16 %v5504
    %v6441 = vunpack.c.l.b16 %v5505
    %v6442 = vunpack.c.h.b16 %v5505
    %v6443 = vunpack.c.l.b16 %v5506
    %v6444 = vunpack.c.l.b16 %v5507
    %v6445 = vunpack.c.h.b16 %v5507
    %v6446 = vunpack.c.l.b16 %v5508
    %v6447 = vunpack.c.l.b16 %v5509
    %v6448 = vunpack.c.h.b16 %v5509
    %v6449 = vunpack.c.l.b16 %v5510
    %v6450 = vunpack.c.l.b16 %v5511
    %v6451 = vunpack.c.h.b16 %v5511
    %v6452 = vunpack.c.l.b16 %v5512
    %v6453 = vunpack.c.l.b16 %v5513
    %v6454 = vunpack.c.h.b16 %v5513
    %v6455 = vunpack.c.l.b16 %v5514
    %v6456 = vunpack.c.l.b16 %v5515
    %v6457 = vunpack.c.h.b16 %v5515
    %v6458 = vunpack.c.l.b16 %v5516
    %v6459 = vunpack.c.l.b16 %v5517
    %v6460 = vunpack.c.h.b16 %v5517
    %v6461 = vunpack.c.l.b16 %v5518
    %v6462 = vunpack.c.l.b16 %v5519
    %v6463 = vunpack.c.h.b16 %v5519
    %v6464 = vunpack.c.l.b16 %v5520
    %v6465 = vunpack.c.l.b16 %v5521
    %v6466 = vunpack.c.h.b16 %v5521
    %v6467 = vunpack.c.l.b16 %v5522
    %v6468 = vunpack.c.l.b16 %v5523
    %v6469 = vunpack.c.h.b16 %v5523
    %v6470 = vunpack.c.l.b16 %v5524
    %v6471 = vunpack.c.l.b16 %v5525
    %v6472 = vunpack.c.h.b16 %v5525
    %v6473 = vunpack.c.l.b16 %v5526
    %v6474 = vunpack.c.l.b16 %v5527
    %v6475 = vunpack.c.h.b16 %v5527
    %v6476 = vunpack.c.l.b16 %v5528
    %v6477 = vunpack.c.l.b16 %v5529
    %v6478 = vunpack.c.h.b16 %v5529
    %v6479 = vunpack.c.l.b16 %v5530
    %v6480 = vunpack.c.l.b16 %v5531
    %v6481 = vunpack.c.h.b16 %v5531
    %v6482 = vunpack.c.l.b16 %v5532
    %v6483 = vunpack.c.l.b16 %v5533
    %v6484 = vunpack.c.h.b16 %v5533
    %v6485 = vunpack.c.l.b16 %v5534
    %v6486 = vunpack.c.l.b16 %v5535
    %v6487 = vunpack.c.h.b16 %v5535
    %v6488 = vunpack.c.l.b16 %v5536
    %v6489 = vunpack.c.l.b16 %v5537
    %v6490 = vunpack.c.h.b16 %v5537
    %v6491 = vunpack.c.l.b16 %v5538
    %v6492 = vunpack.c.l.b16 %v5539
    %v6493 = vunpack.c.h.b16 %v5539
    %v6494 = vunpack.c.l.b16 %v5540
    %v6495 = vunpack.c.l.b16 %v5541
    %v6496 = vunpack.c.h.b16 %v5541
    %v6497 = vunpack.c.l.b16 %v5542
    %v6498 = vunpack.c.l.b16 %v5543
    %v6499 = vunpack.c.h.b16 %v5543
    %v6500 = vunpack.c.l.b16 %v5544
    %v6501 = vunpack.c.l.b16 %v5545
    %v6502 = vunpack.c.h.b16 %v5545
    %v6503 = vunpack.c.l.b16 %v5546
    %v6504 = vunpack.c.l.b16 %v5547
    %v6505 = vunpack.c.h.b16 %v5547
    %v6506 = vunpack.c.l.b16 %v5548
    %v6507 = vunpack.c.l.b16 %v5549
    %v6508 = vunpack.c.h.b16 %v5549
    %v6509 = vunpack.c.l.b16 %v5550
    %v6510 = vunpack.c.l.b16 %v5551
    %v6511 = vunpack.c.h.b16 %v5551
    %v6512 = vunpack.c.l.b16 %v5552
    %v6513 = vpack.c.b16 %v5940, %v5937
    %v6514 = vpack.c.b16 %v5941, %v5938
    %v6515 = vpack.c.b16 %v5942, %v5939
    %v6516 = vpack.c.b16 %v5946, %v5943
    %v6517 = vpack.c.b16 %v5947, %v5944
    %v6518 = vpack.c.b16 %v5948, %v5945
    %v6519 = vpack.c.b16 %v5952, %v5949
    %v6520 = vpack.c.b16 %v5953, %v5950
    %v6521 = vpack.c.b16 %v5954, %v5951
    %v6522 = vpack.c.b16 %v5958, %v5955
    %v6523 = vpack.c.b16 %v5959, %v5956
    %v6524 = vpack.c.b16 %v5960, %v5957
    %v6525 = vpack.c.b16 %v5964, %v5961
    %v6526 = vpack.c.b16 %v5965, %v5962
    %v6527 = vpack.c.b16 %v5966, %v5963
    %v6528 = vpack.c.b16 %v5970, %v5967
    %v6529 = vpack.c.b16 %v5971, %v5968
    %v6530 = vpack.c.b16 %v5972, %v5969
    %v6531 = vpack.c.b16 %v5976, %v5973
    %v6532 = vpack.c.b16 %v5977, %v5974
    %v6533 = vpack.c.b16 %v5978, %v5975
    %v6534 = vpack.c.b16 %v5982, %v5979
    %v6535 = vpack.c.b16 %v5983, %v5980
    %v6536 = vpack.c.b16 %v5984, %v5981
    %v6537 = vpack.c.b16 %v5988, %v5985
    %v6538 = vpack.c.b16 %v5989, %v5986
    %v6539 = vpack.c.b16 %v5990, %v5987
    %v6540 = vpack.c.b16 %v5994, %v5991
    %v6541 = vpack.c.b16 %v5995, %v5992
    %v6542 = vpack.c.b16 %v5996, %v5993
    %v6543 = vpack.c.b16 %v6000, %v5997
    %v6544 = vpack.c.b16 %v6001, %v5998
    %v6545 = vpack.c.b16 %v6002, %v5999
    %v6546 = vpack.c.b16 %v6006, %v6003
    %v6547 = vpack.c.b16 %v6007, %v6004
    %v6548 = vpack.c.b16 %v6008, %v6005
    %v6549 = vpack.c.b16 %v6012, %v6009
    %v6550 = vpack.c.b16 %v6013, %v6010
    %v6551 = vpack.c.b16 %v6014, %v6011
    %v6552 = vpack.c.b16 %v6018, %v6015
    %v6553 = vpack.c.b16 %v6019, %v6016
    %v6554 = vpack.c.b16 %v6020, %v6017
    %v6555 = vpack.c.b16 %v6024, %v6021
    %v6556 = vpack.c.b16 %v6025, %v6022
    %v6557 = vpack.c.b16 %v6026, %v6023
    %v6558 = vpack.c.b16 %v6030, %v6027
    %v6559 = vpack.c.b16 %v6031, %v6028
    %v6560 = vpack.c.b16 %v6032, %v6029
    %v6561 = vpack.c.b16 %v6036, %v6033
    %v6562 = vpack.c.b16 %v6037, %v6034
    %v6563 = vpack.c.b16 %v6038, %v6035
    %v6564 = vpack.c.b16 %v6042, %v6039
    %v6565 = vpack.c.b16 %v6043, %v6040
    %v6566 = vpack.c.b16 %v6044, %v6041
    %v6567 = vpack.c.b16 %v6048, %v6045
    %v6568 = vpack.c.b16 %v6049, %v6046
    %v6569 = vpack.c.b16 %v6050, %v6047
    %v6570 = vpack.c.b16 %v6054, %v6051
    %v6571 = vpack.c.b16 %v6055, %v6052
    %v6572 = vpack.c.b16 %v6056, %v6053
    %v6573 = vpack.c.b16 %v6060, %v6057
    %v6574 = vpack.c.b16 %v6061, %v6058
    %v6575 = vpack.c.b16 %v6062, %v6059
    %v6576 = vpack.c.b16 %v6066, %v6063
    %v6577 = vpack.c.b16 %v6067, %v6064
    %v6578 = vpack.c.b16 %v6068, %v6065
    %v6579 = vpack.c.b16 %v6072, %v6069
    %v6580 = vpack.c.b16 %v6073, %v6070
    %v6581 = vpack.c.b16 %v6074, %v6071
    %v6582 = vpack.c.b16 %v6078, %v6075
    %v6583 = vpack.c.b16 %v6079, %v6076
    %v6584 = vpack.c.b16 %v6080, %v6077
    %v6585 = vpack.c.b16 %v6084, %v6081
    %v6586 = vpack.c.b16 %v6085, %v6082
    %v6587 = vpack.c.b16 %v6086, %v6083
    %v6588 = vpack.c.b16 %v6090, %v6087
    %v6589 = vpack.c.b16 %v6091, %v6088
    %v6590 = vpack.c.b16 %v6092, %v6089
    %v6591 = vpack.c.b16 %v6096, %v6093
    %v6592 = vpack.c.b16 %v6097, %v6094
    %v6593 = vpack.c.b16 %v6098, %v6095
    %v6594 = vpack.c.b16 %v6102, %v6099
    %v6595 = vpack.c.b16 %v6103, %v6100
    %v6596 = vpack.c.b16 %v6104, %v6101
    %v6597 = vpack.c.b16 %v6108, %v6105
    %v6598 = vpack.c.b16 %v6109, %v6106
    %v6599 = vpack.c.b16 %v6110, %v6107
    %v6600 = vpack.c.b16 %v6114, %v6111
    %v6601 = vpack.c.b16 %v6115, %v6112
    %v6602 = vpack.c.b16 %v6116, %v6113
    %v6603 = vpack.c.b16 %v6120, %v6117
    %v6604 = vpack.c.b16 %v6121, %v6118
    %v6605 = vpack.c.b16 %v6122, %v6119
    %v6606 = vpack.c.b16 %v6126, %v6123
    %v6607 = vpack.c.b16 %v6127, %v6124
    %v6608 = vpack.c.b16 %v6128, %v6125
    %v6609 = vpack.c.b16 %v6132, %v6129
    %v6610 = vpack.c.b16 %v6133, %v6130
    %v6611 = vpack.c.b16 %v6134, %v6131
    %v6612 = vpack.c.b16 %v6138, %v6135
    %v6613 = vpack.c.b16 %v6139, %v6136
    %v6614 = vpack.c.b16 %v6140, %v6137
    %v6615 = vpack.c.b16 %v6144, %v6141
    %v6616 = vpack.c.b16 %v6145, %v6142
    %v6617 = vpack.c.b16 %v6146, %v6143
    %v6618 = vpack.c.b16 %v6150, %v6147
    %v6619 = vpack.c.b16 %v6151, %v6148
    %v6620 = vpack.c.b16 %v6152, %v6149
    %v6621 = vpack.c.b16 %v6156, %v6153
    %v6622 = vpack.c.b16 %v6157, %v6154
    %v6623 = vpack.c.b16 %v6158, %v6155
    %v6624 = vpack.c.b16 %v6162, %v6159
    %v6625 = vpack.c.b16 %v6163, %v6160
    %v6626 = vpack.c.b16 %v6164, %v6161
    %v6627 = vpack.c.b16 %v6168, %v6165
    %v6628 = vpack.c.b16 %v6169, %v6166
    %v6629 = vpack.c.b16 %v6170, %v6167
    %v6630 = vpack.c.b16 %v6174, %v6171
    %v6631 = vpack.c.b16 %v6175, %v6172
    %v6632 = vpack.c.b16 %v6176, %v6173
    %v6633 = vpack.c.b16 %v6180, %v6177
    %v6634 = vpack.c.b16 %v6181, %v6178
    %v6635 = vpack.c.b16 %v6182, %v6179
    %v6636 = vpack.c.b16 %v6186, %v6183
    %v6637 = vpack.c.b16 %v6187, %v6184
    %v6638 = vpack.c.b16 %v6188, %v6185
    %v6639 = vpack.c.b16 %v6192, %v6189
    %v6640 = vpack.c.b16 %v6193, %v6190
    %v6641 = vpack.c.b16 %v6194, %v6191
    %v6642 = vpack.c.b16 %v6198, %v6195
    %v6643 = vpack.c.b16 %v6199, %v6196
    %v6644 = vpack.c.b16 %v6200, %v6197
    %v6645 = vpack.c.b16 %v6204, %v6201
    %v6646 = vpack.c.b16 %v6205, %v6202
    %v6647 = vpack.c.b16 %v6206, %v6203
    %v6648 = vpack.c.b16 %v6210, %v6207
    %v6649 = vpack.c.b16 %v6211, %v6208
    %v6650 = vpack.c.b16 %v6212, %v6209
    %v6651 = vpack.c.b16 %v6216, %v6213
    %v6652 = vpack.c.b16 %v6217, %v6214
    %v6653 = vpack.c.b16 %v6218, %v6215
    %v6654 = vpack.c.b16 %v6222, %v6219
    %v6655 = vpack.c.b16 %v6223, %v6220
    %v6656 = vpack.c.b16 %v6224, %v6221
    %v6657 = vpack.c.b16 %v6228, %v6225
    %v6658 = vpack.c.b16 %v6229, %v6226
    %v6659 = vpack.c.b16 %v6230, %v6227
    %v6660 = vpack.c.b16 %v6234, %v6231
    %v6661 = vpack.c.b16 %v6235, %v6232
    %v6662 = vpack.c.b16 %v6236, %v6233
    %v6663 = vpack.c.b16 %v6240, %v6237
    %v6664 = vpack.c.b16 %v6241, %v6238
    %v6665 = vpack.c.b16 %v6242, %v6239
    %v6666 = vpack.c.b16 %v6246, %v6243
    %v6667 = vpack.c.b16 %v6247, %v6244
    %v6668 = vpack.c.b16 %v6248, %v6245
    %v6669 = vpack.c.b16 %v6252, %v6249
    %v6670 = vpack.c.b16 %v6253, %v6250
    %v6671 = vpack.c.b16 %v6254, %v6251
    %v6672 = vpack.c.b16 %v6258, %v6255
    %v6673 = vpack.c.b16 %v6259, %v6256
    %v6674 = vpack.c.b16 %v6260, %v6257
    %v6675 = vpack.c.b16 %v6264, %v6261
    %v6676 = vpack.c.b16 %v6265, %v6262
    %v6677 = vpack.c.b16 %v6266, %v6263
    %v6678 = vpack.c.b16 %v6270, %v6267
    %v6679 = vpack.c.b16 %v6271, %v6268
    %v6680 = vpack.c.b16 %v6272, %v6269
    %v6681 = vpack.c.b16 %v6276, %v6273
    %v6682 = vpack.c.b16 %v6277, %v6274
    %v6683 = vpack.c.b16 %v6278, %v6275
    %v6684 = vpack.c.b16 %v6282, %v6279
    %v6685 = vpack.c.b16 %v6283, %v6280
    %v6686 = vpack.c.b16 %v6284, %v6281
    %v6687 = vpack.c.b16 %v6288, %v6285
    %v6688 = vpack.c.b16 %v6289, %v6286
    %v6689 = vpack.c.b16 %v6290, %v6287
    %v6690 = vpack.c.b16 %v6294, %v6291
    %v6691 = vpack.c.b16 %v6295, %v6292
    %v6692 = vpack.c.b16 %v6296, %v6293
    %v6693 = vpack.c.b16 %v6300, %v6297
    %v6694 = vpack.c.b16 %v6301, %v6298
    %v6695 = vpack.c.b16 %v6302, %v6299
    %v6696 = vpack.c.b16 %v6306, %v6303
    %v6697 = vpack.c.b16 %v6307, %v6304
    %v6698 = vpack.c.b16 %v6308, %v6305
    %v6699 = vpack.c.b16 %v6312, %v6309
    %v6700 = vpack.c.b16 %v6313, %v6310
    %v6701 = vpack.c.b16 %v6314, %v6311
    %v6702 = vpack.c.b16 %v6318, %v6315
    %v6703 = vpack.c.b16 %v6319, %v6316
    %v6704 = vpack.c.b16 %v6320, %v6317
    %v6705 = vpack.c.b16 %v6324, %v6321
    %v6706 = vpack.c.b16 %v6325, %v6322
    %v6707 = vpack.c.b16 %v6326, %v6323
    %v6708 = vpack.c.b16 %v6330, %v6327
    %v6709 = vpack.c.b16 %v6331, %v6328
    %v6710 = vpack.c.b16 %v6332, %v6329
    %v6711 = vpack.c.b16 %v6336, %v6333
    %v6712 = vpack.c.b16 %v6337, %v6334
    %v6713 = vpack.c.b16 %v6338, %v6335
    %v6714 = vpack.c.b16 %v6342, %v6339
    %v6715 = vpack.c.b16 %v6343, %v6340
    %v6716 = vpack.c.b16 %v6344, %v6341
    %v6717 = vpack.c.b16 %v6348, %v6345
    %v6718 = vpack.c.b16 %v6349, %v6346
    %v6719 = vpack.c.b16 %v6350, %v6347
    %v6720 = vpack.c.b16 %v6354, %v6351
    %v6721 = vpack.c.b16 %v6355, %v6352
    %v6722 = vpack.c.b16 %v6356, %v6353
    %v6723 = vpack.c.b16 %v6360, %v6357
    %v6724 = vpack.c.b16 %v6361, %v6358
    %v6725 = vpack.c.b16 %v6362, %v6359
    %v6726 = vpack.c.b16 %v6366, %v6363
    %v6727 = vpack.c.b16 %v6367, %v6364
    %v6728 = vpack.c.b16 %v6368, %v6365
    %v6729 = vpack.c.b16 %v6372, %v6369
    %v6730 = vpack.c.b16 %v6373, %v6370
    %v6731 = vpack.c.b16 %v6374, %v6371
    %v6732 = vpack.c.b16 %v6378, %v6375
    %v6733 = vpack.c.b16 %v6379, %v6376
    %v6734 = vpack.c.b16 %v6380, %v6377
    %v6735 = vpack.c.b16 %v6384, %v6381
    %v6736 = vpack.c.b16 %v6385, %v6382
    %v6737 = vpack.c.b16 %v6386, %v6383
    %v6738 = vpack.c.b16 %v6390, %v6387
    %v6739 = vpack.c.b16 %v6391, %v6388
    %v6740 = vpack.c.b16 %v6392, %v6389
    %v6741 = vpack.c.b16 %v6396, %v6393
    %v6742 = vpack.c.b16 %v6397, %v6394
    %v6743 = vpack.c.b16 %v6398, %v6395
    %v6744 = vpack.c.b16 %v6402, %v6399
    %v6745 = vpack.c.b16 %v6403, %v6400
    %v6746 = vpack.c.b16 %v6404, %v6401
    %v6747 = vpack.c.b16 %v6408, %v6405
    %v6748 = vpack.c.b16 %v6409, %v6406
    %v6749 = vpack.c.b16 %v6410, %v6407
    %v6750 = vpack.c.b16 %v6414, %v6411
    %v6751 = vpack.c.b16 %v6415, %v6412
    %v6752 = vpack.c.b16 %v6416, %v6413
    %v6753 = vpack.c.b16 %v6420, %v6417
    %v6754 = vpack.c.b16 %v6421, %v6418
    %v6755 = vpack.c.b16 %v6422, %v6419
    %v6756 = vpack.c.b16 %v6426, %v6423
    %v6757 = vpack.c.b16 %v6427, %v6424
    %v6758 = vpack.c.b16 %v6428, %v6425
    %v6759 = vpack.c.b16 %v6432, %v6429
    %v6760 = vpack.c.b16 %v6433, %v6430
    %v6761 = vpack.c.b16 %v6434, %v6431
    %v6762 = vpack.c.b16 %v6438, %v6435
    %v6763 = vpack.c.b16 %v6439, %v6436
    %v6764 = vpack.c.b16 %v6440, %v6437
    %v6765 = vpack.c.b16 %v6444, %v6441
    %v6766 = vpack.c.b16 %v6445, %v6442
    %v6767 = vpack.c.b16 %v6446, %v6443
    %v6768 = vpack.c.b16 %v6450, %v6447
    %v6769 = vpack.c.b16 %v6451, %v6448
    %v6770 = vpack.c.b16 %v6452, %v6449
    %v6771 = vpack.c.b16 %v6456, %v6453
    %v6772 = vpack.c.b16 %v6457, %v6454
    %v6773 = vpack.c.b16 %v6458, %v6455
    %v6774 = vpack.c.b16 %v6462, %v6459
    %v6775 = vpack.c.b16 %v6463, %v6460
    %v6776 = vpack.c.b16 %v6464, %v6461
    %v6777 = vpack.c.b16 %v6468, %v6465
    %v6778 = vpack.c.b16 %v6469, %v6466
    %v6779 = vpack.c.b16 %v6470, %v6467
    %v6780 = vpack.c.b16 %v6474, %v6471
    %v6781 = vpack.c.b16 %v6475, %v6472
    %v6782 = vpack.c.b16 %v6476, %v6473
    %v6783 = vpack.c.b16 %v6480, %v6477
    %v6784 = vpack.c.b16 %v6481, %v6478
    %v6785 = vpack.c.b16 %v6482, %v6479
    %v6786 = vpack.c.b16 %v6486, %v6483
    %v6787 = vpack.c.b16 %v6487, %v6484
    %v6788 = vpack.c.b16 %v6488, %v6485
    %v6789 = vpack.c.b16 %v6492, %v6489
    %v6790 = vpack.c.b16 %v6493, %v6490
    %v6791 = vpack.c.b16 %v6494, %v6491
    %v6792 = vpack.c.b16 %v6498, %v6495
    %v6793 = vpack.c.b16 %v6499, %v6496
    %v6794 = vpack.c.b16 %v6500, %v6497
    %v6795 = vpack.c.b16 %v6504, %v6501
    %v6796 = vpack.c.b16 %v6505, %v6502
    %v6797 = vpack.c.b16 %v6506, %v6503
    %v6798 = vpack.c.b16 %v6510, %v6507
    %v6799 = vpack.c.b16 %v6511, %v6508
    %v6800 = vpack.c.b16 %v6512, %v6509
    %7089 = vmatpush.bf16.msra.mxu0 %v6534
    %7090 = vmatpush.bf16.msra.mxu0 %v6531
    %7091 = vmatpush.bf16.msra.mxu0 %v6528
    %7092 = vmatpush.bf16.msra.mxu0 %v6525
    %7093 = vmatpush.bf16.msra.mxu0 %v6522
    %7094 = vmatpush.bf16.msra.mxu0 %v6519
    %7095 = vmatpush.bf16.msra.mxu0 %v6516
    %7096 = vmatpush.bf16.msra.mxu0 %v6513
    %7097 = vmatmul.bf16.gmra.mxu0 %v5151
    %v7098 = vpop.f32.mrf.mxu0
    %v7099 = vadd.f32 0.0, %v7098
    %v7100 = vpop.f32.mrf.mxu0
    %v7101 = vadd.f32 0.0, %v7100
    %7102 = vdwg.mxu0
    %7103 = vmatpush.bf16.msra.mxu0 %v6558
    %7104 = vmatpush.bf16.msra.mxu0 %v6555
    %7105 = vmatpush.bf16.msra.mxu0 %v6552
    %7106 = vmatpush.bf16.msra.mxu0 %v6549
    %7107 = vmatpush.bf16.msra.mxu0 %v6546
    %7108 = vmatpush.bf16.msra.mxu0 %v6543
    %7109 = vmatpush.bf16.msra.mxu0 %v6540
    %7110 = vmatpush.bf16.msra.mxu0 %v6537
    %7111 = vmatmul.bf16.gmra.mxu0 %v5152
    %v7112 = vpop.f32.mrf.mxu0
    %v7113 = vadd.f32 %v7099, %v7112
    %v7114 = vpop.f32.mrf.mxu0
    %v7115 = vadd.f32 %v7101, %v7114
    %7116 = vdwg.mxu0
    %7117 = vmatpush.bf16.msra.mxu0 %v6582
    %7118 = vmatpush.bf16.msra.mxu0 %v6579
    %7119 = vmatpush.bf16.msra.mxu0 %v6576
    %7120 = vmatpush.bf16.msra.mxu0 %v6573
    %7121 = vmatpush.bf16.msra.mxu0 %v6570
    %7122 = vmatpush.bf16.msra.mxu0 %v6567
    %7123 = vmatpush.bf16.msra.mxu0 %v6564
    %7124 = vmatpush.bf16.msra.mxu0 %v6561
    %7125 = vmatmul.bf16.gmra.mxu0 %v5153
    %v7126 = vpop.f32.mrf.mxu0
    %v7127 = vadd.f32 %v7113, %v7126
    %v7128 = vpop.f32.mrf.mxu0
    %v7129 = vadd.f32 %v7115, %v7128
    %7130 = vdwg.mxu0
    %7131 = vmatpush.bf16.msra.mxu0 %v6606
    %7132 = vmatpush.bf16.msra.mxu0 %v6603
    %7133 = vmatpush.bf16.msra.mxu0 %v6600
    %7134 = vmatpush.bf16.msra.mxu0 %v6597
    %7135 = vmatpush.bf16.msra.mxu0 %v6594
    %7136 = vmatpush.bf16.msra.mxu0 %v6591
    %7137 = vmatpush.bf16.msra.mxu0 %v6588
    %7138 = vmatpush.bf16.msra.mxu0 %v6585
    %7139 = vmatmul.bf16.gmra.mxu0 %v5154
    %v7140 = vpop.f32.mrf.mxu0
    %v7141 = vadd.f32 %v7127, %v7140
    %v7142 = vpop.f32.mrf.mxu0
    %v7143 = vadd.f32 %v7129, %v7142
    %7144 = vdwg.mxu0
    %7145 = vmatpush.bf16.msra.mxu0 %v6630
    %7146 = vmatpush.bf16.msra.mxu0 %v6627
    %7147 = vmatpush.bf16.msra.mxu0 %v6624
    %7148 = vmatpush.bf16.msra.mxu0 %v6621
    %7149 = vmatpush.bf16.msra.mxu0 %v6618
    %7150 = vmatpush.bf16.msra.mxu0 %v6615
    %7151 = vmatpush.bf16.msra.mxu0 %v6612
    %7152 = vmatpush.bf16.msra.mxu0 %v6609
    %7153 = vmatmul.bf16.gmra.mxu0 %v5155
    %v7154 = vpop.f32.mrf.mxu0
    %v7155 = vadd.f32 %v7141, %v7154
    %v7156 = vpop.f32.mrf.mxu0
    %v7157 = vadd.f32 %v7143, %v7156
    %7158 = vdwg.mxu0
    %7159 = vmatpush.bf16.msra.mxu0 %v6654
    %7160 = vmatpush.bf16.msra.mxu0 %v6651
    %7161 = vmatpush.bf16.msra.mxu0 %v6648
    %7162 = vmatpush.bf16.msra.mxu0 %v6645
    %7163 = vmatpush.bf16.msra.mxu0 %v6642
    %7164 = vmatpush.bf16.msra.mxu0 %v6639
    %7165 = vmatpush.bf16.msra.mxu0 %v6636
    %7166 = vmatpush.bf16.msra.mxu0 %v6633
    %7167 = vmatmul.bf16.gmra.mxu0 %v5156
    %v7168 = vpop.f32.mrf.mxu0
    %v7169 = vadd.f32 %v7155, %v7168
    %v7170 = vpop.f32.mrf.mxu0
    %v7171 = vadd.f32 %v7157, %v7170
    %7172 = vdwg.mxu0
    %7173 = vmatpush.bf16.msra.mxu0 %v6678
    %7174 = vmatpush.bf16.msra.mxu0 %v6675
    %7175 = vmatpush.bf16.msra.mxu0 %v6672
    %7176 = vmatpush.bf16.msra.mxu0 %v6669
    %7177 = vmatpush.bf16.msra.mxu0 %v6666
    %7178 = vmatpush.bf16.msra.mxu0 %v6663
    %7179 = vmatpush.bf16.msra.mxu0 %v6660
    %7180 = vmatpush.bf16.msra.mxu0 %v6657
    %7181 = vmatmul.bf16.gmra.mxu0 %v5157
    %v7182 = vpop.f32.mrf.mxu0
    %v7183 = vadd.f32 %v7169, %v7182
    %v7184 = vpop.f32.mrf.mxu0
    %v7185 = vadd.f32 %v7171, %v7184
    %7186 = vdwg.mxu0
    %7187 = vmatpush.bf16.msra.mxu0 %v6702
    %7188 = vmatpush.bf16.msra.mxu0 %v6699
    %7189 = vmatpush.bf16.msra.mxu0 %v6696
    %7190 = vmatpush.bf16.msra.mxu0 %v6693
    %7191 = vmatpush.bf16.msra.mxu0 %v6690
    %7192 = vmatpush.bf16.msra.mxu0 %v6687
    %7193 = vmatpush.bf16.msra.mxu0 %v6684
    %7194 = vmatpush.bf16.msra.mxu0 %v6681
    %7195 = vmatmul.bf16.gmra.mxu0 %v5158
    %v7196 = vpop.f32.mrf.mxu0
    %v7197 = vadd.f32 %v7183, %v7196
    %v7198 = vpop.f32.mrf.mxu0
    %v7199 = vadd.f32 %v7185, %v7198
    %7200 = vdwg.mxu0
    %7201 = vmatpush.bf16.msra.mxu0 %v6726
    %7202 = vmatpush.bf16.msra.mxu0 %v6723
    %7203 = vmatpush.bf16.msra.mxu0 %v6720
    %7204 = vmatpush.bf16.msra.mxu0 %v6717
    %7205 = vmatpush.bf16.msra.mxu0 %v6714
    %7206 = vmatpush.bf16.msra.mxu0 %v6711
    %7207 = vmatpush.bf16.msra.mxu0 %v6708
    %7208 = vmatpush.bf16.msra.mxu0 %v6705
    %7209 = vmatmul.bf16.gmra.mxu0 %v5159
    %v7210 = vpop.f32.mrf.mxu0
    %v7211 = vadd.f32 %v7197, %v7210
    %v7212 = vpop.f32.mrf.mxu0
    %v7213 = vadd.f32 %v7199, %v7212
    %7214 = vdwg.mxu0
    %7215 = vmatpush.bf16.msra.mxu0 %v6750
    %7216 = vmatpush.bf16.msra.mxu0 %v6747
    %7217 = vmatpush.bf16.msra.mxu0 %v6744
    %7218 = vmatpush.bf16.msra.mxu0 %v6741
    %7219 = vmatpush.bf16.msra.mxu0 %v6738
    %7220 = vmatpush.bf16.msra.mxu0 %v6735
    %7221 = vmatpush.bf16.msra.mxu0 %v6732
    %7222 = vmatpush.bf16.msra.mxu0 %v6729
    %7223 = vmatmul.bf16.gmra.mxu0 %v5160
    %v7224 = vpop.f32.mrf.mxu0
    %v7225 = vadd.f32 %v7211, %v7224
    %v7226 = vpop.f32.mrf.mxu0
    %v7227 = vadd.f32 %v7213, %v7226
    %7228 = vdwg.mxu0
    %7229 = vmatpush.bf16.msra.mxu0 %v6774
    %7230 = vmatpush.bf16.msra.mxu0 %v6771
    %7231 = vmatpush.bf16.msra.mxu0 %v6768
    %7232 = vmatpush.bf16.msra.mxu0 %v6765
    %7233 = vmatpush.bf16.msra.mxu0 %v6762
    %7234 = vmatpush.bf16.msra.mxu0 %v6759
    %7235 = vmatpush.bf16.msra.mxu0 %v6756
    %7236 = vmatpush.bf16.msra.mxu0 %v6753
    %7237 = vmatmul.bf16.gmra.mxu0 %v5161
    %v7238 = vpop.f32.mrf.mxu0
    %v7239 = vadd.f32 %v7225, %v7238
    %v7240 = vpop.f32.mrf.mxu0
    %v7241 = vadd.f32 %v7227, %v7240
    %7242 = vdwg.mxu0
    %7243 = vmatpush.bf16.msra.mxu0 %v6798
    %7244 = vmatpush.bf16.msra.mxu0 %v6795
    %7245 = vmatpush.bf16.msra.mxu0 %v6792
    %7246 = vmatpush.bf16.msra.mxu0 %v6789
    %7247 = vmatpush.bf16.msra.mxu0 %v6786
    %7248 = vmatpush.bf16.msra.mxu0 %v6783
    %7249 = vmatpush.bf16.msra.mxu0 %v6780
    %7250 = vmatpush.bf16.msra.mxu0 %v6777
    %7251 = vmatmul.bf16.gmra.mxu0 %v5162
    %v7252 = vpop.f32.mrf.mxu0
    %v7253 = vadd.f32 %v7239, %v7252
    %v7254 = vpop.f32.mrf.mxu0
    %v7255 = vadd.f32 %v7241, %v7254
    %7256 = vdwg.mxu0
    %7257 = vmatpush.bf16.msra.mxu0 %v6535
    %7258 = vmatpush.bf16.msra.mxu0 %v6532
    %7259 = vmatpush.bf16.msra.mxu0 %v6529
    %7260 = vmatpush.bf16.msra.mxu0 %v6526
    %7261 = vmatpush.bf16.msra.mxu0 %v6523
    %7262 = vmatpush.bf16.msra.mxu0 %v6520
    %7263 = vmatpush.bf16.msra.mxu0 %v6517
    %7264 = vmatpush.bf16.msra.mxu0 %v6514
    %7265 = vmatmul.bf16.gmra.mxu0 %v5151
    %v7266 = vpop.f32.mrf.mxu0
    %v7267 = vadd.f32 0.0, %v7266
    %v7268 = vpop.f32.mrf.mxu0
    %v7269 = vadd.f32 0.0, %v7268
    %7270 = vdwg.mxu0
    %7271 = vmatpush.bf16.msra.mxu0 %v6559
    %7272 = vmatpush.bf16.msra.mxu0 %v6556
    %7273 = vmatpush.bf16.msra.mxu0 %v6553
    %7274 = vmatpush.bf16.msra.mxu0 %v6550
    %7275 = vmatpush.bf16.msra.mxu0 %v6547
    %7276 = vmatpush.bf16.msra.mxu0 %v6544
    %7277 = vmatpush.bf16.msra.mxu0 %v6541
    %7278 = vmatpush.bf16.msra.mxu0 %v6538
    %7279 = vmatmul.bf16.gmra.mxu0 %v5152
    %v7280 = vpop.f32.mrf.mxu0
    %v7281 = vadd.f32 %v7267, %v7280
    %v7282 = vpop.f32.mrf.mxu0
    %v7283 = vadd.f32 %v7269, %v7282
    %7284 = vdwg.mxu0
    %7285 = vmatpush.bf16.msra.mxu0 %v6583
    %7286 = vmatpush.bf16.msra.mxu0 %v6580
    %7287 = vmatpush.bf16.msra.mxu0 %v6577
    %7288 = vmatpush.bf16.msra.mxu0 %v6574
    %7289 = vmatpush.bf16.msra.mxu0 %v6571
    %7290 = vmatpush.bf16.msra.mxu0 %v6568
    %7291 = vmatpush.bf16.msra.mxu0 %v6565
    %7292 = vmatpush.bf16.msra.mxu0 %v6562
    %7293 = vmatmul.bf16.gmra.mxu0 %v5153
    %v7294 = vpop.f32.mrf.mxu0
    %v7295 = vadd.f32 %v7281, %v7294
    %v7296 = vpop.f32.mrf.mxu0
    %v7297 = vadd.f32 %v7283, %v7296
    %7298 = vdwg.mxu0
    %7299 = vmatpush.bf16.msra.mxu0 %v6607
    %7300 = vmatpush.bf16.msra.mxu0 %v6604
    %7301 = vmatpush.bf16.msra.mxu0 %v6601
    %7302 = vmatpush.bf16.msra.mxu0 %v6598
    %7303 = vmatpush.bf16.msra.mxu0 %v6595
    %7304 = vmatpush.bf16.msra.mxu0 %v6592
    %7305 = vmatpush.bf16.msra.mxu0 %v6589
    %7306 = vmatpush.bf16.msra.mxu0 %v6586
    %7307 = vmatmul.bf16.gmra.mxu0 %v5154
    %v7308 = vpop.f32.mrf.mxu0
    %v7309 = vadd.f32 %v7295, %v7308
    %v7310 = vpop.f32.mrf.mxu0
    %v7311 = vadd.f32 %v7297, %v7310
    %7312 = vdwg.mxu0
    %7313 = vmatpush.bf16.msra.mxu0 %v6631
    %7314 = vmatpush.bf16.msra.mxu0 %v6628
    %7315 = vmatpush.bf16.msra.mxu0 %v6625
    %7316 = vmatpush.bf16.msra.mxu0 %v6622
    %7317 = vmatpush.bf16.msra.mxu0 %v6619
    %7318 = vmatpush.bf16.msra.mxu0 %v6616
    %7319 = vmatpush.bf16.msra.mxu0 %v6613
    %7320 = vmatpush.bf16.msra.mxu0 %v6610
    %7321 = vmatmul.bf16.gmra.mxu0 %v5155
    %v7322 = vpop.f32.mrf.mxu0
    %v7323 = vadd.f32 %v7309, %v7322
    %v7324 = vpop.f32.mrf.mxu0
    %v7325 = vadd.f32 %v7311, %v7324
    %7326 = vdwg.mxu0
    %7327 = vmatpush.bf16.msra.mxu0 %v6655
    %7328 = vmatpush.bf16.msra.mxu0 %v6652
    %7329 = vmatpush.bf16.msra.mxu0 %v6649
    %7330 = vmatpush.bf16.msra.mxu0 %v6646
    %7331 = vmatpush.bf16.msra.mxu0 %v6643
    %7332 = vmatpush.bf16.msra.mxu0 %v6640
    %7333 = vmatpush.bf16.msra.mxu0 %v6637
    %7334 = vmatpush.bf16.msra.mxu0 %v6634
    %7335 = vmatmul.bf16.gmra.mxu0 %v5156
    %v7336 = vpop.f32.mrf.mxu0
    %v7337 = vadd.f32 %v7323, %v7336
    %v7338 = vpop.f32.mrf.mxu0
    %v7339 = vadd.f32 %v7325, %v7338
    %7340 = vdwg.mxu0
    %7341 = vmatpush.bf16.msra.mxu0 %v6679
    %7342 = vmatpush.bf16.msra.mxu0 %v6676
    %7343 = vmatpush.bf16.msra.mxu0 %v6673
    %7344 = vmatpush.bf16.msra.mxu0 %v6670
    %7345 = vmatpush.bf16.msra.mxu0 %v6667
    %7346 = vmatpush.bf16.msra.mxu0 %v6664
    %7347 = vmatpush.bf16.msra.mxu0 %v6661
    %7348 = vmatpush.bf16.msra.mxu0 %v6658
    %7349 = vmatmul.bf16.gmra.mxu0 %v5157
    %v7350 = vpop.f32.mrf.mxu0
    %v7351 = vadd.f32 %v7337, %v7350
    %v7352 = vpop.f32.mrf.mxu0
    %v7353 = vadd.f32 %v7339, %v7352
    %7354 = vdwg.mxu0
    %7355 = vmatpush.bf16.msra.mxu0 %v6703
    %7356 = vmatpush.bf16.msra.mxu0 %v6700
    %7357 = vmatpush.bf16.msra.mxu0 %v6697
    %7358 = vmatpush.bf16.msra.mxu0 %v6694
    %7359 = vmatpush.bf16.msra.mxu0 %v6691
    %7360 = vmatpush.bf16.msra.mxu0 %v6688
    %7361 = vmatpush.bf16.msra.mxu0 %v6685
    %7362 = vmatpush.bf16.msra.mxu0 %v6682
    %7363 = vmatmul.bf16.gmra.mxu0 %v5158
    %v7364 = vpop.f32.mrf.mxu0
    %v7365 = vadd.f32 %v7351, %v7364
    %v7366 = vpop.f32.mrf.mxu0
    %v7367 = vadd.f32 %v7353, %v7366
    %7368 = vdwg.mxu0
    %7369 = vmatpush.bf16.msra.mxu0 %v6727
    %7370 = vmatpush.bf16.msra.mxu0 %v6724
    %7371 = vmatpush.bf16.msra.mxu0 %v6721
    %7372 = vmatpush.bf16.msra.mxu0 %v6718
    %7373 = vmatpush.bf16.msra.mxu0 %v6715
    %7374 = vmatpush.bf16.msra.mxu0 %v6712
    %7375 = vmatpush.bf16.msra.mxu0 %v6709
    %7376 = vmatpush.bf16.msra.mxu0 %v6706
    %7377 = vmatmul.bf16.gmra.mxu0 %v5159
    %v7378 = vpop.f32.mrf.mxu0
    %v7379 = vadd.f32 %v7365, %v7378
    %v7380 = vpop.f32.mrf.mxu0
    %v7381 = vadd.f32 %v7367, %v7380
    %7382 = vdwg.mxu0
    %7383 = vmatpush.bf16.msra.mxu0 %v6751
    %7384 = vmatpush.bf16.msra.mxu0 %v6748
    %7385 = vmatpush.bf16.msra.mxu0 %v6745
    %7386 = vmatpush.bf16.msra.mxu0 %v6742
    %7387 = vmatpush.bf16.msra.mxu0 %v6739
    %7388 = vmatpush.bf16.msra.mxu0 %v6736
    %7389 = vmatpush.bf16.msra.mxu0 %v6733
    %7390 = vmatpush.bf16.msra.mxu0 %v6730
    %7391 = vmatmul.bf16.gmra.mxu0 %v5160
    %v7392 = vpop.f32.mrf.mxu0
    %v7393 = vadd.f32 %v7379, %v7392
    %v7394 = vpop.f32.mrf.mxu0
    %v7395 = vadd.f32 %v7381, %v7394
    %7396 = vdwg.mxu0
    %7397 = vmatpush.bf16.msra.mxu0 %v6775
    %7398 = vmatpush.bf16.msra.mxu0 %v6772
    %7399 = vmatpush.bf16.msra.mxu0 %v6769
    %7400 = vmatpush.bf16.msra.mxu0 %v6766
    %7401 = vmatpush.bf16.msra.mxu0 %v6763
    %7402 = vmatpush.bf16.msra.mxu0 %v6760
    %7403 = vmatpush.bf16.msra.mxu0 %v6757
    %7404 = vmatpush.bf16.msra.mxu0 %v6754
    %7405 = vmatmul.bf16.gmra.mxu0 %v5161
    %v7406 = vpop.f32.mrf.mxu0
    %v7407 = vadd.f32 %v7393, %v7406
    %v7408 = vpop.f32.mrf.mxu0
    %v7409 = vadd.f32 %v7395, %v7408
    %7410 = vdwg.mxu0
    %7411 = vmatpush.bf16.msra.mxu0 %v6799
    %7412 = vmatpush.bf16.msra.mxu0 %v6796
    %7413 = vmatpush.bf16.msra.mxu0 %v6793
    %7414 = vmatpush.bf16.msra.mxu0 %v6790
    %7415 = vmatpush.bf16.msra.mxu0 %v6787
    %7416 = vmatpush.bf16.msra.mxu0 %v6784
    %7417 = vmatpush.bf16.msra.mxu0 %v6781
    %7418 = vmatpush.bf16.msra.mxu0 %v6778
    %7419 = vmatmul.bf16.gmra.mxu0 %v5162
    %v7420 = vpop.f32.mrf.mxu0
    %v7421 = vadd.f32 %v7407, %v7420
    %v7422 = vpop.f32.mrf.mxu0
    %v7423 = vadd.f32 %v7409, %v7422
    %7424 = vdwg.mxu0
    %7425 = vmatpush.bf16.msra.mxu0 %v6536
    %7426 = vmatpush.bf16.msra.mxu0 %v6533
    %7427 = vmatpush.bf16.msra.mxu0 %v6530
    %7428 = vmatpush.bf16.msra.mxu0 %v6527
    %7429 = vmatpush.bf16.msra.mxu0 %v6524
    %7430 = vmatpush.bf16.msra.mxu0 %v6521
    %7431 = vmatpush.bf16.msra.mxu0 %v6518
    %7432 = vmatpush.bf16.msra.mxu0 %v6515
    %7433 = vmatmul.bf16.gmra.mxu0 %v5151
    %v7434 = vpop.f32.mrf.mxu0
    %v7435 = vadd.f32 0.0, %v7434
    %v7436 = vpop.f32.mrf.mxu0
    %v7437 = vadd.f32 0.0, %v7436
    %7438 = vdwg.mxu0
    %7439 = vmatpush.bf16.msra.mxu0 %v6560
    %7440 = vmatpush.bf16.msra.mxu0 %v6557
    %7441 = vmatpush.bf16.msra.mxu0 %v6554
    %7442 = vmatpush.bf16.msra.mxu0 %v6551
    %7443 = vmatpush.bf16.msra.mxu0 %v6548
    %7444 = vmatpush.bf16.msra.mxu0 %v6545
    %7445 = vmatpush.bf16.msra.mxu0 %v6542
    %7446 = vmatpush.bf16.msra.mxu0 %v6539
    %7447 = vmatmul.bf16.gmra.mxu0 %v5152
    %v7448 = vpop.f32.mrf.mxu0
    %v7449 = vadd.f32 %v7435, %v7448
    %v7450 = vpop.f32.mrf.mxu0
    %v7451 = vadd.f32 %v7437, %v7450
    %7452 = vdwg.mxu0
    %7453 = vmatpush.bf16.msra.mxu0 %v6584
    %7454 = vmatpush.bf16.msra.mxu0 %v6581
    %7455 = vmatpush.bf16.msra.mxu0 %v6578
    %7456 = vmatpush.bf16.msra.mxu0 %v6575
    %7457 = vmatpush.bf16.msra.mxu0 %v6572
    %7458 = vmatpush.bf16.msra.mxu0 %v6569
    %7459 = vmatpush.bf16.msra.mxu0 %v6566
    %7460 = vmatpush.bf16.msra.mxu0 %v6563
    %7461 = vmatmul.bf16.gmra.mxu0 %v5153
    %v7462 = vpop.f32.mrf.mxu0
    %v7463 = vadd.f32 %v7449, %v7462
    %v7464 = vpop.f32.mrf.mxu0
    %v7465 = vadd.f32 %v7451, %v7464
    %7466 = vdwg.mxu0
    %7467 = vmatpush.bf16.msra.mxu0 %v6608
    %7468 = vmatpush.bf16.msra.mxu0 %v6605
    %7469 = vmatpush.bf16.msra.mxu0 %v6602
    %7470 = vmatpush.bf16.msra.mxu0 %v6599
    %7471 = vmatpush.bf16.msra.mxu0 %v6596
    %7472 = vmatpush.bf16.msra.mxu0 %v6593
    %7473 = vmatpush.bf16.msra.mxu0 %v6590
    %7474 = vmatpush.bf16.msra.mxu0 %v6587
    %7475 = vmatmul.bf16.gmra.mxu0 %v5154
    %v7476 = vpop.f32.mrf.mxu0
    %v7477 = vadd.f32 %v7463, %v7476
    %v7478 = vpop.f32.mrf.mxu0
    %v7479 = vadd.f32 %v7465, %v7478
    %7480 = vdwg.mxu0
    %7481 = vmatpush.bf16.msra.mxu0 %v6632
    %7482 = vmatpush.bf16.msra.mxu0 %v6629
    %7483 = vmatpush.bf16.msra.mxu0 %v6626
    %7484 = vmatpush.bf16.msra.mxu0 %v6623
    %7485 = vmatpush.bf16.msra.mxu0 %v6620
    %7486 = vmatpush.bf16.msra.mxu0 %v6617
    %7487 = vmatpush.bf16.msra.mxu0 %v6614
    %7488 = vmatpush.bf16.msra.mxu0 %v6611
    %7489 = vmatmul.bf16.gmra.mxu0 %v5155
    %v7490 = vpop.f32.mrf.mxu0
    %v7491 = vadd.f32 %v7477, %v7490
    %v7492 = vpop.f32.mrf.mxu0
    %v7493 = vadd.f32 %v7479, %v7492
    %7494 = vdwg.mxu0
    %7495 = vmatpush.bf16.msra.mxu0 %v6656
    %7496 = vmatpush.bf16.msra.mxu0 %v6653
    %7497 = vmatpush.bf16.msra.mxu0 %v6650
    %7498 = vmatpush.bf16.msra.mxu0 %v6647
    %7499 = vmatpush.bf16.msra.mxu0 %v6644
    %7500 = vmatpush.bf16.msra.mxu0 %v6641
    %7501 = vmatpush.bf16.msra.mxu0 %v6638
    %7502 = vmatpush.bf16.msra.mxu0 %v6635
    %7503 = vmatmul.bf16.gmra.mxu0 %v5156
    %v7504 = vpop.f32.mrf.mxu0
    %v7505 = vadd.f32 %v7491, %v7504
    %v7506 = vpop.f32.mrf.mxu0
    %v7507 = vadd.f32 %v7493, %v7506
    %7508 = vdwg.mxu0
    %7509 = vmatpush.bf16.msra.mxu0 %v6680
    %7510 = vmatpush.bf16.msra.mxu0 %v6677
    %7511 = vmatpush.bf16.msra.mxu0 %v6674
    %7512 = vmatpush.bf16.msra.mxu0 %v6671
    %7513 = vmatpush.bf16.msra.mxu0 %v6668
    %7514 = vmatpush.bf16.msra.mxu0 %v6665
    %7515 = vmatpush.bf16.msra.mxu0 %v6662
    %7516 = vmatpush.bf16.msra.mxu0 %v6659
    %7517 = vmatmul.bf16.gmra.mxu0 %v5157
    %v7518 = vpop.f32.mrf.mxu0
    %v7519 = vadd.f32 %v7505, %v7518
    %v7520 = vpop.f32.mrf.mxu0
    %v7521 = vadd.f32 %v7507, %v7520
    %7522 = vdwg.mxu0
    %7523 = vmatpush.bf16.msra.mxu0 %v6704
    %7524 = vmatpush.bf16.msra.mxu0 %v6701
    %7525 = vmatpush.bf16.msra.mxu0 %v6698
    %7526 = vmatpush.bf16.msra.mxu0 %v6695
    %7527 = vmatpush.bf16.msra.mxu0 %v6692
    %7528 = vmatpush.bf16.msra.mxu0 %v6689
    %7529 = vmatpush.bf16.msra.mxu0 %v6686
    %7530 = vmatpush.bf16.msra.mxu0 %v6683
    %7531 = vmatmul.bf16.gmra.mxu0 %v5158
    %v7532 = vpop.f32.mrf.mxu0
    %v7533 = vadd.f32 %v7519, %v7532
    %v7534 = vpop.f32.mrf.mxu0
    %v7535 = vadd.f32 %v7521, %v7534
    %7536 = vdwg.mxu0
    %7537 = vmatpush.bf16.msra.mxu0 %v6728
    %7538 = vmatpush.bf16.msra.mxu0 %v6725
    %7539 = vmatpush.bf16.msra.mxu0 %v6722
    %7540 = vmatpush.bf16.msra.mxu0 %v6719
    %7541 = vmatpush.bf16.msra.mxu0 %v6716
    %7542 = vmatpush.bf16.msra.mxu0 %v6713
    %7543 = vmatpush.bf16.msra.mxu0 %v6710
    %7544 = vmatpush.bf16.msra.mxu0 %v6707
    %7545 = vmatmul.bf16.gmra.mxu0 %v5159
    %v7546 = vpop.f32.mrf.mxu0
    %v7547 = vadd.f32 %v7533, %v7546
    %v7548 = vpop.f32.mrf.mxu0
    %v7549 = vadd.f32 %v7535, %v7548
    %7550 = vdwg.mxu0
    %7551 = vmatpush.bf16.msra.mxu0 %v6752
    %7552 = vmatpush.bf16.msra.mxu0 %v6749
    %7553 = vmatpush.bf16.msra.mxu0 %v6746
    %7554 = vmatpush.bf16.msra.mxu0 %v6743
    %7555 = vmatpush.bf16.msra.mxu0 %v6740
    %7556 = vmatpush.bf16.msra.mxu0 %v6737
    %7557 = vmatpush.bf16.msra.mxu0 %v6734
    %7558 = vmatpush.bf16.msra.mxu0 %v6731
    %7559 = vmatmul.bf16.gmra.mxu0 %v5160
    %v7560 = vpop.f32.mrf.mxu0
    %v7561 = vadd.f32 %v7547, %v7560
    %v7562 = vpop.f32.mrf.mxu0
    %v7563 = vadd.f32 %v7549, %v7562
    %7564 = vdwg.mxu0
    %7565 = vmatpush.bf16.msra.mxu0 %v6776
    %7566 = vmatpush.bf16.msra.mxu0 %v6773
    %7567 = vmatpush.bf16.msra.mxu0 %v6770
    %7568 = vmatpush.bf16.msra.mxu0 %v6767
    %7569 = vmatpush.bf16.msra.mxu0 %v6764
    %7570 = vmatpush.bf16.msra.mxu0 %v6761
    %7571 = vmatpush.bf16.msra.mxu0 %v6758
    %7572 = vmatpush.bf16.msra.mxu0 %v6755
    %7573 = vmatmul.bf16.gmra.mxu0 %v5161
    %v7574 = vpop.f32.mrf.mxu0
    %v7575 = vadd.f32 %v7561, %v7574
    %v7576 = vpop.f32.mrf.mxu0
    %v7577 = vadd.f32 %v7563, %v7576
    %7578 = vdwg.mxu0
    %7579 = vmatpush.bf16.msra.mxu0 %v6800
    %7580 = vmatpush.bf16.msra.mxu0 %v6797
    %7581 = vmatpush.bf16.msra.mxu0 %v6794
    %7582 = vmatpush.bf16.msra.mxu0 %v6791
    %7583 = vmatpush.bf16.msra.mxu0 %v6788
    %7584 = vmatpush.bf16.msra.mxu0 %v6785
    %7585 = vmatpush.bf16.msra.mxu0 %v6782
    %7586 = vmatpush.bf16.msra.mxu0 %v6779
    %7587 = vmatmul.bf16.gmra.mxu0 %v5162
    %v7588 = vpop.f32.mrf.mxu0
    %v7589 = vadd.f32 %v7575, %v7588
    %v7590 = vpop.f32.mrf.mxu0
    %v7591 = vadd.f32 %v7577, %v7590
    %7592 = vdwg.mxu0
    %v7593 = vadd.f32 %v5163, %v7253
    %v7594 = vadd.f32 %v5164, %v7421
    %v7595 = vadd.f32 %v5165, %v7589
    %v7596 = vadd.f32 %v5166, %v7255
    %v7597 = vadd.f32 %v5167, %v7423
    %v7598 = vadd.f32 %v5168, %v7591
    %7599 = vst [vmem:[#allocation2] sm:$0xff] %v7593
    %7600 = vst [vmem:[#allocation2 + $0x8] sm:$0xff] %v7594
    %7601 = vst [vmem:[#allocation2 + $0x10] sm:$0xff] %v7595
    %7602 = vst [vmem:[#allocation2 + $0x18] sm:$0xff] %v7596
    %7603 = vst [vmem:[#allocation2 + $0x20] sm:$0xff] %v7597
    %7604 = vst [vmem:[#allocation2 + $0x28] sm:$0xff] %v7598
    // Predicated region
    $region38: #{tpu_custom_call.1} parent=1 // pred_check
      %p7605 = pneg %p81
    $region39: #{tpu_custom_call.1} parent=1 // pred_check_branch
      %7607 = sbr.rel (%p7605) target = $region41
    $region40: #{tpu_custom_call.1} parent=1 // pred_region
      %v7608 = vld [vmem:[#allocation2] sm:$0xff]
      %v7609 = vld [vmem:[#allocation2 + $0x8] sm:$0xff]
      %v7610 = vld [vmem:[#allocation2 + $0x10] sm:$0xff]
      %v7611 = vld [vmem:[#allocation2 + $0x18] sm:$0xff]
      %v7612 = vld [vmem:[#allocation2 + $0x20] sm:$0xff]
      %v7613 = vld [vmem:[#allocation2 + $0x28] sm:$0xff]
      %7614 = vst [vmem:[#allocation11] sm:$0xff] %v7608
      %7615 = vst [vmem:[#allocation11 + $0x8] sm:$0xff] %v7609
      %7616 = vst [vmem:[#allocation11 + $0x10] sm:$0xff] %v7610
      %7617 = vst [vmem:[#allocation11 + $0x18] sm:$0xff] %v7611
      %7618 = vst [vmem:[#allocation11 + $0x20] sm:$0xff] %v7612
      %7619 = vst [vmem:[#allocation11 + $0x28] sm:$0xff] %v7613
    $region41: #{tpu_custom_call.1} parent=1 // pred_fallthru
      _
    // Predicated region
    $region42: #{tpu_custom_call.1} parent=1 // pred_check
      _
    $region43: #{tpu_custom_call.1} parent=1 // pred_check_branch
      %7621 = sbr.rel (0) target = $region45
    $region44: #{tpu_custom_call.1} parent=1 // pred_region
      %7623 = vsyncadd [#allocation5], 0
      %s7624 = sshll.u32 [#allocation11], 4
      %s7625 = int_to_ptr.vmem [resolvable:$true] %s7624
      %s7626 = sshll.u32 %s4, 4
      %s7627 = int_to_ptr.hbm [resolvable:$true] %s7626
      %7632 = dma.vmem_to_hbm [thread:$0]  %s7625, 768, %s7627, [#allocation5], 384, 384, 24
    $region45: #{tpu_custom_call.1} parent=1 // pred_fallthru
      _
    // Predicated region
    $region46: #{tpu_custom_call.1} parent=1 // pred_check
      _
    $region47: #{tpu_custom_call.1} parent=1 // pred_check_branch
      %7634 = sbr.rel (0) target = $region49
    $region48: #{tpu_custom_call.1} parent=1 // pred_region
      %7636 = dma.done [#allocation5], 768
    $region49: #{tpu_custom_call.1} parent=1 // pred_fallthru
      _
    %7637 = vsyncpa [#allocation4], 1
    %7638 = vsyncpa [#allocation7], 1
    %7639 = vsyncpa [#allocation10], 1
    %7640 = vsyncpa [#allocation5], 1

</llo_original>
